<compile_context>
chip_gen: v7x
topology: tpu7x:2x2x1
jax: 0.10.0
libtpu: 0.0.40
codegen_flags: <defaults>
</compile_context>

<pallas_src>
import jax
import jax.numpy as jnp
from jax.experimental import pallas as pl
from jax.experimental.pallas import tpu as pltpu


def gru_net_kernel(x_ref,                       # (T*Bp, Dp) time-major, padded
                   wih0_ref, whh0_ref, bih0_ref, bhh0_ref,
                   wih1_ref, whh1_ref, bih1_ref, bhh1_ref,
                   wfc_ref, bfc_ref,
                   out_ref,                     # (Bp, Op)
                   gi0_ref):                    # VMEM scratch (T*Bp, 3*Hp)
    TB, _ = x_ref.shape
    Bp = out_ref.shape[0]
    T = TB // Bp
    Hp = whh0_ref.shape[0]
    G = whh0_ref.shape[1]                       # 3 * Hp

    # ---- Prologue: layer-0 input projection for ALL timesteps (one matmul). --
    gi0_ref[...] = (jnp.dot(x_ref[...], wih0_ref[...],
                            preferred_element_type=jnp.float32)
                    + bih0_ref[...])

    # ---- Hoisted loop invariants (weights + broadcast biases). --------------
    whh0 = whh0_ref[...]
    wih1 = wih1_ref[...]
    whh1 = whh1_ref[...]
    bhh0_b = jnp.broadcast_to(bhh0_ref[...], (Bp, G))
    bih1_b = jnp.broadcast_to(bih1_ref[...], (Bp, G))
    bhh1_b = jnp.broadcast_to(bhh1_ref[...], (Bp, G))

    def gate_update(gi, gh, h_prev):
        # PyTorch GRU gate order (r, z, n); gate g lives at lanes [g*Hp, (g+1)*Hp).
        r = jax.nn.sigmoid(gi[:, 0:Hp] + gh[:, 0:Hp])
        z = jax.nn.sigmoid(gi[:, Hp:2 * Hp] + gh[:, Hp:2 * Hp])
        n = jnp.tanh(gi[:, 2 * Hp:3 * Hp] + r * gh[:, 2 * Hp:3 * Hp])
        return (1.0 - z) * n + z * h_prev

    def step(t, carry):
        h0, h1 = carry
        row = pl.multiple_of(t * Bp, Bp)
        gi0 = gi0_ref[pl.ds(row, Bp), :]                               # (Bp, G)

        # Layer 0: only the recurrent matmul remains on the serial path.
        gh0 = jnp.dot(h0, whh0, preferred_element_type=jnp.float32) + bhh0_b
        h0n = gate_update(gi0, gh0, h0)

        # Layer 1 (inter-layer dropout == 0, matching nn.GRU defaults).
        gi1 = jnp.dot(h0n, wih1, preferred_element_type=jnp.float32) + bih1_b
        gh1 = jnp.dot(h1, whh1, preferred_element_type=jnp.float32) + bhh1_b
        h1n = gate_update(gi1, gh1, h1)
        return (h0n, h1n)

    h_init = (jnp.zeros((Bp, Hp), jnp.float32),
              jnp.zeros((Bp, Hp), jnp.float32))
    _, h1 = jax.lax.fori_loop(0, T, step, h_init, unroll=True)

    # ---- Epilogue: relu(last hidden) @ W_fc + b_fc, lane-dense output slab. --
    out_ref[...] = (jnp.dot(jnp.maximum(h1, 0.0), wfc_ref[...],
                            preferred_element_type=jnp.float32)
                    + bfc_ref[...])


# ------------------------------ host-side padding ---------------------------

def _pad_gate_cols(w, H, Hp):
    """(in, 3H) -> (in, 3Hp): gate block g placed at columns [g*Hp, g*Hp + H)."""
    parts = []
    for g in range(3):
        blk = w[:, g * H:(g + 1) * H]
        parts.append(jnp.pad(blk, ((0, 0), (0, Hp - H))))
    return jnp.concatenate(parts, axis=1)


def _pad_rows(w, rows):
    return jnp.pad(w, ((0, rows - w.shape[0]), (0, 0)))


def _round_up(n, m):
    return ((n + m - 1) // m) * m


def gru_net_forward(x, params):
    """x: (B, T, D) float32, batch_first like PyTorch. Returns (B, output_dim)."""
    B, T, D = x.shape
    (wih0, whh0, bih0, bhh0,
     wih1, whh1, bih1, bhh1,
     wfc, bfc) = params
    H = whh0.shape[0]
    O = wfc.shape[1]

    SUB, LANE = 8, 128
    Bp = _round_up(B, SUB)
    Dp = _round_up(D, LANE)
    Hp = _round_up(H, LANE)
    Op = _round_up(O, LANE)
    G = 3 * Hp

    # Time-major, zero-padded, flattened input: row index = t * Bp + b.
    x_tm = jnp.transpose(x, (1, 0, 2)).astype(jnp.float32)          # (T, B, D)
    x_p = jnp.zeros((T, Bp, Dp), jnp.float32).at[:, :B, :D].set(x_tm)
    x_2d = x_p.reshape(T * Bp, Dp)

    wih0_p = _pad_rows(_pad_gate_cols(wih0, H, Hp), Dp)
    whh0_p = _pad_rows(_pad_gate_cols(whh0, H, Hp), Hp)
    wih1_p = _pad_rows(_pad_gate_cols(wih1, H, Hp), Hp)
    whh1_p = _pad_rows(_pad_gate_cols(whh1, H, Hp), Hp)
    bih0_p = _pad_gate_cols(bih0, H, Hp)                            # (1, G)
    bhh0_p = _pad_gate_cols(bhh0, H, Hp)
    bih1_p = _pad_gate_cols(bih1, H, Hp)
    bhh1_p = _pad_gate_cols(bhh1, H, Hp)
    wfc_p = jnp.pad(wfc, ((0, Hp - H), (0, Op - O)))
    bfc_p = jnp.pad(bfc, ((0, 0), (0, Op - O)))

    def vspec(shape):
        nd = len(shape)
        return pl.BlockSpec(shape, lambda i, _n=nd: (0,) * _n)

    grid_spec = pltpu.PrefetchScalarGridSpec(
        num_scalar_prefetch=0,
        grid=(1,),                                # whole recurrence in one step
        in_specs=[
            vspec(x_2d.shape),
            vspec(wih0_p.shape), vspec(whh0_p.shape),
            vspec(bih0_p.shape), vspec(bhh0_p.shape),
            vspec(wih1_p.shape), vspec(whh1_p.shape),
            vspec(bih1_p.shape), vspec(bhh1_p.shape),
            vspec(wfc_p.shape), vspec(bfc_p.shape),
        ],
        out_specs=vspec((Bp, Op)),
        scratch_shapes=[
            pltpu.VMEM((T * Bp, G), jnp.float32),   # precomputed layer-0 gi
        ],
    )

    out_p = pl.pallas_call(
        gru_net_kernel,
        out_shape=jax.ShapeDtypeStruct((Bp, Op), jnp.float32),
        grid_spec=grid_spec,
        compiler_params=pltpu.CompilerParams(
            dimension_semantics=("arbitrary",)),
    )(x_2d, wih0_p, whh0_p, bih0_p, bhh0_p,
      wih1_p, whh1_p, bih1_p, bhh1_p, wfc_p, bfc_p)

    return out_p[:B, :O]


# ------------------------------ params & reference --------------------------

def init_params(key, input_dim, hidden_dim, output_dim):
    """Deterministic synthetic init mimicking PyTorch uniform(-1/sqrt(H), 1/sqrt(H))."""
    k = 1.0 / jnp.sqrt(jnp.float32(hidden_dim))
    keys = jax.random.split(key, 10)

    def u(kk, shape):
        return jax.random.uniform(kk, shape, jnp.float32, -k, k)

    H3 = 3 * hidden_dim
    wih0 = u(keys[0], (input_dim, H3))
    whh0 = u(keys[1], (hidden_dim, H3))
    bih0 = u(keys[2], (1, H3))
    bhh0 = u(keys[3], (1, H3))
    wih1 = u(keys[4], (hidden_dim, H3))
    whh1 = u(keys[5], (hidden_dim, H3))
    bih1 = u(keys[6], (1, H3))
    bhh1 = u(keys[7], (1, H3))
    wfc = u(keys[8], (hidden_dim, output_dim))
    bfc = u(keys[9], (1, output_dim))
    return (wih0, whh0, bih0, bhh0, wih1, whh1, bih1, bhh1, wfc, bfc)


def gru_net_reference(x, params):
    """Pure-JAX reference of the PyTorch forward, for verification."""
    (wih0, whh0, bih0, bhh0,
     wih1, whh1, bih1, bhh1,
     wfc, bfc) = params
    B, T, D = x.shape
    H = whh0.shape[0]

    def cell(x_t, h, wih, whh, bih, bhh):
        gi = x_t @ wih + bih
        gh = h @ whh + bhh
        r = jax.nn.sigmoid(gi[:, 0:H] + gh[:, 0:H])
        z = jax.nn.sigmoid(gi[:, H:2 * H] + gh[:, H:2 * H])
        n = jnp.tanh(gi[:, 2 * H:] + r * gh[:, 2 * H:])
        return (1.0 - z) * n + z * h

    h0 = jnp.zeros((B, H), jnp.float32)
    h1 = jnp.zeros((B, H), jnp.float32)
    for t in range(T):
        h0 = cell(x[:, t, :], h0, wih0, whh0, bih0, bhh0)
        h1 = cell(h0, h1, wih1, whh1, bih1, bhh1)
    return jnp.maximum(h1, 0.0) @ wfc + bfc


if __name__ == "__main__":
    B, T = 2, 8
    input_dim, hidden_dim, output_dim = 4, 32, 4

    key = jax.random.PRNGKey(0)
    k_x, k_p = jax.random.split(key)
    x = jax.random.normal(k_x, (B, T, input_dim), jnp.float32)
    params = init_params(k_p, input_dim, hidden_dim, output_dim)

    out = gru_net_forward(x, params)
    out = jax.block_until_ready(out)

    ref = gru_net_reference(x, params)
    assert out.shape == (B, output_dim)
    assert jnp.allclose(out, ref, atol=2e-5, rtol=2e-5), (out, ref)

    print("KERNEL_OK")
</pallas_src>

<mosaic_0001>
module attributes {stable_mosaic.version = 11 : i64} {
  func.func @gru_net_kernel(%arg0: i32, %arg1: memref<64x128xf32, #tpu.memory_space<vmem>>, %arg2: memref<128x384xf32, #tpu.memory_space<vmem>>, %arg3: memref<128x384xf32, #tpu.memory_space<vmem>>, %arg4: memref<1x384xf32, #tpu.memory_space<vmem>>, %arg5: memref<1x384xf32, #tpu.memory_space<vmem>>, %arg6: memref<128x384xf32, #tpu.memory_space<vmem>>, %arg7: memref<128x384xf32, #tpu.memory_space<vmem>>, %arg8: memref<1x384xf32, #tpu.memory_space<vmem>>, %arg9: memref<1x384xf32, #tpu.memory_space<vmem>>, %arg10: memref<128x128xf32, #tpu.memory_space<vmem>>, %arg11: memref<1x128xf32, #tpu.memory_space<vmem>>, %arg12: memref<8x128xf32, #tpu.memory_space<vmem>>, %arg13: memref<64x384xf32, #tpu.memory_space<vmem>>) attributes {dimension_semantics = [#tpu.dimension_semantics<arbitrary>], iteration_bounds = array<i64: 1>, scalar_prefetch = 0 : i64, scratch_operands = 1 : i64, tpu.core_type = #tpu.core_type<tc>, window_params = [{pipeline_mode = #tpu.pipeline_mode<synchronous>, transform_indices = @transform_0, window_bounds = array<i64: 64, 128>}, {pipeline_mode = #tpu.pipeline_mode<synchronous>, transform_indices = @transform_1, window_bounds = array<i64: 128, 384>}, {pipeline_mode = #tpu.pipeline_mode<synchronous>, transform_indices = @transform_2, window_bounds = array<i64: 128, 384>}, {pipeline_mode = #tpu.pipeline_mode<synchronous>, transform_indices = @transform_3, window_bounds = array<i64: 1, 384>}, {pipeline_mode = #tpu.pipeline_mode<synchronous>, transform_indices = @transform_4, window_bounds = array<i64: 1, 384>}, {pipeline_mode = #tpu.pipeline_mode<synchronous>, transform_indices = @transform_5, window_bounds = array<i64: 128, 384>}, {pipeline_mode = #tpu.pipeline_mode<synchronous>, transform_indices = @transform_6, window_bounds = array<i64: 128, 384>}, {pipeline_mode = #tpu.pipeline_mode<synchronous>, transform_indices = @transform_7, window_bounds = array<i64: 1, 384>}, {pipeline_mode = #tpu.pipeline_mode<synchronous>, transform_indices = @transform_8, window_bounds = array<i64: 1, 384>}, {pipeline_mode = #tpu.pipeline_mode<synchronous>, transform_indices = @transform_9, window_bounds = array<i64: 128, 128>}, {pipeline_mode = #tpu.pipeline_mode<synchronous>, transform_indices = @transform_10, window_bounds = array<i64: 1, 128>}, {pipeline_mode = #tpu.pipeline_mode<synchronous>, transform_indices = @transform_11, window_bounds = array<i64: 8, 128>}]} {
    %c0 = arith.constant 0 : index
    %c0_0 = arith.constant 0 : index
    %0 = vector.load %arg1[%c0, %c0_0] : memref<64x128xf32, #tpu.memory_space<vmem>>, vector<64x128xf32>
    %c0_1 = arith.constant 0 : index
    %c0_2 = arith.constant 0 : index
    %1 = vector.load %arg2[%c0_1, %c0_2] : memref<128x384xf32, #tpu.memory_space<vmem>>, vector<128x384xf32>
    %cst = arith.constant dense<0.000000e+00> : vector<64x384xf32>
    %2 = tpu.matmul %0, %1, %cst {dimension_numbers = #tpu.dot_dimension_numbers<[1], [0], [0], [1], [0, 0, 1, 1], [], []>} : vector<64x128xf32>, vector<128x384xf32>, vector<64x384xf32> -> vector<64x384xf32>
    %c0_3 = arith.constant 0 : index
    %c0_4 = arith.constant 0 : index
    %3 = vector.load %arg4[%c0_3, %c0_4] : memref<1x384xf32, #tpu.memory_space<vmem>>, vector<1x384xf32>
    %4 = vector.broadcast %3 : vector<1x384xf32> to vector<64x384xf32>
    %5 = arith.addf %2, %4 : vector<64x384xf32>
    %c0_5 = arith.constant 0 : index
    %c0_6 = arith.constant 0 : index
    %6 = vector.load %arg13[%c0_5, %c0_6] : memref<64x384xf32, #tpu.memory_space<vmem>>, vector<64x384xf32>
    tpu.vector_store %arg13[%c0_5, %c0_6], %5 {strides = array<i32>} : memref<64x384xf32, #tpu.memory_space<vmem>>, vector<64x384xf32>,
    %c0_7 = arith.constant 0 : index
    %c0_8 = arith.constant 0 : index
    %7 = vector.load %arg3[%c0_7, %c0_8] : memref<128x384xf32, #tpu.memory_space<vmem>>, vector<128x384xf32>
    %c0_9 = arith.constant 0 : index
    %c0_10 = arith.constant 0 : index
    %8 = vector.load %arg6[%c0_9, %c0_10] : memref<128x384xf32, #tpu.memory_space<vmem>>, vector<128x384xf32>
    %c0_11 = arith.constant 0 : index
    %c0_12 = arith.constant 0 : index
    %9 = vector.load %arg7[%c0_11, %c0_12] : memref<128x384xf32, #tpu.memory_space<vmem>>, vector<128x384xf32>
    %c0_13 = arith.constant 0 : index
    %c0_14 = arith.constant 0 : index
    %10 = vector.load %arg5[%c0_13, %c0_14] : memref<1x384xf32, #tpu.memory_space<vmem>>, vector<1x384xf32>
    %11 = vector.shape_cast %10 : vector<1x384xf32> to vector<1x384xf32>
    %12 = vector.broadcast %11 : vector<1x384xf32> to vector<8x384xf32>
    %c0_15 = arith.constant 0 : index
    %c0_16 = arith.constant 0 : index
    %13 = vector.load %arg8[%c0_15, %c0_16] : memref<1x384xf32, #tpu.memory_space<vmem>>, vector<1x384xf32>
    %14 = vector.shape_cast %13 : vector<1x384xf32> to vector<1x384xf32>
    %15 = vector.broadcast %14 : vector<1x384xf32> to vector<8x384xf32>
    %c0_17 = arith.constant 0 : index
    %c0_18 = arith.constant 0 : index
    %16 = vector.load %arg9[%c0_17, %c0_18] : memref<1x384xf32, #tpu.memory_space<vmem>>, vector<1x384xf32>
    %17 = vector.shape_cast %16 : vector<1x384xf32> to vector<1x384xf32>
    %18 = vector.broadcast %17 : vector<1x384xf32> to vector<8x384xf32>
    %cst_19 = arith.constant 0.000000e+00 : f32
    %19 = vector.broadcast %cst_19 : f32 to vector<8x128xf32>
    %cst_20 = arith.constant 0.000000e+00 : f32
    %20 = vector.broadcast %cst_20 : f32 to vector<8x128xf32>
    %c0_i32 = arith.constant 0 : i32
    %c8_i32 = arith.constant 8 : i32
    %21 = arith.muli %c0_i32, %c8_i32 : i32
    %22 = tpu.assume_multiple %21, 8 : i32
    %23 = arith.index_cast %22 : i32 to index
    %c0_21 = arith.constant 0 : index
    %24 = vector.load %arg13[%23, %c0_21] : memref<64x384xf32, #tpu.memory_space<vmem>>, vector<8x384xf32>
    %cst_22 = arith.constant dense<0.000000e+00> : vector<8x384xf32>
    %25 = tpu.matmul %19, %7, %cst_22 {dimension_numbers = #tpu.dot_dimension_numbers<[1], [0], [0], [1], [0, 0, 1, 1], [], []>} : vector<8x128xf32>, vector<128x384xf32>, vector<8x384xf32> -> vector<8x384xf32>
    %26 = arith.addf %25, %12 : vector<8x384xf32>
    %27 = vector.extract_strided_slice %24 {offsets = [0, 0], sizes = [8, 128], strides = [1, 1]} : vector<8x384xf32> to vector<8x128xf32>
    %28 = vector.extract_strided_slice %26 {offsets = [0, 0], sizes = [8, 128], strides = [1, 1]} : vector<8x384xf32> to vector<8x128xf32>
    %29 = arith.addf %27, %28 : vector<8x128xf32>
    %30 = arith.negf %29 : vector<8x128xf32>
    %31 = math.exp %30 : vector<8x128xf32>
    %cst_23 = arith.constant 1.000000e+00 : f32
    %32 = vector.broadcast %cst_23 : f32 to vector<8x128xf32>
    %33 = arith.addf %32, %31 : vector<8x128xf32>
    %34 = arith.divf %32, %33 : vector<8x128xf32>
    %35 = vector.extract_strided_slice %24 {offsets = [0, 128], sizes = [8, 128], strides = [1, 1]} : vector<8x384xf32> to vector<8x128xf32>
    %36 = vector.extract_strided_slice %26 {offsets = [0, 128], sizes = [8, 128], strides = [1, 1]} : vector<8x384xf32> to vector<8x128xf32>
    %37 = arith.addf %35, %36 : vector<8x128xf32>
    %38 = arith.negf %37 : vector<8x128xf32>
    %39 = math.exp %38 : vector<8x128xf32>
    %cst_24 = arith.constant 1.000000e+00 : f32
    %40 = vector.broadcast %cst_24 : f32 to vector<8x128xf32>
    %41 = arith.addf %40, %39 : vector<8x128xf32>
    %42 = arith.divf %40, %41 : vector<8x128xf32>
    %43 = vector.extract_strided_slice %24 {offsets = [0, 256], sizes = [8, 128], strides = [1, 1]} : vector<8x384xf32> to vector<8x128xf32>
    %44 = vector.extract_strided_slice %26 {offsets = [0, 256], sizes = [8, 128], strides = [1, 1]} : vector<8x384xf32> to vector<8x128xf32>
    %45 = arith.mulf %34, %44 : vector<8x128xf32>
    %46 = arith.addf %43, %45 : vector<8x128xf32>
    %47 = math.tanh %46 : vector<8x128xf32>
    %cst_25 = arith.constant 1.000000e+00 : f32
    %48 = vector.broadcast %cst_25 : f32 to vector<8x128xf32>
    %49 = arith.subf %48, %42 : vector<8x128xf32>
    %50 = arith.mulf %49, %47 : vector<8x128xf32>
    %51 = arith.mulf %42, %19 : vector<8x128xf32>
    %52 = arith.addf %50, %51 : vector<8x128xf32>
    %cst_26 = arith.constant dense<0.000000e+00> : vector<8x384xf32>
    %53 = tpu.matmul %52, %8, %cst_26 {dimension_numbers = #tpu.dot_dimension_numbers<[1], [0], [0], [1], [0, 0, 1, 1], [], []>} : vector<8x128xf32>, vector<128x384xf32>, vector<8x384xf32> -> vector<8x384xf32>
    %54 = arith.addf %53, %15 : vector<8x384xf32>
    %cst_27 = arith.constant dense<0.000000e+00> : vector<8x384xf32>
    %55 = tpu.matmul %20, %9, %cst_27 {dimension_numbers = #tpu.dot_dimension_numbers<[1], [0], [0], [1], [0, 0, 1, 1], [], []>} : vector<8x128xf32>, vector<128x384xf32>, vector<8x384xf32> -> vector<8x384xf32>
    %56 = arith.addf %55, %18 : vector<8x384xf32>
    %57 = vector.extract_strided_slice %54 {offsets = [0, 0], sizes = [8, 128], strides = [1, 1]} : vector<8x384xf32> to vector<8x128xf32>
    %58 = vector.extract_strided_slice %56 {offsets = [0, 0], sizes = [8, 128], strides = [1, 1]} : vector<8x384xf32> to vector<8x128xf32>
    %59 = arith.addf %57, %58 : vector<8x128xf32>
    %60 = arith.negf %59 : vector<8x128xf32>
    %61 = math.exp %60 : vector<8x128xf32>
    %cst_28 = arith.constant 1.000000e+00 : f32
    %62 = vector.broadcast %cst_28 : f32 to vector<8x128xf32>
    %63 = arith.addf %62, %61 : vector<8x128xf32>
    %64 = arith.divf %62, %63 : vector<8x128xf32>
    %65 = vector.extract_strided_slice %54 {offsets = [0, 128], sizes = [8, 128], strides = [1, 1]} : vector<8x384xf32> to vector<8x128xf32>
    %66 = vector.extract_strided_slice %56 {offsets = [0, 128], sizes = [8, 128], strides = [1, 1]} : vector<8x384xf32> to vector<8x128xf32>
    %67 = arith.addf %65, %66 : vector<8x128xf32>
    %68 = arith.negf %67 : vector<8x128xf32>
    %69 = math.exp %68 : vector<8x128xf32>
    %cst_29 = arith.constant 1.000000e+00 : f32
    %70 = vector.broadcast %cst_29 : f32 to vector<8x128xf32>
    %71 = arith.addf %70, %69 : vector<8x128xf32>
    %72 = arith.divf %70, %71 : vector<8x128xf32>
    %73 = vector.extract_strided_slice %54 {offsets = [0, 256], sizes = [8, 128], strides = [1, 1]} : vector<8x384xf32> to vector<8x128xf32>
    %74 = vector.extract_strided_slice %56 {offsets = [0, 256], sizes = [8, 128], strides = [1, 1]} : vector<8x384xf32> to vector<8x128xf32>
    %75 = arith.mulf %64, %74 : vector<8x128xf32>
    %76 = arith.addf %73, %75 : vector<8x128xf32>
    %77 = math.tanh %76 : vector<8x128xf32>
    %cst_30 = arith.constant 1.000000e+00 : f32
    %78 = vector.broadcast %cst_30 : f32 to vector<8x128xf32>
    %79 = arith.subf %78, %72 : vector<8x128xf32>
    %80 = arith.mulf %79, %77 : vector<8x128xf32>
    %81 = arith.mulf %72, %20 : vector<8x128xf32>
    %82 = arith.addf %80, %81 : vector<8x128xf32>
    %c1_i32 = arith.constant 1 : i32
    %c8_i32_31 = arith.constant 8 : i32
    %83 = arith.muli %c1_i32, %c8_i32_31 : i32
    %84 = tpu.assume_multiple %83, 8 : i32
    %85 = arith.index_cast %84 : i32 to index
    %c0_32 = arith.constant 0 : index
    %86 = vector.load %arg13[%85, %c0_32] : memref<64x384xf32, #tpu.memory_space<vmem>>, vector<8x384xf32>
    %cst_33 = arith.constant dense<0.000000e+00> : vector<8x384xf32>
    %87 = tpu.matmul %52, %7, %cst_33 {dimension_numbers = #tpu.dot_dimension_numbers<[1], [0], [0], [1], [0, 0, 1, 1], [], []>} : vector<8x128xf32>, vector<128x384xf32>, vector<8x384xf32> -> vector<8x384xf32>
    %88 = arith.addf %87, %12 : vector<8x384xf32>
    %89 = vector.extract_strided_slice %86 {offsets = [0, 0], sizes = [8, 128], strides = [1, 1]} : vector<8x384xf32> to vector<8x128xf32>
    %90 = vector.extract_strided_slice %88 {offsets = [0, 0], sizes = [8, 128], strides = [1, 1]} : vector<8x384xf32> to vector<8x128xf32>
    %91 = arith.addf %89, %90 : vector<8x128xf32>
    %92 = arith.negf %91 : vector<8x128xf32>
    %93 = math.exp %92 : vector<8x128xf32>
    %cst_34 = arith.constant 1.000000e+00 : f32
    %94 = vector.broadcast %cst_34 : f32 to vector<8x128xf32>
    %95 = arith.addf %94, %93 : vector<8x128xf32>
    %96 = arith.divf %94, %95 : vector<8x128xf32>
    %97 = vector.extract_strided_slice %86 {offsets = [0, 128], sizes = [8, 128], strides = [1, 1]} : vector<8x384xf32> to vector<8x128xf32>
    %98 = vector.extract_strided_slice %88 {offsets = [0, 128], sizes = [8, 128], strides = [1, 1]} : vector<8x384xf32> to vector<8x128xf32>
    %99 = arith.addf %97, %98 : vector<8x128xf32>
    %100 = arith.negf %99 : vector<8x128xf32>
    %101 = math.exp %100 : vector<8x128xf32>
    %cst_35 = arith.constant 1.000000e+00 : f32
    %102 = vector.broadcast %cst_35 : f32 to vector<8x128xf32>
    %103 = arith.addf %102, %101 : vector<8x128xf32>
    %104 = arith.divf %102, %103 : vector<8x128xf32>
    %105 = vector.extract_strided_slice %86 {offsets = [0, 256], sizes = [8, 128], strides = [1, 1]} : vector<8x384xf32> to vector<8x128xf32>
    %106 = vector.extract_strided_slice %88 {offsets = [0, 256], sizes = [8, 128], strides = [1, 1]} : vector<8x384xf32> to vector<8x128xf32>
    %107 = arith.mulf %96, %106 : vector<8x128xf32>
    %108 = arith.addf %105, %107 : vector<8x128xf32>
    %109 = math.tanh %108 : vector<8x128xf32>
    %cst_36 = arith.constant 1.000000e+00 : f32
    %110 = vector.broadcast %cst_36 : f32 to vector<8x128xf32>
    %111 = arith.subf %110, %104 : vector<8x128xf32>
    %112 = arith.mulf %111, %109 : vector<8x128xf32>
    %113 = arith.mulf %104, %52 : vector<8x128xf32>
    %114 = arith.addf %112, %113 : vector<8x128xf32>
    %cst_37 = arith.constant dense<0.000000e+00> : vector<8x384xf32>
    %115 = tpu.matmul %114, %8, %cst_37 {dimension_numbers = #tpu.dot_dimension_numbers<[1], [0], [0], [1], [0, 0, 1, 1], [], []>} : vector<8x128xf32>, vector<128x384xf32>, vector<8x384xf32> -> vector<8x384xf32>
    %116 = arith.addf %115, %15 : vector<8x384xf32>
    %cst_38 = arith.constant dense<0.000000e+00> : vector<8x384xf32>
    %117 = tpu.matmul %82, %9, %cst_38 {dimension_numbers = #tpu.dot_dimension_numbers<[1], [0], [0], [1], [0, 0, 1, 1], [], []>} : vector<8x128xf32>, vector<128x384xf32>, vector<8x384xf32> -> vector<8x384xf32>
    %118 = arith.addf %117, %18 : vector<8x384xf32>
    %119 = vector.extract_strided_slice %116 {offsets = [0, 0], sizes = [8, 128], strides = [1, 1]} : vector<8x384xf32> to vector<8x128xf32>
    %120 = vector.extract_strided_slice %118 {offsets = [0, 0], sizes = [8, 128], strides = [1, 1]} : vector<8x384xf32> to vector<8x128xf32>
    %121 = arith.addf %119, %120 : vector<8x128xf32>
    %122 = arith.negf %121 : vector<8x128xf32>
    %123 = math.exp %122 : vector<8x128xf32>
    %cst_39 = arith.constant 1.000000e+00 : f32
    %124 = vector.broadcast %cst_39 : f32 to vector<8x128xf32>
    %125 = arith.addf %124, %123 : vector<8x128xf32>
    %126 = arith.divf %124, %125 : vector<8x128xf32>
    %127 = vector.extract_strided_slice %116 {offsets = [0, 128], sizes = [8, 128], strides = [1, 1]} : vector<8x384xf32> to vector<8x128xf32>
    %128 = vector.extract_strided_slice %118 {offsets = [0, 128], sizes = [8, 128], strides = [1, 1]} : vector<8x384xf32> to vector<8x128xf32>
    %129 = arith.addf %127, %128 : vector<8x128xf32>
    %130 = arith.negf %129 : vector<8x128xf32>
    %131 = math.exp %130 : vector<8x128xf32>
    %cst_40 = arith.constant 1.000000e+00 : f32
    %132 = vector.broadcast %cst_40 : f32 to vector<8x128xf32>
    %133 = arith.addf %132, %131 : vector<8x128xf32>
    %134 = arith.divf %132, %133 : vector<8x128xf32>
    %135 = vector.extract_strided_slice %116 {offsets = [0, 256], sizes = [8, 128], strides = [1, 1]} : vector<8x384xf32> to vector<8x128xf32>
    %136 = vector.extract_strided_slice %118 {offsets = [0, 256], sizes = [8, 128], strides = [1, 1]} : vector<8x384xf32> to vector<8x128xf32>
    %137 = arith.mulf %126, %136 : vector<8x128xf32>
    %138 = arith.addf %135, %137 : vector<8x128xf32>
    %139 = math.tanh %138 : vector<8x128xf32>
    %cst_41 = arith.constant 1.000000e+00 : f32
    %140 = vector.broadcast %cst_41 : f32 to vector<8x128xf32>
    %141 = arith.subf %140, %134 : vector<8x128xf32>
    %142 = arith.mulf %141, %139 : vector<8x128xf32>
    %143 = arith.mulf %134, %82 : vector<8x128xf32>
    %144 = arith.addf %142, %143 : vector<8x128xf32>
    %c2_i32 = arith.constant 2 : i32
    %c8_i32_42 = arith.constant 8 : i32
    %145 = arith.muli %c2_i32, %c8_i32_42 : i32
    %146 = tpu.assume_multiple %145, 8 : i32
    %147 = arith.index_cast %146 : i32 to index
    %c0_43 = arith.constant 0 : index
    %148 = vector.load %arg13[%147, %c0_43] : memref<64x384xf32, #tpu.memory_space<vmem>>, vector<8x384xf32>
    %cst_44 = arith.constant dense<0.000000e+00> : vector<8x384xf32>
    %149 = tpu.matmul %114, %7, %cst_44 {dimension_numbers = #tpu.dot_dimension_numbers<[1], [0], [0], [1], [0, 0, 1, 1], [], []>} : vector<8x128xf32>, vector<128x384xf32>, vector<8x384xf32> -> vector<8x384xf32>
    %150 = arith.addf %149, %12 : vector<8x384xf32>
    %151 = vector.extract_strided_slice %148 {offsets = [0, 0], sizes = [8, 128], strides = [1, 1]} : vector<8x384xf32> to vector<8x128xf32>
    %152 = vector.extract_strided_slice %150 {offsets = [0, 0], sizes = [8, 128], strides = [1, 1]} : vector<8x384xf32> to vector<8x128xf32>
    %153 = arith.addf %151, %152 : vector<8x128xf32>
    %154 = arith.negf %153 : vector<8x128xf32>
    %155 = math.exp %154 : vector<8x128xf32>
    %cst_45 = arith.constant 1.000000e+00 : f32
    %156 = vector.broadcast %cst_45 : f32 to vector<8x128xf32>
    %157 = arith.addf %156, %155 : vector<8x128xf32>
    %158 = arith.divf %156, %157 : vector<8x128xf32>
    %159 = vector.extract_strided_slice %148 {offsets = [0, 128], sizes = [8, 128], strides = [1, 1]} : vector<8x384xf32> to vector<8x128xf32>
    %160 = vector.extract_strided_slice %150 {offsets = [0, 128], sizes = [8, 128], strides = [1, 1]} : vector<8x384xf32> to vector<8x128xf32>
    %161 = arith.addf %159, %160 : vector<8x128xf32>
    %162 = arith.negf %161 : vector<8x128xf32>
    %163 = math.exp %162 : vector<8x128xf32>
    %cst_46 = arith.constant 1.000000e+00 : f32
    %164 = vector.broadcast %cst_46 : f32 to vector<8x128xf32>
    %165 = arith.addf %164, %163 : vector<8x128xf32>
    %166 = arith.divf %164, %165 : vector<8x128xf32>
    %167 = vector.extract_strided_slice %148 {offsets = [0, 256], sizes = [8, 128], strides = [1, 1]} : vector<8x384xf32> to vector<8x128xf32>
    %168 = vector.extract_strided_slice %150 {offsets = [0, 256], sizes = [8, 128], strides = [1, 1]} : vector<8x384xf32> to vector<8x128xf32>
    %169 = arith.mulf %158, %168 : vector<8x128xf32>
    %170 = arith.addf %167, %169 : vector<8x128xf32>
    %171 = math.tanh %170 : vector<8x128xf32>
    %cst_47 = arith.constant 1.000000e+00 : f32
    %172 = vector.broadcast %cst_47 : f32 to vector<8x128xf32>
    %173 = arith.subf %172, %166 : vector<8x128xf32>
    %174 = arith.mulf %173, %171 : vector<8x128xf32>
    %175 = arith.mulf %166, %114 : vector<8x128xf32>
    %176 = arith.addf %174, %175 : vector<8x128xf32>
    %cst_48 = arith.constant dense<0.000000e+00> : vector<8x384xf32>
    %177 = tpu.matmul %176, %8, %cst_48 {dimension_numbers = #tpu.dot_dimension_numbers<[1], [0], [0], [1], [0, 0, 1, 1], [], []>} : vector<8x128xf32>, vector<128x384xf32>, vector<8x384xf32> -> vector<8x384xf32>
    %178 = arith.addf %177, %15 : vector<8x384xf32>
    %cst_49 = arith.constant dense<0.000000e+00> : vector<8x384xf32>
    %179 = tpu.matmul %144, %9, %cst_49 {dimension_numbers = #tpu.dot_dimension_numbers<[1], [0], [0], [1], [0, 0, 1, 1], [], []>} : vector<8x128xf32>, vector<128x384xf32>, vector<8x384xf32> -> vector<8x384xf32>
    %180 = arith.addf %179, %18 : vector<8x384xf32>
    %181 = vector.extract_strided_slice %178 {offsets = [0, 0], sizes = [8, 128], strides = [1, 1]} : vector<8x384xf32> to vector<8x128xf32>
    %182 = vector.extract_strided_slice %180 {offsets = [0, 0], sizes = [8, 128], strides = [1, 1]} : vector<8x384xf32> to vector<8x128xf32>
    %183 = arith.addf %181, %182 : vector<8x128xf32>
    %184 = arith.negf %183 : vector<8x128xf32>
    %185 = math.exp %184 : vector<8x128xf32>
    %cst_50 = arith.constant 1.000000e+00 : f32
    %186 = vector.broadcast %cst_50 : f32 to vector<8x128xf32>
    %187 = arith.addf %186, %185 : vector<8x128xf32>
    %188 = arith.divf %186, %187 : vector<8x128xf32>
    %189 = vector.extract_strided_slice %178 {offsets = [0, 128], sizes = [8, 128], strides = [1, 1]} : vector<8x384xf32> to vector<8x128xf32>
    %190 = vector.extract_strided_slice %180 {offsets = [0, 128], sizes = [8, 128], strides = [1, 1]} : vector<8x384xf32> to vector<8x128xf32>
    %191 = arith.addf %189, %190 : vector<8x128xf32>
    %192 = arith.negf %191 : vector<8x128xf32>
    %193 = math.exp %192 : vector<8x128xf32>
    %cst_51 = arith.constant 1.000000e+00 : f32
    %194 = vector.broadcast %cst_51 : f32 to vector<8x128xf32>
    %195 = arith.addf %194, %193 : vector<8x128xf32>
    %196 = arith.divf %194, %195 : vector<8x128xf32>
    %197 = vector.extract_strided_slice %178 {offsets = [0, 256], sizes = [8, 128], strides = [1, 1]} : vector<8x384xf32> to vector<8x128xf32>
    %198 = vector.extract_strided_slice %180 {offsets = [0, 256], sizes = [8, 128], strides = [1, 1]} : vector<8x384xf32> to vector<8x128xf32>
    %199 = arith.mulf %188, %198 : vector<8x128xf32>
    %200 = arith.addf %197, %199 : vector<8x128xf32>
    %201 = math.tanh %200 : vector<8x128xf32>
    %cst_52 = arith.constant 1.000000e+00 : f32
    %202 = vector.broadcast %cst_52 : f32 to vector<8x128xf32>
    %203 = arith.subf %202, %196 : vector<8x128xf32>
    %204 = arith.mulf %203, %201 : vector<8x128xf32>
    %205 = arith.mulf %196, %144 : vector<8x128xf32>
    %206 = arith.addf %204, %205 : vector<8x128xf32>
    %c3_i32 = arith.constant 3 : i32
    %c8_i32_53 = arith.constant 8 : i32
    %207 = arith.muli %c3_i32, %c8_i32_53 : i32
    %208 = tpu.assume_multiple %207, 8 : i32
    %209 = arith.index_cast %208 : i32 to index
    %c0_54 = arith.constant 0 : index
    %210 = vector.load %arg13[%209, %c0_54] : memref<64x384xf32, #tpu.memory_space<vmem>>, vector<8x384xf32>
    %cst_55 = arith.constant dense<0.000000e+00> : vector<8x384xf32>
    %211 = tpu.matmul %176, %7, %cst_55 {dimension_numbers = #tpu.dot_dimension_numbers<[1], [0], [0], [1], [0, 0, 1, 1], [], []>} : vector<8x128xf32>, vector<128x384xf32>, vector<8x384xf32> -> vector<8x384xf32>
    %212 = arith.addf %211, %12 : vector<8x384xf32>
    %213 = vector.extract_strided_slice %210 {offsets = [0, 0], sizes = [8, 128], strides = [1, 1]} : vector<8x384xf32> to vector<8x128xf32>
    %214 = vector.extract_strided_slice %212 {offsets = [0, 0], sizes = [8, 128], strides = [1, 1]} : vector<8x384xf32> to vector<8x128xf32>
    %215 = arith.addf %213, %214 : vector<8x128xf32>
    %216 = arith.negf %215 : vector<8x128xf32>
    %217 = math.exp %216 : vector<8x128xf32>
    %cst_56 = arith.constant 1.000000e+00 : f32
    %218 = vector.broadcast %cst_56 : f32 to vector<8x128xf32>
    %219 = arith.addf %218, %217 : vector<8x128xf32>
    %220 = arith.divf %218, %219 : vector<8x128xf32>
    %221 = vector.extract_strided_slice %210 {offsets = [0, 128], sizes = [8, 128], strides = [1, 1]} : vector<8x384xf32> to vector<8x128xf32>
    %222 = vector.extract_strided_slice %212 {offsets = [0, 128], sizes = [8, 128], strides = [1, 1]} : vector<8x384xf32> to vector<8x128xf32>
    %223 = arith.addf %221, %222 : vector<8x128xf32>
    %224 = arith.negf %223 : vector<8x128xf32>
    %225 = math.exp %224 : vector<8x128xf32>
    %cst_57 = arith.constant 1.000000e+00 : f32
    %226 = vector.broadcast %cst_57 : f32 to vector<8x128xf32>
    %227 = arith.addf %226, %225 : vector<8x128xf32>
    %228 = arith.divf %226, %227 : vector<8x128xf32>
    %229 = vector.extract_strided_slice %210 {offsets = [0, 256], sizes = [8, 128], strides = [1, 1]} : vector<8x384xf32> to vector<8x128xf32>
    %230 = vector.extract_strided_slice %212 {offsets = [0, 256], sizes = [8, 128], strides = [1, 1]} : vector<8x384xf32> to vector<8x128xf32>
    %231 = arith.mulf %220, %230 : vector<8x128xf32>
    %232 = arith.addf %229, %231 : vector<8x128xf32>
    %233 = math.tanh %232 : vector<8x128xf32>
    %cst_58 = arith.constant 1.000000e+00 : f32
    %234 = vector.broadcast %cst_58 : f32 to vector<8x128xf32>
    %235 = arith.subf %234, %228 : vector<8x128xf32>
    %236 = arith.mulf %235, %233 : vector<8x128xf32>
    %237 = arith.mulf %228, %176 : vector<8x128xf32>
    %238 = arith.addf %236, %237 : vector<8x128xf32>
    %cst_59 = arith.constant dense<0.000000e+00> : vector<8x384xf32>
    %239 = tpu.matmul %238, %8, %cst_59 {dimension_numbers = #tpu.dot_dimension_numbers<[1], [0], [0], [1], [0, 0, 1, 1], [], []>} : vector<8x128xf32>, vector<128x384xf32>, vector<8x384xf32> -> vector<8x384xf32>
    %240 = arith.addf %239, %15 : vector<8x384xf32>
    %cst_60 = arith.constant dense<0.000000e+00> : vector<8x384xf32>
    %241 = tpu.matmul %206, %9, %cst_60 {dimension_numbers = #tpu.dot_dimension_numbers<[1], [0], [0], [1], [0, 0, 1, 1], [], []>} : vector<8x128xf32>, vector<128x384xf32>, vector<8x384xf32> -> vector<8x384xf32>
    %242 = arith.addf %241, %18 : vector<8x384xf32>
    %243 = vector.extract_strided_slice %240 {offsets = [0, 0], sizes = [8, 128], strides = [1, 1]} : vector<8x384xf32> to vector<8x128xf32>
    %244 = vector.extract_strided_slice %242 {offsets = [0, 0], sizes = [8, 128], strides = [1, 1]} : vector<8x384xf32> to vector<8x128xf32>
    %245 = arith.addf %243, %244 : vector<8x128xf32>
    %246 = arith.negf %245 : vector<8x128xf32>
    %247 = math.exp %246 : vector<8x128xf32>
    %cst_61 = arith.constant 1.000000e+00 : f32
    %248 = vector.broadcast %cst_61 : f32 to vector<8x128xf32>
    %249 = arith.addf %248, %247 : vector<8x128xf32>
    %250 = arith.divf %248, %249 : vector<8x128xf32>
    %251 = vector.extract_strided_slice %240 {offsets = [0, 128], sizes = [8, 128], strides = [1, 1]} : vector<8x384xf32> to vector<8x128xf32>
    %252 = vector.extract_strided_slice %242 {offsets = [0, 128], sizes = [8, 128], strides = [1, 1]} : vector<8x384xf32> to vector<8x128xf32>
    %253 = arith.addf %251, %252 : vector<8x128xf32>
    %254 = arith.negf %253 : vector<8x128xf32>
    %255 = math.exp %254 : vector<8x128xf32>
    %cst_62 = arith.constant 1.000000e+00 : f32
    %256 = vector.broadcast %cst_62 : f32 to vector<8x128xf32>
    %257 = arith.addf %256, %255 : vector<8x128xf32>
    %258 = arith.divf %256, %257 : vector<8x128xf32>
    %259 = vector.extract_strided_slice %240 {offsets = [0, 256], sizes = [8, 128], strides = [1, 1]} : vector<8x384xf32> to vector<8x128xf32>
    %260 = vector.extract_strided_slice %242 {offsets = [0, 256], sizes = [8, 128], strides = [1, 1]} : vector<8x384xf32> to vector<8x128xf32>
    %261 = arith.mulf %250, %260 : vector<8x128xf32>
    %262 = arith.addf %259, %261 : vector<8x128xf32>
    %263 = math.tanh %262 : vector<8x128xf32>
    %cst_63 = arith.constant 1.000000e+00 : f32
    %264 = vector.broadcast %cst_63 : f32 to vector<8x128xf32>
    %265 = arith.subf %264, %258 : vector<8x128xf32>
    %266 = arith.mulf %265, %263 : vector<8x128xf32>
    %267 = arith.mulf %258, %206 : vector<8x128xf32>
    %268 = arith.addf %266, %267 : vector<8x128xf32>
    %c4_i32 = arith.constant 4 : i32
    %c8_i32_64 = arith.constant 8 : i32
    %269 = arith.muli %c4_i32, %c8_i32_64 : i32
    %270 = tpu.assume_multiple %269, 8 : i32
    %271 = arith.index_cast %270 : i32 to index
    %c0_65 = arith.constant 0 : index
    %272 = vector.load %arg13[%271, %c0_65] : memref<64x384xf32, #tpu.memory_space<vmem>>, vector<8x384xf32>
    %cst_66 = arith.constant dense<0.000000e+00> : vector<8x384xf32>
    %273 = tpu.matmul %238, %7, %cst_66 {dimension_numbers = #tpu.dot_dimension_numbers<[1], [0], [0], [1], [0, 0, 1, 1], [], []>} : vector<8x128xf32>, vector<128x384xf32>, vector<8x384xf32> -> vector<8x384xf32>
    %274 = arith.addf %273, %12 : vector<8x384xf32>
    %275 = vector.extract_strided_slice %272 {offsets = [0, 0], sizes = [8, 128], strides = [1, 1]} : vector<8x384xf32> to vector<8x128xf32>
    %276 = vector.extract_strided_slice %274 {offsets = [0, 0], sizes = [8, 128], strides = [1, 1]} : vector<8x384xf32> to vector<8x128xf32>
    %277 = arith.addf %275, %276 : vector<8x128xf32>
    %278 = arith.negf %277 : vector<8x128xf32>
    %279 = math.exp %278 : vector<8x128xf32>
    %cst_67 = arith.constant 1.000000e+00 : f32
    %280 = vector.broadcast %cst_67 : f32 to vector<8x128xf32>
    %281 = arith.addf %280, %279 : vector<8x128xf32>
    %282 = arith.divf %280, %281 : vector<8x128xf32>
    %283 = vector.extract_strided_slice %272 {offsets = [0, 128], sizes = [8, 128], strides = [1, 1]} : vector<8x384xf32> to vector<8x128xf32>
    %284 = vector.extract_strided_slice %274 {offsets = [0, 128], sizes = [8, 128], strides = [1, 1]} : vector<8x384xf32> to vector<8x128xf32>
    %285 = arith.addf %283, %284 : vector<8x128xf32>
    %286 = arith.negf %285 : vector<8x128xf32>
    %287 = math.exp %286 : vector<8x128xf32>
    %cst_68 = arith.constant 1.000000e+00 : f32
    %288 = vector.broadcast %cst_68 : f32 to vector<8x128xf32>
    %289 = arith.addf %288, %287 : vector<8x128xf32>
    %290 = arith.divf %288, %289 : vector<8x128xf32>
    %291 = vector.extract_strided_slice %272 {offsets = [0, 256], sizes = [8, 128], strides = [1, 1]} : vector<8x384xf32> to vector<8x128xf32>
    %292 = vector.extract_strided_slice %274 {offsets = [0, 256], sizes = [8, 128], strides = [1, 1]} : vector<8x384xf32> to vector<8x128xf32>
    %293 = arith.mulf %282, %292 : vector<8x128xf32>
    %294 = arith.addf %291, %293 : vector<8x128xf32>
    %295 = math.tanh %294 : vector<8x128xf32>
    %cst_69 = arith.constant 1.000000e+00 : f32
    %296 = vector.broadcast %cst_69 : f32 to vector<8x128xf32>
    %297 = arith.subf %296, %290 : vector<8x128xf32>
    %298 = arith.mulf %297, %295 : vector<8x128xf32>
    %299 = arith.mulf %290, %238 : vector<8x128xf32>
    %300 = arith.addf %298, %299 : vector<8x128xf32>
    %cst_70 = arith.constant dense<0.000000e+00> : vector<8x384xf32>
    %301 = tpu.matmul %300, %8, %cst_70 {dimension_numbers = #tpu.dot_dimension_numbers<[1], [0], [0], [1], [0, 0, 1, 1], [], []>} : vector<8x128xf32>, vector<128x384xf32>, vector<8x384xf32> -> vector<8x384xf32>
    %302 = arith.addf %301, %15 : vector<8x384xf32>
    %cst_71 = arith.constant dense<0.000000e+00> : vector<8x384xf32>
    %303 = tpu.matmul %268, %9, %cst_71 {dimension_numbers = #tpu.dot_dimension_numbers<[1], [0], [0], [1], [0, 0, 1, 1], [], []>} : vector<8x128xf32>, vector<128x384xf32>, vector<8x384xf32> -> vector<8x384xf32>
    %304 = arith.addf %303, %18 : vector<8x384xf32>
    %305 = vector.extract_strided_slice %302 {offsets = [0, 0], sizes = [8, 128], strides = [1, 1]} : vector<8x384xf32> to vector<8x128xf32>
    %306 = vector.extract_strided_slice %304 {offsets = [0, 0], sizes = [8, 128], strides = [1, 1]} : vector<8x384xf32> to vector<8x128xf32>
    %307 = arith.addf %305, %306 : vector<8x128xf32>
    %308 = arith.negf %307 : vector<8x128xf32>
    %309 = math.exp %308 : vector<8x128xf32>
    %cst_72 = arith.constant 1.000000e+00 : f32
    %310 = vector.broadcast %cst_72 : f32 to vector<8x128xf32>
    %311 = arith.addf %310, %309 : vector<8x128xf32>
    %312 = arith.divf %310, %311 : vector<8x128xf32>
    %313 = vector.extract_strided_slice %302 {offsets = [0, 128], sizes = [8, 128], strides = [1, 1]} : vector<8x384xf32> to vector<8x128xf32>
    %314 = vector.extract_strided_slice %304 {offsets = [0, 128], sizes = [8, 128], strides = [1, 1]} : vector<8x384xf32> to vector<8x128xf32>
    %315 = arith.addf %313, %314 : vector<8x128xf32>
    %316 = arith.negf %315 : vector<8x128xf32>
    %317 = math.exp %316 : vector<8x128xf32>
    %cst_73 = arith.constant 1.000000e+00 : f32
    %318 = vector.broadcast %cst_73 : f32 to vector<8x128xf32>
    %319 = arith.addf %318, %317 : vector<8x128xf32>
    %320 = arith.divf %318, %319 : vector<8x128xf32>
    %321 = vector.extract_strided_slice %302 {offsets = [0, 256], sizes = [8, 128], strides = [1, 1]} : vector<8x384xf32> to vector<8x128xf32>
    %322 = vector.extract_strided_slice %304 {offsets = [0, 256], sizes = [8, 128], strides = [1, 1]} : vector<8x384xf32> to vector<8x128xf32>
    %323 = arith.mulf %312, %322 : vector<8x128xf32>
    %324 = arith.addf %321, %323 : vector<8x128xf32>
    %325 = math.tanh %324 : vector<8x128xf32>
    %cst_74 = arith.constant 1.000000e+00 : f32
    %326 = vector.broadcast %cst_74 : f32 to vector<8x128xf32>
    %327 = arith.subf %326, %320 : vector<8x128xf32>
    %328 = arith.mulf %327, %325 : vector<8x128xf32>
    %329 = arith.mulf %320, %268 : vector<8x128xf32>
    %330 = arith.addf %328, %329 : vector<8x128xf32>
    %c5_i32 = arith.constant 5 : i32
    %c8_i32_75 = arith.constant 8 : i32
    %331 = arith.muli %c5_i32, %c8_i32_75 : i32
    %332 = tpu.assume_multiple %331, 8 : i32
    %333 = arith.index_cast %332 : i32 to index
    %c0_76 = arith.constant 0 : index
    %334 = vector.load %arg13[%333, %c0_76] : memref<64x384xf32, #tpu.memory_space<vmem>>, vector<8x384xf32>
    %cst_77 = arith.constant dense<0.000000e+00> : vector<8x384xf32>
    %335 = tpu.matmul %300, %7, %cst_77 {dimension_numbers = #tpu.dot_dimension_numbers<[1], [0], [0], [1], [0, 0, 1, 1], [], []>} : vector<8x128xf32>, vector<128x384xf32>, vector<8x384xf32> -> vector<8x384xf32>
    %336 = arith.addf %335, %12 : vector<8x384xf32>
    %337 = vector.extract_strided_slice %334 {offsets = [0, 0], sizes = [8, 128], strides = [1, 1]} : vector<8x384xf32> to vector<8x128xf32>
    %338 = vector.extract_strided_slice %336 {offsets = [0, 0], sizes = [8, 128], strides = [1, 1]} : vector<8x384xf32> to vector<8x128xf32>
    %339 = arith.addf %337, %338 : vector<8x128xf32>
    %340 = arith.negf %339 : vector<8x128xf32>
    %341 = math.exp %340 : vector<8x128xf32>
    %cst_78 = arith.constant 1.000000e+00 : f32
    %342 = vector.broadcast %cst_78 : f32 to vector<8x128xf32>
    %343 = arith.addf %342, %341 : vector<8x128xf32>
    %344 = arith.divf %342, %343 : vector<8x128xf32>
    %345 = vector.extract_strided_slice %334 {offsets = [0, 128], sizes = [8, 128], strides = [1, 1]} : vector<8x384xf32> to vector<8x128xf32>
    %346 = vector.extract_strided_slice %336 {offsets = [0, 128], sizes = [8, 128], strides = [1, 1]} : vector<8x384xf32> to vector<8x128xf32>
    %347 = arith.addf %345, %346 : vector<8x128xf32>
    %348 = arith.negf %347 : vector<8x128xf32>
    %349 = math.exp %348 : vector<8x128xf32>
    %cst_79 = arith.constant 1.000000e+00 : f32
    %350 = vector.broadcast %cst_79 : f32 to vector<8x128xf32>
    %351 = arith.addf %350, %349 : vector<8x128xf32>
    %352 = arith.divf %350, %351 : vector<8x128xf32>
    %353 = vector.extract_strided_slice %334 {offsets = [0, 256], sizes = [8, 128], strides = [1, 1]} : vector<8x384xf32> to vector<8x128xf32>
    %354 = vector.extract_strided_slice %336 {offsets = [0, 256], sizes = [8, 128], strides = [1, 1]} : vector<8x384xf32> to vector<8x128xf32>
    %355 = arith.mulf %344, %354 : vector<8x128xf32>
    %356 = arith.addf %353, %355 : vector<8x128xf32>
    %357 = math.tanh %356 : vector<8x128xf32>
    %cst_80 = arith.constant 1.000000e+00 : f32
    %358 = vector.broadcast %cst_80 : f32 to vector<8x128xf32>
    %359 = arith.subf %358, %352 : vector<8x128xf32>
    %360 = arith.mulf %359, %357 : vector<8x128xf32>
    %361 = arith.mulf %352, %300 : vector<8x128xf32>
    %362 = arith.addf %360, %361 : vector<8x128xf32>
    %cst_81 = arith.constant dense<0.000000e+00> : vector<8x384xf32>
    %363 = tpu.matmul %362, %8, %cst_81 {dimension_numbers = #tpu.dot_dimension_numbers<[1], [0], [0], [1], [0, 0, 1, 1], [], []>} : vector<8x128xf32>, vector<128x384xf32>, vector<8x384xf32> -> vector<8x384xf32>
    %364 = arith.addf %363, %15 : vector<8x384xf32>
    %cst_82 = arith.constant dense<0.000000e+00> : vector<8x384xf32>
    %365 = tpu.matmul %330, %9, %cst_82 {dimension_numbers = #tpu.dot_dimension_numbers<[1], [0], [0], [1], [0, 0, 1, 1], [], []>} : vector<8x128xf32>, vector<128x384xf32>, vector<8x384xf32> -> vector<8x384xf32>
    %366 = arith.addf %365, %18 : vector<8x384xf32>
    %367 = vector.extract_strided_slice %364 {offsets = [0, 0], sizes = [8, 128], strides = [1, 1]} : vector<8x384xf32> to vector<8x128xf32>
    %368 = vector.extract_strided_slice %366 {offsets = [0, 0], sizes = [8, 128], strides = [1, 1]} : vector<8x384xf32> to vector<8x128xf32>
    %369 = arith.addf %367, %368 : vector<8x128xf32>
    %370 = arith.negf %369 : vector<8x128xf32>
    %371 = math.exp %370 : vector<8x128xf32>
    %cst_83 = arith.constant 1.000000e+00 : f32
    %372 = vector.broadcast %cst_83 : f32 to vector<8x128xf32>
    %373 = arith.addf %372, %371 : vector<8x128xf32>
    %374 = arith.divf %372, %373 : vector<8x128xf32>
    %375 = vector.extract_strided_slice %364 {offsets = [0, 128], sizes = [8, 128], strides = [1, 1]} : vector<8x384xf32> to vector<8x128xf32>
    %376 = vector.extract_strided_slice %366 {offsets = [0, 128], sizes = [8, 128], strides = [1, 1]} : vector<8x384xf32> to vector<8x128xf32>
    %377 = arith.addf %375, %376 : vector<8x128xf32>
    %378 = arith.negf %377 : vector<8x128xf32>
    %379 = math.exp %378 : vector<8x128xf32>
    %cst_84 = arith.constant 1.000000e+00 : f32
    %380 = vector.broadcast %cst_84 : f32 to vector<8x128xf32>
    %381 = arith.addf %380, %379 : vector<8x128xf32>
    %382 = arith.divf %380, %381 : vector<8x128xf32>
    %383 = vector.extract_strided_slice %364 {offsets = [0, 256], sizes = [8, 128], strides = [1, 1]} : vector<8x384xf32> to vector<8x128xf32>
    %384 = vector.extract_strided_slice %366 {offsets = [0, 256], sizes = [8, 128], strides = [1, 1]} : vector<8x384xf32> to vector<8x128xf32>
    %385 = arith.mulf %374, %384 : vector<8x128xf32>
    %386 = arith.addf %383, %385 : vector<8x128xf32>
    %387 = math.tanh %386 : vector<8x128xf32>
    %cst_85 = arith.constant 1.000000e+00 : f32
    %388 = vector.broadcast %cst_85 : f32 to vector<8x128xf32>
    %389 = arith.subf %388, %382 : vector<8x128xf32>
    %390 = arith.mulf %389, %387 : vector<8x128xf32>
    %391 = arith.mulf %382, %330 : vector<8x128xf32>
    %392 = arith.addf %390, %391 : vector<8x128xf32>
    %c6_i32 = arith.constant 6 : i32
    %c8_i32_86 = arith.constant 8 : i32
    %393 = arith.muli %c6_i32, %c8_i32_86 : i32
    %394 = tpu.assume_multiple %393, 8 : i32
    %395 = arith.index_cast %394 : i32 to index
    %c0_87 = arith.constant 0 : index
    %396 = vector.load %arg13[%395, %c0_87] : memref<64x384xf32, #tpu.memory_space<vmem>>, vector<8x384xf32>
    %cst_88 = arith.constant dense<0.000000e+00> : vector<8x384xf32>
    %397 = tpu.matmul %362, %7, %cst_88 {dimension_numbers = #tpu.dot_dimension_numbers<[1], [0], [0], [1], [0, 0, 1, 1], [], []>} : vector<8x128xf32>, vector<128x384xf32>, vector<8x384xf32> -> vector<8x384xf32>
    %398 = arith.addf %397, %12 : vector<8x384xf32>
    %399 = vector.extract_strided_slice %396 {offsets = [0, 0], sizes = [8, 128], strides = [1, 1]} : vector<8x384xf32> to vector<8x128xf32>
    %400 = vector.extract_strided_slice %398 {offsets = [0, 0], sizes = [8, 128], strides = [1, 1]} : vector<8x384xf32> to vector<8x128xf32>
    %401 = arith.addf %399, %400 : vector<8x128xf32>
    %402 = arith.negf %401 : vector<8x128xf32>
    %403 = math.exp %402 : vector<8x128xf32>
    %cst_89 = arith.constant 1.000000e+00 : f32
    %404 = vector.broadcast %cst_89 : f32 to vector<8x128xf32>
    %405 = arith.addf %404, %403 : vector<8x128xf32>
    %406 = arith.divf %404, %405 : vector<8x128xf32>
    %407 = vector.extract_strided_slice %396 {offsets = [0, 128], sizes = [8, 128], strides = [1, 1]} : vector<8x384xf32> to vector<8x128xf32>
    %408 = vector.extract_strided_slice %398 {offsets = [0, 128], sizes = [8, 128], strides = [1, 1]} : vector<8x384xf32> to vector<8x128xf32>
    %409 = arith.addf %407, %408 : vector<8x128xf32>
    %410 = arith.negf %409 : vector<8x128xf32>
    %411 = math.exp %410 : vector<8x128xf32>
    %cst_90 = arith.constant 1.000000e+00 : f32
    %412 = vector.broadcast %cst_90 : f32 to vector<8x128xf32>
    %413 = arith.addf %412, %411 : vector<8x128xf32>
    %414 = arith.divf %412, %413 : vector<8x128xf32>
    %415 = vector.extract_strided_slice %396 {offsets = [0, 256], sizes = [8, 128], strides = [1, 1]} : vector<8x384xf32> to vector<8x128xf32>
    %416 = vector.extract_strided_slice %398 {offsets = [0, 256], sizes = [8, 128], strides = [1, 1]} : vector<8x384xf32> to vector<8x128xf32>
    %417 = arith.mulf %406, %416 : vector<8x128xf32>
    %418 = arith.addf %415, %417 : vector<8x128xf32>
    %419 = math.tanh %418 : vector<8x128xf32>
    %cst_91 = arith.constant 1.000000e+00 : f32
    %420 = vector.broadcast %cst_91 : f32 to vector<8x128xf32>
    %421 = arith.subf %420, %414 : vector<8x128xf32>
    %422 = arith.mulf %421, %419 : vector<8x128xf32>
    %423 = arith.mulf %414, %362 : vector<8x128xf32>
    %424 = arith.addf %422, %423 : vector<8x128xf32>
    %cst_92 = arith.constant dense<0.000000e+00> : vector<8x384xf32>
    %425 = tpu.matmul %424, %8, %cst_92 {dimension_numbers = #tpu.dot_dimension_numbers<[1], [0], [0], [1], [0, 0, 1, 1], [], []>} : vector<8x128xf32>, vector<128x384xf32>, vector<8x384xf32> -> vector<8x384xf32>
    %426 = arith.addf %425, %15 : vector<8x384xf32>
    %cst_93 = arith.constant dense<0.000000e+00> : vector<8x384xf32>
    %427 = tpu.matmul %392, %9, %cst_93 {dimension_numbers = #tpu.dot_dimension_numbers<[1], [0], [0], [1], [0, 0, 1, 1], [], []>} : vector<8x128xf32>, vector<128x384xf32>, vector<8x384xf32> -> vector<8x384xf32>
    %428 = arith.addf %427, %18 : vector<8x384xf32>
    %429 = vector.extract_strided_slice %426 {offsets = [0, 0], sizes = [8, 128], strides = [1, 1]} : vector<8x384xf32> to vector<8x128xf32>
    %430 = vector.extract_strided_slice %428 {offsets = [0, 0], sizes = [8, 128], strides = [1, 1]} : vector<8x384xf32> to vector<8x128xf32>
    %431 = arith.addf %429, %430 : vector<8x128xf32>
    %432 = arith.negf %431 : vector<8x128xf32>
    %433 = math.exp %432 : vector<8x128xf32>
    %cst_94 = arith.constant 1.000000e+00 : f32
    %434 = vector.broadcast %cst_94 : f32 to vector<8x128xf32>
    %435 = arith.addf %434, %433 : vector<8x128xf32>
    %436 = arith.divf %434, %435 : vector<8x128xf32>
    %437 = vector.extract_strided_slice %426 {offsets = [0, 128], sizes = [8, 128], strides = [1, 1]} : vector<8x384xf32> to vector<8x128xf32>
    %438 = vector.extract_strided_slice %428 {offsets = [0, 128], sizes = [8, 128], strides = [1, 1]} : vector<8x384xf32> to vector<8x128xf32>
    %439 = arith.addf %437, %438 : vector<8x128xf32>
    %440 = arith.negf %439 : vector<8x128xf32>
    %441 = math.exp %440 : vector<8x128xf32>
    %cst_95 = arith.constant 1.000000e+00 : f32
    %442 = vector.broadcast %cst_95 : f32 to vector<8x128xf32>
    %443 = arith.addf %442, %441 : vector<8x128xf32>
    %444 = arith.divf %442, %443 : vector<8x128xf32>
    %445 = vector.extract_strided_slice %426 {offsets = [0, 256], sizes = [8, 128], strides = [1, 1]} : vector<8x384xf32> to vector<8x128xf32>
    %446 = vector.extract_strided_slice %428 {offsets = [0, 256], sizes = [8, 128], strides = [1, 1]} : vector<8x384xf32> to vector<8x128xf32>
    %447 = arith.mulf %436, %446 : vector<8x128xf32>
    %448 = arith.addf %445, %447 : vector<8x128xf32>
    %449 = math.tanh %448 : vector<8x128xf32>
    %cst_96 = arith.constant 1.000000e+00 : f32
    %450 = vector.broadcast %cst_96 : f32 to vector<8x128xf32>
    %451 = arith.subf %450, %444 : vector<8x128xf32>
    %452 = arith.mulf %451, %449 : vector<8x128xf32>
    %453 = arith.mulf %444, %392 : vector<8x128xf32>
    %454 = arith.addf %452, %453 : vector<8x128xf32>
    %c7_i32 = arith.constant 7 : i32
    %c8_i32_97 = arith.constant 8 : i32
    %455 = arith.muli %c7_i32, %c8_i32_97 : i32
    %456 = tpu.assume_multiple %455, 8 : i32
    %457 = arith.index_cast %456 : i32 to index
    %c0_98 = arith.constant 0 : index
    %458 = vector.load %arg13[%457, %c0_98] : memref<64x384xf32, #tpu.memory_space<vmem>>, vector<8x384xf32>
    %cst_99 = arith.constant dense<0.000000e+00> : vector<8x384xf32>
    %459 = tpu.matmul %424, %7, %cst_99 {dimension_numbers = #tpu.dot_dimension_numbers<[1], [0], [0], [1], [0, 0, 1, 1], [], []>} : vector<8x128xf32>, vector<128x384xf32>, vector<8x384xf32> -> vector<8x384xf32>
    %460 = arith.addf %459, %12 : vector<8x384xf32>
    %461 = vector.extract_strided_slice %458 {offsets = [0, 0], sizes = [8, 128], strides = [1, 1]} : vector<8x384xf32> to vector<8x128xf32>
    %462 = vector.extract_strided_slice %460 {offsets = [0, 0], sizes = [8, 128], strides = [1, 1]} : vector<8x384xf32> to vector<8x128xf32>
    %463 = arith.addf %461, %462 : vector<8x128xf32>
    %464 = arith.negf %463 : vector<8x128xf32>
    %465 = math.exp %464 : vector<8x128xf32>
    %cst_100 = arith.constant 1.000000e+00 : f32
    %466 = vector.broadcast %cst_100 : f32 to vector<8x128xf32>
    %467 = arith.addf %466, %465 : vector<8x128xf32>
    %468 = arith.divf %466, %467 : vector<8x128xf32>
    %469 = vector.extract_strided_slice %458 {offsets = [0, 128], sizes = [8, 128], strides = [1, 1]} : vector<8x384xf32> to vector<8x128xf32>
    %470 = vector.extract_strided_slice %460 {offsets = [0, 128], sizes = [8, 128], strides = [1, 1]} : vector<8x384xf32> to vector<8x128xf32>
    %471 = arith.addf %469, %470 : vector<8x128xf32>
    %472 = arith.negf %471 : vector<8x128xf32>
    %473 = math.exp %472 : vector<8x128xf32>
    %cst_101 = arith.constant 1.000000e+00 : f32
    %474 = vector.broadcast %cst_101 : f32 to vector<8x128xf32>
    %475 = arith.addf %474, %473 : vector<8x128xf32>
    %476 = arith.divf %474, %475 : vector<8x128xf32>
    %477 = vector.extract_strided_slice %458 {offsets = [0, 256], sizes = [8, 128], strides = [1, 1]} : vector<8x384xf32> to vector<8x128xf32>
    %478 = vector.extract_strided_slice %460 {offsets = [0, 256], sizes = [8, 128], strides = [1, 1]} : vector<8x384xf32> to vector<8x128xf32>
    %479 = arith.mulf %468, %478 : vector<8x128xf32>
    %480 = arith.addf %477, %479 : vector<8x128xf32>
    %481 = math.tanh %480 : vector<8x128xf32>
    %cst_102 = arith.constant 1.000000e+00 : f32
    %482 = vector.broadcast %cst_102 : f32 to vector<8x128xf32>
    %483 = arith.subf %482, %476 : vector<8x128xf32>
    %484 = arith.mulf %483, %481 : vector<8x128xf32>
    %485 = arith.mulf %476, %424 : vector<8x128xf32>
    %486 = arith.addf %484, %485 : vector<8x128xf32>
    %cst_103 = arith.constant dense<0.000000e+00> : vector<8x384xf32>
    %487 = tpu.matmul %486, %8, %cst_103 {dimension_numbers = #tpu.dot_dimension_numbers<[1], [0], [0], [1], [0, 0, 1, 1], [], []>} : vector<8x128xf32>, vector<128x384xf32>, vector<8x384xf32> -> vector<8x384xf32>
    %488 = arith.addf %487, %15 : vector<8x384xf32>
    %cst_104 = arith.constant dense<0.000000e+00> : vector<8x384xf32>
    %489 = tpu.matmul %454, %9, %cst_104 {dimension_numbers = #tpu.dot_dimension_numbers<[1], [0], [0], [1], [0, 0, 1, 1], [], []>} : vector<8x128xf32>, vector<128x384xf32>, vector<8x384xf32> -> vector<8x384xf32>
    %490 = arith.addf %489, %18 : vector<8x384xf32>
    %491 = vector.extract_strided_slice %488 {offsets = [0, 0], sizes = [8, 128], strides = [1, 1]} : vector<8x384xf32> to vector<8x128xf32>
    %492 = vector.extract_strided_slice %490 {offsets = [0, 0], sizes = [8, 128], strides = [1, 1]} : vector<8x384xf32> to vector<8x128xf32>
    %493 = arith.addf %491, %492 : vector<8x128xf32>
    %494 = arith.negf %493 : vector<8x128xf32>
    %495 = math.exp %494 : vector<8x128xf32>
    %cst_105 = arith.constant 1.000000e+00 : f32
    %496 = vector.broadcast %cst_105 : f32 to vector<8x128xf32>
    %497 = arith.addf %496, %495 : vector<8x128xf32>
    %498 = arith.divf %496, %497 : vector<8x128xf32>
    %499 = vector.extract_strided_slice %488 {offsets = [0, 128], sizes = [8, 128], strides = [1, 1]} : vector<8x384xf32> to vector<8x128xf32>
    %500 = vector.extract_strided_slice %490 {offsets = [0, 128], sizes = [8, 128], strides = [1, 1]} : vector<8x384xf32> to vector<8x128xf32>
    %501 = arith.addf %499, %500 : vector<8x128xf32>
    %502 = arith.negf %501 : vector<8x128xf32>
    %503 = math.exp %502 : vector<8x128xf32>
    %cst_106 = arith.constant 1.000000e+00 : f32
    %504 = vector.broadcast %cst_106 : f32 to vector<8x128xf32>
    %505 = arith.addf %504, %503 : vector<8x128xf32>
    %506 = arith.divf %504, %505 : vector<8x128xf32>
    %507 = vector.extract_strided_slice %488 {offsets = [0, 256], sizes = [8, 128], strides = [1, 1]} : vector<8x384xf32> to vector<8x128xf32>
    %508 = vector.extract_strided_slice %490 {offsets = [0, 256], sizes = [8, 128], strides = [1, 1]} : vector<8x384xf32> to vector<8x128xf32>
    %509 = arith.mulf %498, %508 : vector<8x128xf32>
    %510 = arith.addf %507, %509 : vector<8x128xf32>
    %511 = math.tanh %510 : vector<8x128xf32>
    %cst_107 = arith.constant 1.000000e+00 : f32
    %512 = vector.broadcast %cst_107 : f32 to vector<8x128xf32>
    %513 = arith.subf %512, %506 : vector<8x128xf32>
    %514 = arith.mulf %513, %511 : vector<8x128xf32>
    %515 = arith.mulf %506, %454 : vector<8x128xf32>
    %516 = arith.addf %514, %515 : vector<8x128xf32>
    %c8_i32_108 = arith.constant 8 : i32
    %cst_109 = arith.constant 0.000000e+00 : f32
    %517 = vector.broadcast %cst_109 : f32 to vector<8x128xf32>
    %518 = arith.maximumf %516, %517 : vector<8x128xf32>
    %c0_110 = arith.constant 0 : index
    %c0_111 = arith.constant 0 : index
    %519 = vector.load %arg10[%c0_110, %c0_111] : memref<128x128xf32, #tpu.memory_space<vmem>>, vector<128x128xf32>
    %cst_112 = arith.constant dense<0.000000e+00> : vector<8x128xf32>
    %520 = tpu.matmul %518, %519, %cst_112 {dimension_numbers = #tpu.dot_dimension_numbers<[1], [0], [0], [1], [0, 0, 1, 1], [], []>} : vector<8x128xf32>, vector<128x128xf32>, vector<8x128xf32> -> vector<8x128xf32>
    %c0_113 = arith.constant 0 : index
    %c0_114 = arith.constant 0 : index
    %521 = vector.load %arg11[%c0_113, %c0_114] : memref<1x128xf32, #tpu.memory_space<vmem>>, vector<1x128xf32>
    %522 = vector.broadcast %521 : vector<1x128xf32> to vector<8x128xf32>
    %523 = arith.addf %520, %522 : vector<8x128xf32>
    %c0_115 = arith.constant 0 : index
    %c0_116 = arith.constant 0 : index
    %524 = vector.load %arg12[%c0_115, %c0_116] : memref<8x128xf32, #tpu.memory_space<vmem>>, vector<8x128xf32>
    tpu.vector_store %arg12[%c0_115, %c0_116], %523 {strides = array<i32>} : memref<8x128xf32, #tpu.memory_space<vmem>>, vector<8x128xf32>,
    return
  }
  func.func @transform_0(%arg0: i32) -> (i32, i32) {
    %c0_i32 = arith.constant 0 : i32
    %c0_i32_0 = arith.constant 0 : i32
    %c0_i32_1 = arith.constant 0 : i32
    return %c0_i32, %c0_i32_0 : i32, i32
  }
  func.func @transform_1(%arg0: i32) -> (i32, i32) {
    %c0_i32 = arith.constant 0 : i32
    %c0_i32_0 = arith.constant 0 : i32
    %c0_i32_1 = arith.constant 0 : i32
    return %c0_i32, %c0_i32_0 : i32, i32
  }
  func.func @transform_2(%arg0: i32) -> (i32, i32) {
    %c0_i32 = arith.constant 0 : i32
    %c0_i32_0 = arith.constant 0 : i32
    %c0_i32_1 = arith.constant 0 : i32
    return %c0_i32, %c0_i32_0 : i32, i32
  }
  func.func @transform_3(%arg0: i32) -> (i32, i32) {
    %c0_i32 = arith.constant 0 : i32
    %c0_i32_0 = arith.constant 0 : i32
    %c0_i32_1 = arith.constant 0 : i32
    return %c0_i32, %c0_i32_0 : i32, i32
  }
  func.func @transform_4(%arg0: i32) -> (i32, i32) {
    %c0_i32 = arith.constant 0 : i32
    %c0_i32_0 = arith.constant 0 : i32
    %c0_i32_1 = arith.constant 0 : i32
    return %c0_i32, %c0_i32_0 : i32, i32
  }
  func.func @transform_5(%arg0: i32) -> (i32, i32) {
    %c0_i32 = arith.constant 0 : i32
    %c0_i32_0 = arith.constant 0 : i32
    %c0_i32_1 = arith.constant 0 : i32
    return %c0_i32, %c0_i32_0 : i32, i32
  }
  func.func @transform_6(%arg0: i32) -> (i32, i32) {
    %c0_i32 = arith.constant 0 : i32
    %c0_i32_0 = arith.constant 0 : i32
    %c0_i32_1 = arith.constant 0 : i32
    return %c0_i32, %c0_i32_0 : i32, i32
  }
  func.func @transform_7(%arg0: i32) -> (i32, i32) {
    %c0_i32 = arith.constant 0 : i32
    %c0_i32_0 = arith.constant 0 : i32
    %c0_i32_1 = arith.constant 0 : i32
    return %c0_i32, %c0_i32_0 : i32, i32
  }
  func.func @transform_8(%arg0: i32) -> (i32, i32) {
    %c0_i32 = arith.constant 0 : i32
    %c0_i32_0 = arith.constant 0 : i32
    %c0_i32_1 = arith.constant 0 : i32
    return %c0_i32, %c0_i32_0 : i32, i32
  }
  func.func @transform_9(%arg0: i32) -> (i32, i32) {
    %c0_i32 = arith.constant 0 : i32
    %c0_i32_0 = arith.constant 0 : i32
    %c0_i32_1 = arith.constant 0 : i32
    return %c0_i32, %c0_i32_0 : i32, i32
  }
  func.func @transform_10(%arg0: i32) -> (i32, i32) {
    %c0_i32 = arith.constant 0 : i32
    %c0_i32_0 = arith.constant 0 : i32
    %c0_i32_1 = arith.constant 0 : i32
    return %c0_i32, %c0_i32_0 : i32, i32
  }
  func.func @transform_11(%arg0: i32) -> (i32, i32) {
    %c0_i32 = arith.constant 0 : i32
    %c0_i32_0 = arith.constant 0 : i32
    %c0_i32_1 = arith.constant 0 : i32
    return %c0_i32, %c0_i32_0 : i32, i32
  }
}

</mosaic_0001>

<llo_original>
// kernel: tpu_custom_call.1
$region0: #{tpu_custom_call.1}
  #allocation0 [shape = 'u32[]', space=smem, size = 0x4, offset = 0x4, fixed_abs, tag = 'smem constant byte address 0x4 - core index']
  #allocation1 [shape = 'u32[144,128]{1,0:T(1,128)}', space=vmem, size = 0x12000, scoped, tag = 'internal scratch']
  #allocation2 [shape = 'f32[64,384]{1,0:T(8,128)}', space=vmem, size = 0x18000, scoped, tag = 'scratch operand']
  %s0 = inlined_call_operand.hbm [shape: f32[64,128], index: 0, kind: input, shape index: {}]
  %s1 = inlined_call_operand.hbm [shape: f32[128,384], index: 1, kind: input, shape index: {}]
  %s2 = inlined_call_operand.hbm [shape: f32[128,384], index: 2, kind: input, shape index: {}]
  %s3 = inlined_call_operand.vmem [shape: f32[1,384], index: 3, kind: input, shape index: {}]
  %s4 = inlined_call_operand.vmem [shape: f32[1,384], index: 4, kind: input, shape index: {}]
  %s5 = inlined_call_operand.hbm [shape: f32[128,384], index: 5, kind: input, shape index: {}]
  %s6 = inlined_call_operand.hbm [shape: f32[128,384], index: 6, kind: input, shape index: {}]
  %s7 = inlined_call_operand.vmem [shape: f32[1,384], index: 7, kind: input, shape index: {}]
  %s8 = inlined_call_operand.vmem [shape: f32[1,384], index: 8, kind: input, shape index: {}]
  %s9 = inlined_call_operand.hbm [shape: f32[128,128], index: 9, kind: input, shape index: {}]
  %s10 = inlined_call_operand.vmem [shape: f32[1,128], index: 10, kind: input, shape index: {}]
  %s11 = inlined_call_operand.hbm [shape: f32[8,128], index: 11, kind: output, shape index: {}]
  %s12 = sld [smem:[#allocation0]]
  $region78: #{tpu_custom_call.1} parent=0
    _
  %s14 = ssub.s32 1, %s12
  %s15 = scalar_select 0, %s14, %s12
  $region1: #{tpu_custom_call.1} parent=0
    #allocation3 [shape = 'u8[32768]{0}', space=vmem, size = 0x8000, scoped, tag = 'input window, operand 0, single buffered']
    #allocation4 [shape = 's32[1]{0}', space=sflag, size = 0x4, scoped, tag = 'scoped memory for tpu_custom_call.1']
    #allocation5 [shape = 's32[1]{0}', space=sflag, size = 0x4, scoped, tag = 'scoped memory for tpu_custom_call.1']
    #allocation6 [shape = 'u8[196608]{0}', space=vmem, size = 0x30000, scoped, tag = 'input window, operand 1, single buffered']
    #allocation7 [shape = 's32[1]{0}', space=sflag, size = 0x4, scoped, tag = 'scoped memory for tpu_custom_call.1']
    #allocation8 [shape = 'u8[196608]{0}', space=vmem, size = 0x30000, scoped, tag = 'input window, operand 2, single buffered']
    #allocation9 [shape = 'u8[196608]{0}', space=vmem, size = 0x30000, scoped, tag = 'input window, operand 5, single buffered']
    #allocation10 [shape = 's32[1]{0}', space=sflag, size = 0x4, scoped, tag = 'scoped memory for tpu_custom_call.1']
    #allocation11 [shape = 'u8[196608]{0}', space=vmem, size = 0x30000, scoped, tag = 'input window, operand 6, single buffered']
    #allocation12 [shape = 'u8[65536]{0}', space=vmem, size = 0x10000, scoped, tag = 'input window, operand 9, single buffered']
    #allocation13 [shape = 's32[1]{0}', space=sflag, size = 0x4, scoped, tag = 'scoped memory for tpu_custom_call.1']
    #allocation14 [shape = 'u8[4096]{0}', space=vmem, size = 0x1000, scoped, tag = 'output window, operand 0, single buffered']
    %16 = vsyncpa [#allocation4], 0
    %17 = vsyncpa [#allocation7], 0
    %18 = vsyncpa [#allocation10], 0
    %19 = vsyncpa [#allocation13], 0
    %20 = vsyncpa [#allocation5], 0
    // Predicated region
    $region2: #{tpu_custom_call.1} parent=1 // pred_check
      _
    $region3: #{tpu_custom_call.1} parent=1 // pred_check_branch
      %22 = sbr.rel (0) target = $region5
    $region4: #{tpu_custom_call.1} parent=1 // pred_region
      %s24 = ssub.s32 1024, 1024
      %25 = vsyncadd [#allocation4], %s24
      %s26 = sshll.u32 [#allocation3], 4
      %s27 = int_to_ptr.vmem [resolvable:$true] %s26
      %32 = dma.hbm_to_vmem [thread:$0]  %s0, 1024, %s27, [#allocation4], 128, 128, 8
    $region5: #{tpu_custom_call.1} parent=1 // pred_fallthru
      _
    // Predicated region
    $region6: #{tpu_custom_call.1} parent=1 // pred_check
      _
    $region7: #{tpu_custom_call.1} parent=1 // pred_check_branch
      %34 = sbr.rel (0) target = $region9
    $region8: #{tpu_custom_call.1} parent=1 // pred_region
      %s36 = ssub.s32 6144, 6144
      %37 = vsyncadd [#allocation7], %s36
      %s38 = sshll.u32 [#allocation6], 4
      %s39 = int_to_ptr.vmem [resolvable:$true] %s38
      %44 = dma.hbm_to_vmem [thread:$0]  %s1, 6144, %s39, [#allocation7], 384, 384, 24
    $region9: #{tpu_custom_call.1} parent=1 // pred_fallthru
      _
    // Predicated region
    $region10: #{tpu_custom_call.1} parent=1 // pred_check
      _
    $region11: #{tpu_custom_call.1} parent=1 // pred_check_branch
      %46 = sbr.rel (0) target = $region13
    $region12: #{tpu_custom_call.1} parent=1 // pred_region
      %s48 = ssub.s32 6144, 6144
      %49 = vsyncadd [#allocation7], %s48
      %s50 = sshll.u32 [#allocation8], 4
      %s51 = int_to_ptr.vmem [resolvable:$true] %s50
      %56 = dma.hbm_to_vmem [thread:$0]  %s2, 6144, %s51, [#allocation7], 384, 384, 24
    $region13: #{tpu_custom_call.1} parent=1 // pred_fallthru
      _
    // Predicated region
    $region14: #{tpu_custom_call.1} parent=1 // pred_check
      _
    $region15: #{tpu_custom_call.1} parent=1 // pred_check_branch
      %58 = sbr.rel (0) target = $region17
    $region16: #{tpu_custom_call.1} parent=1 // pred_region
      _
    $region17: #{tpu_custom_call.1} parent=1 // pred_fallthru
      _
    // Predicated region
    $region18: #{tpu_custom_call.1} parent=1 // pred_check
      _
    $region19: #{tpu_custom_call.1} parent=1 // pred_check_branch
      %60 = sbr.rel (0) target = $region21
    $region20: #{tpu_custom_call.1} parent=1 // pred_region
      _
    $region21: #{tpu_custom_call.1} parent=1 // pred_fallthru
      _
    // Predicated region
    $region22: #{tpu_custom_call.1} parent=1 // pred_check
      _
    $region23: #{tpu_custom_call.1} parent=1 // pred_check_branch
      %62 = sbr.rel (0) target = $region25
    $region24: #{tpu_custom_call.1} parent=1 // pred_region
      %s64 = ssub.s32 6144, 6144
      %65 = vsyncadd [#allocation10], %s64
      %s66 = sshll.u32 [#allocation9], 4
      %s67 = int_to_ptr.vmem [resolvable:$true] %s66
      %72 = dma.hbm_to_vmem [thread:$0]  %s5, 6144, %s67, [#allocation10], 384, 384, 24
    $region25: #{tpu_custom_call.1} parent=1 // pred_fallthru
      _
    // Predicated region
    $region26: #{tpu_custom_call.1} parent=1 // pred_check
      _
    $region27: #{tpu_custom_call.1} parent=1 // pred_check_branch
      %74 = sbr.rel (0) target = $region29
    $region28: #{tpu_custom_call.1} parent=1 // pred_region
      %s76 = ssub.s32 6144, 6144
      %77 = vsyncadd [#allocation10], %s76
      %s78 = sshll.u32 [#allocation11], 4
      %s79 = int_to_ptr.vmem [resolvable:$true] %s78
      %84 = dma.hbm_to_vmem [thread:$0]  %s6, 6144, %s79, [#allocation10], 384, 384, 24
    $region29: #{tpu_custom_call.1} parent=1 // pred_fallthru
      _
    // Predicated region
    $region30: #{tpu_custom_call.1} parent=1 // pred_check
      _
    $region31: #{tpu_custom_call.1} parent=1 // pred_check_branch
      %86 = sbr.rel (0) target = $region33
    $region32: #{tpu_custom_call.1} parent=1 // pred_region
      _
    $region33: #{tpu_custom_call.1} parent=1 // pred_fallthru
      _
    // Predicated region
    $region34: #{tpu_custom_call.1} parent=1 // pred_check
      _
    $region35: #{tpu_custom_call.1} parent=1 // pred_check_branch
      %88 = sbr.rel (0) target = $region37
    $region36: #{tpu_custom_call.1} parent=1 // pred_region
      _
    $region37: #{tpu_custom_call.1} parent=1 // pred_fallthru
      _
    // Predicated region
    $region38: #{tpu_custom_call.1} parent=1 // pred_check
      _
    $region39: #{tpu_custom_call.1} parent=1 // pred_check_branch
      %90 = sbr.rel (0) target = $region41
    $region40: #{tpu_custom_call.1} parent=1 // pred_region
      %s92 = ssub.s32 2048, 2048
      %93 = vsyncadd [#allocation13], %s92
      %s94 = sshll.u32 [#allocation12], 4
      %s95 = int_to_ptr.vmem [resolvable:$true] %s94
      %100 = dma.hbm_to_vmem [thread:$0]  %s9, 2048, %s95, [#allocation13], 128, 128, 8
    $region41: #{tpu_custom_call.1} parent=1 // pred_fallthru
      _
    // Predicated region
    $region42: #{tpu_custom_call.1} parent=1 // pred_check
      _
    $region43: #{tpu_custom_call.1} parent=1 // pred_check_branch
      %102 = sbr.rel (0) target = $region45
    $region44: #{tpu_custom_call.1} parent=1 // pred_region
      _
    $region45: #{tpu_custom_call.1} parent=1 // pred_fallthru
      _
    // Predicated region
    $region46: #{tpu_custom_call.1} parent=1 // pred_check
      _
    $region47: #{tpu_custom_call.1} parent=1 // pred_check_branch
      %104 = sbr.rel (0) target = $region49
    $region48: #{tpu_custom_call.1} parent=1 // pred_region
      %105 = dma.done [#allocation4], 1024
    $region49: #{tpu_custom_call.1} parent=1 // pred_fallthru
      _
    // Predicated region
    $region50: #{tpu_custom_call.1} parent=1 // pred_check
      _
    $region51: #{tpu_custom_call.1} parent=1 // pred_check_branch
      %107 = sbr.rel (0) target = $region53
    $region52: #{tpu_custom_call.1} parent=1 // pred_region
      %108 = dma.done [#allocation7], 6144
    $region53: #{tpu_custom_call.1} parent=1 // pred_fallthru
      _
    // Predicated region
    $region54: #{tpu_custom_call.1} parent=1 // pred_check
      _
    $region55: #{tpu_custom_call.1} parent=1 // pred_check_branch
      %110 = sbr.rel (0) target = $region57
    $region56: #{tpu_custom_call.1} parent=1 // pred_region
      %111 = dma.done [#allocation7], 6144
    $region57: #{tpu_custom_call.1} parent=1 // pred_fallthru
      _
    // Predicated region
    $region58: #{tpu_custom_call.1} parent=1 // pred_check
      _
    $region59: #{tpu_custom_call.1} parent=1 // pred_check_branch
      %113 = sbr.rel (0) target = $region61
    $region60: #{tpu_custom_call.1} parent=1 // pred_region
      %114 = dma.done [#allocation10], 6144
    $region61: #{tpu_custom_call.1} parent=1 // pred_fallthru
      _
    // Predicated region
    $region62: #{tpu_custom_call.1} parent=1 // pred_check
      _
    $region63: #{tpu_custom_call.1} parent=1 // pred_check_branch
      %116 = sbr.rel (0) target = $region65
    $region64: #{tpu_custom_call.1} parent=1 // pred_region
      %117 = dma.done [#allocation10], 6144
    $region65: #{tpu_custom_call.1} parent=1 // pred_fallthru
      _
    // Predicated region
    $region66: #{tpu_custom_call.1} parent=1 // pred_check
      _
    $region67: #{tpu_custom_call.1} parent=1 // pred_check_branch
      %119 = sbr.rel (0) target = $region69
    $region68: #{tpu_custom_call.1} parent=1 // pred_region
      %120 = dma.done [#allocation13], 2048
    $region69: #{tpu_custom_call.1} parent=1 // pred_fallthru
      _
    %v121 = vld [vmem:[#allocation3] sm:$0xff]
    %v122 = vld [vmem:[#allocation3 + $0x8] sm:$0xff]
    %v123 = vld [vmem:[#allocation3 + $0x10] sm:$0xff]
    %v124 = vld [vmem:[#allocation3 + $0x18] sm:$0xff]
    %v125 = vld [vmem:[#allocation3 + $0x20] sm:$0xff]
    %v126 = vld [vmem:[#allocation3 + $0x28] sm:$0xff]
    %v127 = vld [vmem:[#allocation3 + $0x30] sm:$0xff]
    %v128 = vld [vmem:[#allocation3 + $0x38] sm:$0xff]
    %v129 = vld [vmem:[#allocation6] sm:$0xff]
    %v130 = vld [vmem:[#allocation6 + $0x8] sm:$0xff]
    %v131 = vld [vmem:[#allocation6 + $0x10] sm:$0xff]
    %v132 = vld [vmem:[#allocation6 + $0x18] sm:$0xff]
    %v133 = vld [vmem:[#allocation6 + $0x20] sm:$0xff]
    %v134 = vld [vmem:[#allocation6 + $0x28] sm:$0xff]
    %v135 = vld [vmem:[#allocation6 + $0x30] sm:$0xff]
    %v136 = vld [vmem:[#allocation6 + $0x38] sm:$0xff]
    %v137 = vld [vmem:[#allocation6 + $0x40] sm:$0xff]
    %v138 = vld [vmem:[#allocation6 + $0x48] sm:$0xff]
    %v139 = vld [vmem:[#allocation6 + $0x50] sm:$0xff]
    %v140 = vld [vmem:[#allocation6 + $0x58] sm:$0xff]
    %v141 = vld [vmem:[#allocation6 + $0x60] sm:$0xff]
    %v142 = vld [vmem:[#allocation6 + $0x68] sm:$0xff]
    %v143 = vld [vmem:[#allocation6 + $0x70] sm:$0xff]
    %v144 = vld [vmem:[#allocation6 + $0x78] sm:$0xff]
    %v145 = vld [vmem:[#allocation6 + $0x80] sm:$0xff]
    %v146 = vld [vmem:[#allocation6 + $0x88] sm:$0xff]
    %v147 = vld [vmem:[#allocation6 + $0x90] sm:$0xff]
    %v148 = vld [vmem:[#allocation6 + $0x98] sm:$0xff]
    %v149 = vld [vmem:[#allocation6 + $0xa0] sm:$0xff]
    %v150 = vld [vmem:[#allocation6 + $0xa8] sm:$0xff]
    %v151 = vld [vmem:[#allocation6 + $0xb0] sm:$0xff]
    %v152 = vld [vmem:[#allocation6 + $0xb8] sm:$0xff]
    %v153 = vld [vmem:[#allocation6 + $0xc0] sm:$0xff]
    %v154 = vld [vmem:[#allocation6 + $0xc8] sm:$0xff]
    %v155 = vld [vmem:[#allocation6 + $0xd0] sm:$0xff]
    %v156 = vld [vmem:[#allocation6 + $0xd8] sm:$0xff]
    %v157 = vld [vmem:[#allocation6 + $0xe0] sm:$0xff]
    %v158 = vld [vmem:[#allocation6 + $0xe8] sm:$0xff]
    %v159 = vld [vmem:[#allocation6 + $0xf0] sm:$0xff]
    %v160 = vld [vmem:[#allocation6 + $0xf8] sm:$0xff]
    %v161 = vld [vmem:[#allocation6 + $0x100] sm:$0xff]
    %v162 = vld [vmem:[#allocation6 + $0x108] sm:$0xff]
    %v163 = vld [vmem:[#allocation6 + $0x110] sm:$0xff]
    %v164 = vld [vmem:[#allocation6 + $0x118] sm:$0xff]
    %v165 = vld [vmem:[#allocation6 + $0x120] sm:$0xff]
    %v166 = vld [vmem:[#allocation6 + $0x128] sm:$0xff]
    %v167 = vld [vmem:[#allocation6 + $0x130] sm:$0xff]
    %v168 = vld [vmem:[#allocation6 + $0x138] sm:$0xff]
    %v169 = vld [vmem:[#allocation6 + $0x140] sm:$0xff]
    %v170 = vld [vmem:[#allocation6 + $0x148] sm:$0xff]
    %v171 = vld [vmem:[#allocation6 + $0x150] sm:$0xff]
    %v172 = vld [vmem:[#allocation6 + $0x158] sm:$0xff]
    %v173 = vld [vmem:[#allocation6 + $0x160] sm:$0xff]
    %v174 = vld [vmem:[#allocation6 + $0x168] sm:$0xff]
    %v175 = vld [vmem:[#allocation6 + $0x170] sm:$0xff]
    %v176 = vld [vmem:[#allocation6 + $0x178] sm:$0xff]
    %v177 = vld [vmem:[%s3] sm:$0x7]
    %v179 = vlaneseq
    %v180 = vshrl.u32 %v179, 7
    %v181 = vsub.s32 0, %v180
    %v182 = vrot.slane %v177, %v181
    %v183 = vlaneseq
    %v184 = vshrl.u32 %v183, 7
    %v185 = vsub.s32 1, %v184
    %v186 = vrot.slane %v177, %v185
    %v187 = vlaneseq
    %v188 = vshrl.u32 %v187, 7
    %v189 = vsub.s32 2, %v188
    %v190 = vrot.slane %v177, %v189
    %194 = vmatprep.subr.mxu0 %v130
    %195 = vmatpush1.msra.mxu0 %v129
    %196 = vmatprep.subr.mxu0 %v133
    %197 = vmatpush1.msra.mxu0 %v132
    %198 = vmatprep.subr.mxu0 %v136
    %199 = vmatpush1.msra.mxu0 %v135
    %200 = vmatprep.subr.mxu0 %v139
    %201 = vmatpush1.msra.mxu0 %v138
    %202 = vmatprep.subr.mxu0 %v142
    %203 = vmatpush1.msra.mxu0 %v141
    %204 = vmatprep.subr.mxu0 %v145
    %205 = vmatpush1.msra.mxu0 %v144
    %206 = vmatprep.subr.mxu0 %v148
    %207 = vmatpush1.msra.mxu0 %v147
    %208 = vmatprep.subr.mxu0 %v151
    %209 = vmatpush1.msra.mxu0 %v150
    %210 = vmatprep.subr.mxu0 %v154
    %211 = vmatpush1.msra.mxu0 %v153
    %212 = vmatprep.subr.mxu0 %v157
    %213 = vmatpush1.msra.mxu0 %v156
    %214 = vmatprep.subr.mxu0 %v160
    %215 = vmatpush1.msra.mxu0 %v159
    %216 = vmatprep.subr.mxu0 %v163
    %217 = vmatpush1.msra.mxu0 %v162
    %218 = vmatprep.subr.mxu0 %v166
    %219 = vmatpush1.msra.mxu0 %v165
    %220 = vmatprep.subr.mxu0 %v169
    %221 = vmatpush1.msra.mxu0 %v168
    %222 = vmatprep.subr.mxu0 %v172
    %223 = vmatpush1.msra.mxu0 %v171
    %224 = vmatprep.subr.mxu0 %v175
    %225 = vmatpush1.msra.mxu0 %v174
    %226 = vmatprep.subr.mxu0 0.0
    %227 = vmatpush1.msra.mxu0 0.0
    %228 = vmatprep.subr.mxu0 0.0
    %229 = vmatpush1.msra.mxu0 0.0
    %230 = vmatprep.subr.mxu0 0.0
    %231 = vmatpush1.msra.mxu0 0.0
    %232 = vmatprep.subr.mxu0 0.0
    %233 = vmatpush1.msra.mxu0 0.0
    %234 = vmatprep.subr.mxu0 0.0
    %235 = vmatpush1.msra.mxu0 0.0
    %236 = vmatprep.subr.mxu0 0.0
    %237 = vmatpush1.msra.mxu0 0.0
    %238 = vmatprep.subr.mxu0 0.0
    %239 = vmatpush1.msra.mxu0 0.0
    %240 = vmatprep.subr.mxu0 0.0
    %241 = vmatpush1.msra.mxu0 0.0
    %242 = vmatprep.subr.mxu0 0.0
    %243 = vmatpush1.msra.mxu0 0.0
    %244 = vmatprep.subr.mxu0 0.0
    %245 = vmatpush1.msra.mxu0 0.0
    %246 = vmatprep.subr.mxu0 0.0
    %247 = vmatpush1.msra.mxu0 0.0
    %248 = vmatprep.subr.mxu0 0.0
    %249 = vmatpush1.msra.mxu0 0.0
    %250 = vmatprep.subr.mxu0 0.0
    %251 = vmatpush1.msra.mxu0 0.0
    %252 = vmatprep.subr.mxu0 0.0
    %253 = vmatpush1.msra.mxu0 0.0
    %254 = vmatprep.subr.mxu0 0.0
    %255 = vmatpush1.msra.mxu0 0.0
    %256 = vmatprep.subr.mxu0 0.0
    %257 = vmatpush1.msra.mxu0 0.0
    %258 = vmatprep.mubr.f32.mxu0 0.0
    %259 = vmatmul.mubr.f32.gmra.mrb[0].mxu0 %v121
    %v260 = vpop.f32.mrb[0].mxu0
    %v261 = vadd.f32 %v182, %v260
    %v262 = vpop.f32.mrb[0].mxu0
    %v263 = vadd.f32 %v186, %v262
    %264 = vmatprep.mubr.f32.mxu0 0.0
    %265 = vmatmul.mubr.f32.gmra.mrb[0].mxu0 %v122
    %v266 = vpop.f32.mrb[0].mxu0
    %v267 = vadd.f32 %v182, %v266
    %v268 = vpop.f32.mrb[0].mxu0
    %v269 = vadd.f32 %v186, %v268
    %270 = vmatprep.mubr.f32.mxu0 0.0
    %271 = vmatmul.mubr.f32.gmra.mrb[0].mxu0 %v123
    %v272 = vpop.f32.mrb[0].mxu0
    %v273 = vadd.f32 %v182, %v272
    %v274 = vpop.f32.mrb[0].mxu0
    %v275 = vadd.f32 %v186, %v274
    %276 = vmatprep.mubr.f32.mxu0 0.0
    %277 = vmatmul.mubr.f32.gmra.mrb[0].mxu0 %v124
    %v278 = vpop.f32.mrb[0].mxu0
    %v279 = vadd.f32 %v182, %v278
    %v280 = vpop.f32.mrb[0].mxu0
    %v281 = vadd.f32 %v186, %v280
    %282 = vmatprep.mubr.f32.mxu0 0.0
    %283 = vmatmul.mubr.f32.gmra.mrb[0].mxu0 %v125
    %v284 = vpop.f32.mrb[0].mxu0
    %v285 = vadd.f32 %v182, %v284
    %v286 = vpop.f32.mrb[0].mxu0
    %v287 = vadd.f32 %v186, %v286
    %288 = vmatprep.mubr.f32.mxu0 0.0
    %289 = vmatmul.mubr.f32.gmra.mrb[0].mxu0 %v126
    %v290 = vpop.f32.mrb[0].mxu0
    %v291 = vadd.f32 %v182, %v290
    %v292 = vpop.f32.mrb[0].mxu0
    %v293 = vadd.f32 %v186, %v292
    %294 = vmatprep.mubr.f32.mxu0 0.0
    %295 = vmatmul.mubr.f32.gmra.mrb[0].mxu0 %v127
    %v296 = vpop.f32.mrb[0].mxu0
    %v297 = vadd.f32 %v182, %v296
    %v298 = vpop.f32.mrb[0].mxu0
    %v299 = vadd.f32 %v186, %v298
    %300 = vmatprep.mubr.f32.mxu0 0.0
    %301 = vmatmul.mubr.f32.gmra.mrb[0].mxu0 %v128
    %v302 = vpop.f32.mrb[0].mxu0
    %v303 = vadd.f32 %v182, %v302
    %v304 = vpop.f32.mrb[0].mxu0
    %v305 = vadd.f32 %v186, %v304
    %306 = vdwg.mxu0
    %307 = vmatprep.subr.mxu0 0.0
    %308 = vmatpush1.msra.mxu0 %v131
    %309 = vmatprep.subr.mxu0 0.0
    %310 = vmatpush1.msra.mxu0 %v134
    %311 = vmatprep.subr.mxu0 0.0
    %312 = vmatpush1.msra.mxu0 %v137
    %313 = vmatprep.subr.mxu0 0.0
    %314 = vmatpush1.msra.mxu0 %v140
    %315 = vmatprep.subr.mxu0 0.0
    %316 = vmatpush1.msra.mxu0 %v143
    %317 = vmatprep.subr.mxu0 0.0
    %318 = vmatpush1.msra.mxu0 %v146
    %319 = vmatprep.subr.mxu0 0.0
    %320 = vmatpush1.msra.mxu0 %v149
    %321 = vmatprep.subr.mxu0 0.0
    %322 = vmatpush1.msra.mxu0 %v152
    %323 = vmatprep.subr.mxu0 0.0
    %324 = vmatpush1.msra.mxu0 %v155
    %325 = vmatprep.subr.mxu0 0.0
    %326 = vmatpush1.msra.mxu0 %v158
    %327 = vmatprep.subr.mxu0 0.0
    %328 = vmatpush1.msra.mxu0 %v161
    %329 = vmatprep.subr.mxu0 0.0
    %330 = vmatpush1.msra.mxu0 %v164
    %331 = vmatprep.subr.mxu0 0.0
    %332 = vmatpush1.msra.mxu0 %v167
    %333 = vmatprep.subr.mxu0 0.0
    %334 = vmatpush1.msra.mxu0 %v170
    %335 = vmatprep.subr.mxu0 0.0
    %336 = vmatpush1.msra.mxu0 %v173
    %337 = vmatprep.subr.mxu0 0.0
    %338 = vmatpush1.msra.mxu0 %v176
    %339 = vmatprep.subr.mxu0 0.0
    %340 = vmatpush1.msra.mxu0 0.0
    %341 = vmatprep.subr.mxu0 0.0
    %342 = vmatpush1.msra.mxu0 0.0
    %343 = vmatprep.subr.mxu0 0.0
    %344 = vmatpush1.msra.mxu0 0.0
    %345 = vmatprep.subr.mxu0 0.0
    %346 = vmatpush1.msra.mxu0 0.0
    %347 = vmatprep.subr.mxu0 0.0
    %348 = vmatpush1.msra.mxu0 0.0
    %349 = vmatprep.subr.mxu0 0.0
    %350 = vmatpush1.msra.mxu0 0.0
    %351 = vmatprep.subr.mxu0 0.0
    %352 = vmatpush1.msra.mxu0 0.0
    %353 = vmatprep.subr.mxu0 0.0
    %354 = vmatpush1.msra.mxu0 0.0
    %355 = vmatprep.subr.mxu0 0.0
    %356 = vmatpush1.msra.mxu0 0.0
    %357 = vmatprep.subr.mxu0 0.0
    %358 = vmatpush1.msra.mxu0 0.0
    %359 = vmatprep.subr.mxu0 0.0
    %360 = vmatpush1.msra.mxu0 0.0
    %361 = vmatprep.subr.mxu0 0.0
    %362 = vmatpush1.msra.mxu0 0.0
    %363 = vmatprep.subr.mxu0 0.0
    %364 = vmatpush1.msra.mxu0 0.0
    %365 = vmatprep.subr.mxu0 0.0
    %366 = vmatpush1.msra.mxu0 0.0
    %367 = vmatprep.subr.mxu0 0.0
    %368 = vmatpush1.msra.mxu0 0.0
    %369 = vmatprep.subr.mxu0 0.0
    %370 = vmatpush1.msra.mxu0 0.0
    %371 = vmatprep.mubr.f32.mxu0 0.0
    %372 = vmatmul.mubr.f32.gmra.mrb[0].mxu0 %v121
    %v373 = vpop.f32.mrb[0].mxu0
    %v374 = vadd.f32 %v190, %v373
    %v375 = vpop.f32.mrb[0].mxu0
    %376 = vmatprep.mubr.f32.mxu0 0.0
    %377 = vmatmul.mubr.f32.gmra.mrb[0].mxu0 %v122
    %v378 = vpop.f32.mrb[0].mxu0
    %v379 = vadd.f32 %v190, %v378
    %v380 = vpop.f32.mrb[0].mxu0
    %381 = vmatprep.mubr.f32.mxu0 0.0
    %382 = vmatmul.mubr.f32.gmra.mrb[0].mxu0 %v123
    %v383 = vpop.f32.mrb[0].mxu0
    %v384 = vadd.f32 %v190, %v383
    %v385 = vpop.f32.mrb[0].mxu0
    %386 = vmatprep.mubr.f32.mxu0 0.0
    %387 = vmatmul.mubr.f32.gmra.mrb[0].mxu0 %v124
    %v388 = vpop.f32.mrb[0].mxu0
    %v389 = vadd.f32 %v190, %v388
    %v390 = vpop.f32.mrb[0].mxu0
    %391 = vmatprep.mubr.f32.mxu0 0.0
    %392 = vmatmul.mubr.f32.gmra.mrb[0].mxu0 %v125
    %v393 = vpop.f32.mrb[0].mxu0
    %v394 = vadd.f32 %v190, %v393
    %v395 = vpop.f32.mrb[0].mxu0
    %396 = vmatprep.mubr.f32.mxu0 0.0
    %397 = vmatmul.mubr.f32.gmra.mrb[0].mxu0 %v126
    %v398 = vpop.f32.mrb[0].mxu0
    %v399 = vadd.f32 %v190, %v398
    %v400 = vpop.f32.mrb[0].mxu0
    %401 = vmatprep.mubr.f32.mxu0 0.0
    %402 = vmatmul.mubr.f32.gmra.mrb[0].mxu0 %v127
    %v403 = vpop.f32.mrb[0].mxu0
    %v404 = vadd.f32 %v190, %v403
    %v405 = vpop.f32.mrb[0].mxu0
    %406 = vmatprep.mubr.f32.mxu0 0.0
    %407 = vmatmul.mubr.f32.gmra.mrb[0].mxu0 %v128
    %v408 = vpop.f32.mrb[0].mxu0
    %v409 = vadd.f32 %v190, %v408
    %v410 = vpop.f32.mrb[0].mxu0
    %411 = vdwg.mxu0
    %412 = vst [vmem:[#allocation2] sm:$0xff] %v261
    %413 = vst [vmem:[#allocation2 + $0x8] sm:$0xff] %v263
    %414 = vst [vmem:[#allocation2 + $0x10] sm:$0xff] %v374
    %415 = vst [vmem:[#allocation2 + $0x18] sm:$0xff] %v267
    %416 = vst [vmem:[#allocation2 + $0x20] sm:$0xff] %v269
    %417 = vst [vmem:[#allocation2 + $0x28] sm:$0xff] %v379
    %418 = vst [vmem:[#allocation2 + $0x30] sm:$0xff] %v273
    %419 = vst [vmem:[#allocation2 + $0x38] sm:$0xff] %v275
    %420 = vst [vmem:[#allocation2 + $0x40] sm:$0xff] %v384
    %421 = vst [vmem:[#allocation2 + $0x48] sm:$0xff] %v279
    %422 = vst [vmem:[#allocation2 + $0x50] sm:$0xff] %v281
    %423 = vst [vmem:[#allocation2 + $0x58] sm:$0xff] %v389
    %424 = vst [vmem:[#allocation2 + $0x60] sm:$0xff] %v285
    %425 = vst [vmem:[#allocation2 + $0x68] sm:$0xff] %v287
    %426 = vst [vmem:[#allocation2 + $0x70] sm:$0xff] %v394
    %427 = vst [vmem:[#allocation2 + $0x78] sm:$0xff] %v291
    %428 = vst [vmem:[#allocation2 + $0x80] sm:$0xff] %v293
    %429 = vst [vmem:[#allocation2 + $0x88] sm:$0xff] %v399
    %430 = vst [vmem:[#allocation2 + $0x90] sm:$0xff] %v297
    %431 = vst [vmem:[#allocation2 + $0x98] sm:$0xff] %v299
    %432 = vst [vmem:[#allocation2 + $0xa0] sm:$0xff] %v404
    %433 = vst [vmem:[#allocation2 + $0xa8] sm:$0xff] %v303
    %434 = vst [vmem:[#allocation2 + $0xb0] sm:$0xff] %v305
    %435 = vst [vmem:[#allocation2 + $0xb8] sm:$0xff] %v409
    %v436 = vld [vmem:[#allocation8] sm:$0xff]
    %v437 = vld [vmem:[#allocation8 + $0x8] sm:$0xff]
    %v438 = vld [vmem:[#allocation8 + $0x10] sm:$0xff]
    %v439 = vld [vmem:[#allocation8 + $0x18] sm:$0xff]
    %v440 = vld [vmem:[#allocation8 + $0x20] sm:$0xff]
    %v441 = vld [vmem:[#allocation8 + $0x28] sm:$0xff]
    %v442 = vld [vmem:[#allocation8 + $0x30] sm:$0xff]
    %v443 = vld [vmem:[#allocation8 + $0x38] sm:$0xff]
    %v444 = vld [vmem:[#allocation8 + $0x40] sm:$0xff]
    %v445 = vld [vmem:[#allocation8 + $0x48] sm:$0xff]
    %v446 = vld [vmem:[#allocation8 + $0x50] sm:$0xff]
    %v447 = vld [vmem:[#allocation8 + $0x58] sm:$0xff]
    %v448 = vld [vmem:[#allocation8 + $0x60] sm:$0xff]
    %v449 = vld [vmem:[#allocation8 + $0x68] sm:$0xff]
    %v450 = vld [vmem:[#allocation8 + $0x70] sm:$0xff]
    %v451 = vld [vmem:[#allocation8 + $0x78] sm:$0xff]
    %v452 = vld [vmem:[#allocation8 + $0x80] sm:$0xff]
    %v453 = vld [vmem:[#allocation8 + $0x88] sm:$0xff]
    %v454 = vld [vmem:[#allocation8 + $0x90] sm:$0xff]
    %v455 = vld [vmem:[#allocation8 + $0x98] sm:$0xff]
    %v456 = vld [vmem:[#allocation8 + $0xa0] sm:$0xff]
    %v457 = vld [vmem:[#allocation8 + $0xa8] sm:$0xff]
    %v458 = vld [vmem:[#allocation8 + $0xb0] sm:$0xff]
    %v459 = vld [vmem:[#allocation8 + $0xb8] sm:$0xff]
    %v460 = vld [vmem:[#allocation8 + $0xc0] sm:$0xff]
    %v461 = vld [vmem:[#allocation8 + $0xc8] sm:$0xff]
    %v462 = vld [vmem:[#allocation8 + $0xd0] sm:$0xff]
    %v463 = vld [vmem:[#allocation8 + $0xd8] sm:$0xff]
    %v464 = vld [vmem:[#allocation8 + $0xe0] sm:$0xff]
    %v465 = vld [vmem:[#allocation8 + $0xe8] sm:$0xff]
    %v466 = vld [vmem:[#allocation8 + $0xf0] sm:$0xff]
    %v467 = vld [vmem:[#allocation8 + $0xf8] sm:$0xff]
    %v468 = vld [vmem:[#allocation8 + $0x100] sm:$0xff]
    %v469 = vld [vmem:[#allocation8 + $0x108] sm:$0xff]
    %v470 = vld [vmem:[#allocation8 + $0x110] sm:$0xff]
    %v471 = vld [vmem:[#allocation8 + $0x118] sm:$0xff]
    %v472 = vld [vmem:[#allocation8 + $0x120] sm:$0xff]
    %v473 = vld [vmem:[#allocation8 + $0x128] sm:$0xff]
    %v474 = vld [vmem:[#allocation8 + $0x130] sm:$0xff]
    %v475 = vld [vmem:[#allocation8 + $0x138] sm:$0xff]
    %v476 = vld [vmem:[#allocation8 + $0x140] sm:$0xff]
    %v477 = vld [vmem:[#allocation8 + $0x148] sm:$0xff]
    %v478 = vld [vmem:[#allocation8 + $0x150] sm:$0xff]
    %v479 = vld [vmem:[#allocation8 + $0x158] sm:$0xff]
    %v480 = vld [vmem:[#allocation8 + $0x160] sm:$0xff]
    %v481 = vld [vmem:[#allocation8 + $0x168] sm:$0xff]
    %v482 = vld [vmem:[#allocation8 + $0x170] sm:$0xff]
    %v483 = vld [vmem:[#allocation8 + $0x178] sm:$0xff]
    %v484 = vld [vmem:[#allocation9] sm:$0xff]
    %v485 = vld [vmem:[#allocation9 + $0x8] sm:$0xff]
    %v486 = vld [vmem:[#allocation9 + $0x10] sm:$0xff]
    %v487 = vld [vmem:[#allocation9 + $0x18] sm:$0xff]
    %v488 = vld [vmem:[#allocation9 + $0x20] sm:$0xff]
    %v489 = vld [vmem:[#allocation9 + $0x28] sm:$0xff]
    %v490 = vld [vmem:[#allocation9 + $0x30] sm:$0xff]
    %v491 = vld [vmem:[#allocation9 + $0x38] sm:$0xff]
    %v492 = vld [vmem:[#allocation9 + $0x40] sm:$0xff]
    %v493 = vld [vmem:[#allocation9 + $0x48] sm:$0xff]
    %v494 = vld [vmem:[#allocation9 + $0x50] sm:$0xff]
    %v495 = vld [vmem:[#allocation9 + $0x58] sm:$0xff]
    %v496 = vld [vmem:[#allocation9 + $0x60] sm:$0xff]
    %v497 = vld [vmem:[#allocation9 + $0x68] sm:$0xff]
    %v498 = vld [vmem:[#allocation9 + $0x70] sm:$0xff]
    %v499 = vld [vmem:[#allocation9 + $0x78] sm:$0xff]
    %v500 = vld [vmem:[#allocation9 + $0x80] sm:$0xff]
    %v501 = vld [vmem:[#allocation9 + $0x88] sm:$0xff]
    %v502 = vld [vmem:[#allocation9 + $0x90] sm:$0xff]
    %v503 = vld [vmem:[#allocation9 + $0x98] sm:$0xff]
    %v504 = vld [vmem:[#allocation9 + $0xa0] sm:$0xff]
    %v505 = vld [vmem:[#allocation9 + $0xa8] sm:$0xff]
    %v506 = vld [vmem:[#allocation9 + $0xb0] sm:$0xff]
    %v507 = vld [vmem:[#allocation9 + $0xb8] sm:$0xff]
    %v508 = vld [vmem:[#allocation9 + $0xc0] sm:$0xff]
    %v509 = vld [vmem:[#allocation9 + $0xc8] sm:$0xff]
    %v510 = vld [vmem:[#allocation9 + $0xd0] sm:$0xff]
    %v511 = vld [vmem:[#allocation9 + $0xd8] sm:$0xff]
    %v512 = vld [vmem:[#allocation9 + $0xe0] sm:$0xff]
    %v513 = vld [vmem:[#allocation9 + $0xe8] sm:$0xff]
    %v514 = vld [vmem:[#allocation9 + $0xf0] sm:$0xff]
    %v515 = vld [vmem:[#allocation9 + $0xf8] sm:$0xff]
    %v516 = vld [vmem:[#allocation9 + $0x100] sm:$0xff]
    %v517 = vld [vmem:[#allocation9 + $0x108] sm:$0xff]
    %v518 = vld [vmem:[#allocation9 + $0x110] sm:$0xff]
    %v519 = vld [vmem:[#allocation9 + $0x118] sm:$0xff]
    %v520 = vld [vmem:[#allocation9 + $0x120] sm:$0xff]
    %v521 = vld [vmem:[#allocation9 + $0x128] sm:$0xff]
    %v522 = vld [vmem:[#allocation9 + $0x130] sm:$0xff]
    %v523 = vld [vmem:[#allocation9 + $0x138] sm:$0xff]
    %v524 = vld [vmem:[#allocation9 + $0x140] sm:$0xff]
    %v525 = vld [vmem:[#allocation9 + $0x148] sm:$0xff]
    %v526 = vld [vmem:[#allocation9 + $0x150] sm:$0xff]
    %v527 = vld [vmem:[#allocation9 + $0x158] sm:$0xff]
    %v528 = vld [vmem:[#allocation9 + $0x160] sm:$0xff]
    %v529 = vld [vmem:[#allocation9 + $0x168] sm:$0xff]
    %v530 = vld [vmem:[#allocation9 + $0x170] sm:$0xff]
    %v531 = vld [vmem:[#allocation9 + $0x178] sm:$0xff]
    %v532 = vld [vmem:[#allocation11] sm:$0xff]
    %v533 = vld [vmem:[#allocation11 + $0x8] sm:$0xff]
    %v534 = vld [vmem:[#allocation11 + $0x10] sm:$0xff]
    %v535 = vld [vmem:[#allocation11 + $0x18] sm:$0xff]
    %v536 = vld [vmem:[#allocation11 + $0x20] sm:$0xff]
    %v537 = vld [vmem:[#allocation11 + $0x28] sm:$0xff]
    %v538 = vld [vmem:[#allocation11 + $0x30] sm:$0xff]
    %v539 = vld [vmem:[#allocation11 + $0x38] sm:$0xff]
    %v540 = vld [vmem:[#allocation11 + $0x40] sm:$0xff]
    %v541 = vld [vmem:[#allocation11 + $0x48] sm:$0xff]
    %v542 = vld [vmem:[#allocation11 + $0x50] sm:$0xff]
    %v543 = vld [vmem:[#allocation11 + $0x58] sm:$0xff]
    %v544 = vld [vmem:[#allocation11 + $0x60] sm:$0xff]
    %v545 = vld [vmem:[#allocation11 + $0x68] sm:$0xff]
    %v546 = vld [vmem:[#allocation11 + $0x70] sm:$0xff]
    %v547 = vld [vmem:[#allocation11 + $0x78] sm:$0xff]
    %v548 = vld [vmem:[#allocation11 + $0x80] sm:$0xff]
    %v549 = vld [vmem:[#allocation11 + $0x88] sm:$0xff]
    %v550 = vld [vmem:[#allocation11 + $0x90] sm:$0xff]
    %v551 = vld [vmem:[#allocation11 + $0x98] sm:$0xff]
    %v552 = vld [vmem:[#allocation11 + $0xa0] sm:$0xff]
    %v553 = vld [vmem:[#allocation11 + $0xa8] sm:$0xff]
    %v554 = vld [vmem:[#allocation11 + $0xb0] sm:$0xff]
    %v555 = vld [vmem:[#allocation11 + $0xb8] sm:$0xff]
    %v556 = vld [vmem:[#allocation11 + $0xc0] sm:$0xff]
    %v557 = vld [vmem:[#allocation11 + $0xc8] sm:$0xff]
    %v558 = vld [vmem:[#allocation11 + $0xd0] sm:$0xff]
    %v559 = vld [vmem:[#allocation11 + $0xd8] sm:$0xff]
    %v560 = vld [vmem:[#allocation11 + $0xe0] sm:$0xff]
    %v561 = vld [vmem:[#allocation11 + $0xe8] sm:$0xff]
    %v562 = vld [vmem:[#allocation11 + $0xf0] sm:$0xff]
    %v563 = vld [vmem:[#allocation11 + $0xf8] sm:$0xff]
    %v564 = vld [vmem:[#allocation11 + $0x100] sm:$0xff]
    %v565 = vld [vmem:[#allocation11 + $0x108] sm:$0xff]
    %v566 = vld [vmem:[#allocation11 + $0x110] sm:$0xff]
    %v567 = vld [vmem:[#allocation11 + $0x118] sm:$0xff]
    %v568 = vld [vmem:[#allocation11 + $0x120] sm:$0xff]
    %v569 = vld [vmem:[#allocation11 + $0x128] sm:$0xff]
    %v570 = vld [vmem:[#allocation11 + $0x130] sm:$0xff]
    %v571 = vld [vmem:[#allocation11 + $0x138] sm:$0xff]
    %v572 = vld [vmem:[#allocation11 + $0x140] sm:$0xff]
    %v573 = vld [vmem:[#allocation11 + $0x148] sm:$0xff]
    %v574 = vld [vmem:[#allocation11 + $0x150] sm:$0xff]
    %v575 = vld [vmem:[#allocation11 + $0x158] sm:$0xff]
    %v576 = vld [vmem:[#allocation11 + $0x160] sm:$0xff]
    %v577 = vld [vmem:[#allocation11 + $0x168] sm:$0xff]
    %v578 = vld [vmem:[#allocation11 + $0x170] sm:$0xff]
    %v579 = vld [vmem:[#allocation11 + $0x178] sm:$0xff]
    %v580 = vld [vmem:[%s4] sm:$0x7]
    %v582 = vlaneseq
    %v583 = vshrl.u32 %v582, 7
    %v584 = vsub.s32 0, %v583
    %v585 = vrot.slane %v580, %v584
    %v586 = vlaneseq
    %v587 = vshrl.u32 %v586, 7
    %v588 = vsub.s32 1, %v587
    %v589 = vrot.slane %v580, %v588
    %v590 = vlaneseq
    %v591 = vshrl.u32 %v590, 7
    %v592 = vsub.s32 2, %v591
    %v593 = vrot.slane %v580, %v592
    %v597 = vld [vmem:[%s7] sm:$0x7]
    %v599 = vlaneseq
    %v600 = vshrl.u32 %v599, 7
    %v601 = vsub.s32 0, %v600
    %v602 = vrot.slane %v597, %v601
    %v603 = vlaneseq
    %v604 = vshrl.u32 %v603, 7
    %v605 = vsub.s32 1, %v604
    %v606 = vrot.slane %v597, %v605
    %v607 = vlaneseq
    %v608 = vshrl.u32 %v607, 7
    %v609 = vsub.s32 2, %v608
    %v610 = vrot.slane %v597, %v609
    %v614 = vld [vmem:[%s8] sm:$0x7]
    %v616 = vlaneseq
    %v617 = vshrl.u32 %v616, 7
    %v618 = vsub.s32 0, %v617
    %v619 = vrot.slane %v614, %v618
    %v620 = vlaneseq
    %v621 = vshrl.u32 %v620, 7
    %v622 = vsub.s32 1, %v621
    %v623 = vrot.slane %v614, %v622
    %v624 = vlaneseq
    %v625 = vshrl.u32 %v624, 7
    %v626 = vsub.s32 2, %v625
    %v627 = vrot.slane %v614, %v626
    %s631 = smul.u32 0, 3
    %s632 = smul.addr %s631, 8
    %s633 = scalar_lea.vmem [#allocation2], %s632
    %v634 = vld [vmem:[%s633] sm:$0xff]
    %v635 = vld [vmem:[%s633 + $0x8] sm:$0xff]
    %v636 = vld [vmem:[%s633 + $0x10] sm:$0xff]
    %637 = vmatprep.subr.mxu0 %v437
    %638 = vmatpush1.msra.mxu0 %v436
    %639 = vmatprep.subr.mxu0 %v440
    %640 = vmatpush1.msra.mxu0 %v439
    %641 = vmatprep.subr.mxu0 %v443
    %642 = vmatpush1.msra.mxu0 %v442
    %643 = vmatprep.subr.mxu0 %v446
    %644 = vmatpush1.msra.mxu0 %v445
    %645 = vmatprep.subr.mxu0 %v449
    %646 = vmatpush1.msra.mxu0 %v448
    %647 = vmatprep.subr.mxu0 %v452
    %648 = vmatpush1.msra.mxu0 %v451
    %649 = vmatprep.subr.mxu0 %v455
    %650 = vmatpush1.msra.mxu0 %v454
    %651 = vmatprep.subr.mxu0 %v458
    %652 = vmatpush1.msra.mxu0 %v457
    %653 = vmatprep.subr.mxu0 %v461
    %654 = vmatpush1.msra.mxu0 %v460
    %655 = vmatprep.subr.mxu0 %v464
    %656 = vmatpush1.msra.mxu0 %v463
    %657 = vmatprep.subr.mxu0 %v467
    %658 = vmatpush1.msra.mxu0 %v466
    %659 = vmatprep.subr.mxu0 %v470
    %660 = vmatpush1.msra.mxu0 %v469
    %661 = vmatprep.subr.mxu0 %v473
    %662 = vmatpush1.msra.mxu0 %v472
    %663 = vmatprep.subr.mxu0 %v476
    %664 = vmatpush1.msra.mxu0 %v475
    %665 = vmatprep.subr.mxu0 %v479
    %666 = vmatpush1.msra.mxu0 %v478
    %667 = vmatprep.subr.mxu0 %v482
    %668 = vmatpush1.msra.mxu0 %v481
    %669 = vmatprep.subr.mxu0 0.0
    %670 = vmatpush1.msra.mxu0 0.0
    %671 = vmatprep.subr.mxu0 0.0
    %672 = vmatpush1.msra.mxu0 0.0
    %673 = vmatprep.subr.mxu0 0.0
    %674 = vmatpush1.msra.mxu0 0.0
    %675 = vmatprep.subr.mxu0 0.0
    %676 = vmatpush1.msra.mxu0 0.0
    %677 = vmatprep.subr.mxu0 0.0
    %678 = vmatpush1.msra.mxu0 0.0
    %679 = vmatprep.subr.mxu0 0.0
    %680 = vmatpush1.msra.mxu0 0.0
    %681 = vmatprep.subr.mxu0 0.0
    %682 = vmatpush1.msra.mxu0 0.0
    %683 = vmatprep.subr.mxu0 0.0
    %684 = vmatpush1.msra.mxu0 0.0
    %685 = vmatprep.subr.mxu0 0.0
    %686 = vmatpush1.msra.mxu0 0.0
    %687 = vmatprep.subr.mxu0 0.0
    %688 = vmatpush1.msra.mxu0 0.0
    %689 = vmatprep.subr.mxu0 0.0
    %690 = vmatpush1.msra.mxu0 0.0
    %691 = vmatprep.subr.mxu0 0.0
    %692 = vmatpush1.msra.mxu0 0.0
    %693 = vmatprep.subr.mxu0 0.0
    %694 = vmatpush1.msra.mxu0 0.0
    %695 = vmatprep.subr.mxu0 0.0
    %696 = vmatpush1.msra.mxu0 0.0
    %697 = vmatprep.subr.mxu0 0.0
    %698 = vmatpush1.msra.mxu0 0.0
    %699 = vmatprep.subr.mxu0 0.0
    %700 = vmatpush1.msra.mxu0 0.0
    %701 = vmatprep.mubr.f32.mxu0 0.0
    %702 = vmatmul.mubr.f32.gmra.mrb[0].mxu0 0.0
    %v703 = vpop.f32.mrb[0].mxu0
    %v704 = vadd.f32 %v585, %v703
    %v705 = vpop.f32.mrb[0].mxu0
    %v706 = vadd.f32 %v589, %v705
    %707 = vdwg.mxu0
    %708 = vmatprep.subr.mxu0 0.0
    %709 = vmatpush1.msra.mxu0 %v438
    %710 = vmatprep.subr.mxu0 0.0
    %711 = vmatpush1.msra.mxu0 %v441
    %712 = vmatprep.subr.mxu0 0.0
    %713 = vmatpush1.msra.mxu0 %v444
    %714 = vmatprep.subr.mxu0 0.0
    %715 = vmatpush1.msra.mxu0 %v447
    %716 = vmatprep.subr.mxu0 0.0
    %717 = vmatpush1.msra.mxu0 %v450
    %718 = vmatprep.subr.mxu0 0.0
    %719 = vmatpush1.msra.mxu0 %v453
    %720 = vmatprep.subr.mxu0 0.0
    %721 = vmatpush1.msra.mxu0 %v456
    %722 = vmatprep.subr.mxu0 0.0
    %723 = vmatpush1.msra.mxu0 %v459
    %724 = vmatprep.subr.mxu0 0.0
    %725 = vmatpush1.msra.mxu0 %v462
    %726 = vmatprep.subr.mxu0 0.0
    %727 = vmatpush1.msra.mxu0 %v465
    %728 = vmatprep.subr.mxu0 0.0
    %729 = vmatpush1.msra.mxu0 %v468
    %730 = vmatprep.subr.mxu0 0.0
    %731 = vmatpush1.msra.mxu0 %v471
    %732 = vmatprep.subr.mxu0 0.0
    %733 = vmatpush1.msra.mxu0 %v474
    %734 = vmatprep.subr.mxu0 0.0
    %735 = vmatpush1.msra.mxu0 %v477
    %736 = vmatprep.subr.mxu0 0.0
    %737 = vmatpush1.msra.mxu0 %v480
    %738 = vmatprep.subr.mxu0 0.0
    %739 = vmatpush1.msra.mxu0 %v483
    %740 = vmatprep.subr.mxu0 0.0
    %741 = vmatpush1.msra.mxu0 0.0
    %742 = vmatprep.subr.mxu0 0.0
    %743 = vmatpush1.msra.mxu0 0.0
    %744 = vmatprep.subr.mxu0 0.0
    %745 = vmatpush1.msra.mxu0 0.0
    %746 = vmatprep.subr.mxu0 0.0
    %747 = vmatpush1.msra.mxu0 0.0
    %748 = vmatprep.subr.mxu0 0.0
    %749 = vmatpush1.msra.mxu0 0.0
    %750 = vmatprep.subr.mxu0 0.0
    %751 = vmatpush1.msra.mxu0 0.0
    %752 = vmatprep.subr.mxu0 0.0
    %753 = vmatpush1.msra.mxu0 0.0
    %754 = vmatprep.subr.mxu0 0.0
    %755 = vmatpush1.msra.mxu0 0.0
    %756 = vmatprep.subr.mxu0 0.0
    %757 = vmatpush1.msra.mxu0 0.0
    %758 = vmatprep.subr.mxu0 0.0
    %759 = vmatpush1.msra.mxu0 0.0
    %760 = vmatprep.subr.mxu0 0.0
    %761 = vmatpush1.msra.mxu0 0.0
    %762 = vmatprep.subr.mxu0 0.0
    %763 = vmatpush1.msra.mxu0 0.0
    %764 = vmatprep.subr.mxu0 0.0
    %765 = vmatpush1.msra.mxu0 0.0
    %766 = vmatprep.subr.mxu0 0.0
    %767 = vmatpush1.msra.mxu0 0.0
    %768 = vmatprep.subr.mxu0 0.0
    %769 = vmatpush1.msra.mxu0 0.0
    %770 = vmatprep.subr.mxu0 0.0
    %771 = vmatpush1.msra.mxu0 0.0
    %772 = vmatprep.mubr.f32.mxu0 0.0
    %773 = vmatmul.mubr.f32.gmra.mrb[0].mxu0 0.0
    %v774 = vpop.f32.mrb[0].mxu0
    %v775 = vadd.f32 %v593, %v774
    %v776 = vpop.f32.mrb[0].mxu0
    %777 = vdwg.mxu0
    %v778 = vadd.f32 %v634, %v704
    %v779 = vxor.u32 %v778, 2147483648
    %v780 = vmul.f32 %v779, 1.442695
    %v781 = vpow.pop %v780
    %v782 = vadd.f32 %v781, 1.0
    %v783 = vrcp.pop %v782
    %v784 = vmul.f32 1.0, %v783
    %v785 = vadd.f32 %v635, %v706
    %v786 = vxor.u32 %v785, 2147483648
    %v787 = vmul.f32 %v786, 1.442695
    %v788 = vpow.pop %v787
    %v789 = vadd.f32 %v788, 1.0
    %v790 = vrcp.pop %v789
    %v791 = vmul.f32 1.0, %v790
    %v792 = vmul.f32 %v784, %v775
    %v793 = vadd.f32 %v636, %v792
    %v794 = vtanh.pop %v793
    %v795 = vsub.f32 1.0, %v791
    %v796 = vmul.f32 %v795, %v794
    %v797 = vmul.f32 %v791, 0.0
    %v798 = vadd.f32 %v796, %v797
    %799 = vmatprep.subr.mxu0 %v485
    %800 = vmatpush1.msra.mxu0 %v484
    %801 = vmatprep.subr.mxu0 %v488
    %802 = vmatpush1.msra.mxu0 %v487
    %803 = vmatprep.subr.mxu0 %v491
    %804 = vmatpush1.msra.mxu0 %v490
    %805 = vmatprep.subr.mxu0 %v494
    %806 = vmatpush1.msra.mxu0 %v493
    %807 = vmatprep.subr.mxu0 %v497
    %808 = vmatpush1.msra.mxu0 %v496
    %809 = vmatprep.subr.mxu0 %v500
    %810 = vmatpush1.msra.mxu0 %v499
    %811 = vmatprep.subr.mxu0 %v503
    %812 = vmatpush1.msra.mxu0 %v502
    %813 = vmatprep.subr.mxu0 %v506
    %814 = vmatpush1.msra.mxu0 %v505
    %815 = vmatprep.subr.mxu0 %v509
    %816 = vmatpush1.msra.mxu0 %v508
    %817 = vmatprep.subr.mxu0 %v512
    %818 = vmatpush1.msra.mxu0 %v511
    %819 = vmatprep.subr.mxu0 %v515
    %820 = vmatpush1.msra.mxu0 %v514
    %821 = vmatprep.subr.mxu0 %v518
    %822 = vmatpush1.msra.mxu0 %v517
    %823 = vmatprep.subr.mxu0 %v521
    %824 = vmatpush1.msra.mxu0 %v520
    %825 = vmatprep.subr.mxu0 %v524
    %826 = vmatpush1.msra.mxu0 %v523
    %827 = vmatprep.subr.mxu0 %v527
    %828 = vmatpush1.msra.mxu0 %v526
    %829 = vmatprep.subr.mxu0 %v530
    %830 = vmatpush1.msra.mxu0 %v529
    %831 = vmatprep.subr.mxu0 0.0
    %832 = vmatpush1.msra.mxu0 0.0
    %833 = vmatprep.subr.mxu0 0.0
    %834 = vmatpush1.msra.mxu0 0.0
    %835 = vmatprep.subr.mxu0 0.0
    %836 = vmatpush1.msra.mxu0 0.0
    %837 = vmatprep.subr.mxu0 0.0
    %838 = vmatpush1.msra.mxu0 0.0
    %839 = vmatprep.subr.mxu0 0.0
    %840 = vmatpush1.msra.mxu0 0.0
    %841 = vmatprep.subr.mxu0 0.0
    %842 = vmatpush1.msra.mxu0 0.0
    %843 = vmatprep.subr.mxu0 0.0
    %844 = vmatpush1.msra.mxu0 0.0
    %845 = vmatprep.subr.mxu0 0.0
    %846 = vmatpush1.msra.mxu0 0.0
    %847 = vmatprep.subr.mxu0 0.0
    %848 = vmatpush1.msra.mxu0 0.0
    %849 = vmatprep.subr.mxu0 0.0
    %850 = vmatpush1.msra.mxu0 0.0
    %851 = vmatprep.subr.mxu0 0.0
    %852 = vmatpush1.msra.mxu0 0.0
    %853 = vmatprep.subr.mxu0 0.0
    %854 = vmatpush1.msra.mxu0 0.0
    %855 = vmatprep.subr.mxu0 0.0
    %856 = vmatpush1.msra.mxu0 0.0
    %857 = vmatprep.subr.mxu0 0.0
    %858 = vmatpush1.msra.mxu0 0.0
    %859 = vmatprep.subr.mxu0 0.0
    %860 = vmatpush1.msra.mxu0 0.0
    %861 = vmatprep.subr.mxu0 0.0
    %862 = vmatpush1.msra.mxu0 0.0
    %863 = vmatprep.mubr.f32.mxu0 0.0
    %864 = vmatmul.mubr.f32.gmra.mrb[0].mxu0 %v798
    %v865 = vpop.f32.mrb[0].mxu0
    %v866 = vadd.f32 %v602, %v865
    %v867 = vpop.f32.mrb[0].mxu0
    %v868 = vadd.f32 %v606, %v867
    %869 = vdwg.mxu0
    %870 = vmatprep.subr.mxu0 0.0
    %871 = vmatpush1.msra.mxu0 %v486
    %872 = vmatprep.subr.mxu0 0.0
    %873 = vmatpush1.msra.mxu0 %v489
    %874 = vmatprep.subr.mxu0 0.0
    %875 = vmatpush1.msra.mxu0 %v492
    %876 = vmatprep.subr.mxu0 0.0
    %877 = vmatpush1.msra.mxu0 %v495
    %878 = vmatprep.subr.mxu0 0.0
    %879 = vmatpush1.msra.mxu0 %v498
    %880 = vmatprep.subr.mxu0 0.0
    %881 = vmatpush1.msra.mxu0 %v501
    %882 = vmatprep.subr.mxu0 0.0
    %883 = vmatpush1.msra.mxu0 %v504
    %884 = vmatprep.subr.mxu0 0.0
    %885 = vmatpush1.msra.mxu0 %v507
    %886 = vmatprep.subr.mxu0 0.0
    %887 = vmatpush1.msra.mxu0 %v510
    %888 = vmatprep.subr.mxu0 0.0
    %889 = vmatpush1.msra.mxu0 %v513
    %890 = vmatprep.subr.mxu0 0.0
    %891 = vmatpush1.msra.mxu0 %v516
    %892 = vmatprep.subr.mxu0 0.0
    %893 = vmatpush1.msra.mxu0 %v519
    %894 = vmatprep.subr.mxu0 0.0
    %895 = vmatpush1.msra.mxu0 %v522
    %896 = vmatprep.subr.mxu0 0.0
    %897 = vmatpush1.msra.mxu0 %v525
    %898 = vmatprep.subr.mxu0 0.0
    %899 = vmatpush1.msra.mxu0 %v528
    %900 = vmatprep.subr.mxu0 0.0
    %901 = vmatpush1.msra.mxu0 %v531
    %902 = vmatprep.subr.mxu0 0.0
    %903 = vmatpush1.msra.mxu0 0.0
    %904 = vmatprep.subr.mxu0 0.0
    %905 = vmatpush1.msra.mxu0 0.0
    %906 = vmatprep.subr.mxu0 0.0
    %907 = vmatpush1.msra.mxu0 0.0
    %908 = vmatprep.subr.mxu0 0.0
    %909 = vmatpush1.msra.mxu0 0.0
    %910 = vmatprep.subr.mxu0 0.0
    %911 = vmatpush1.msra.mxu0 0.0
    %912 = vmatprep.subr.mxu0 0.0
    %913 = vmatpush1.msra.mxu0 0.0
    %914 = vmatprep.subr.mxu0 0.0
    %915 = vmatpush1.msra.mxu0 0.0
    %916 = vmatprep.subr.mxu0 0.0
    %917 = vmatpush1.msra.mxu0 0.0
    %918 = vmatprep.subr.mxu0 0.0
    %919 = vmatpush1.msra.mxu0 0.0
    %920 = vmatprep.subr.mxu0 0.0
    %921 = vmatpush1.msra.mxu0 0.0
    %922 = vmatprep.subr.mxu0 0.0
    %923 = vmatpush1.msra.mxu0 0.0
    %924 = vmatprep.subr.mxu0 0.0
    %925 = vmatpush1.msra.mxu0 0.0
    %926 = vmatprep.subr.mxu0 0.0
    %927 = vmatpush1.msra.mxu0 0.0
    %928 = vmatprep.subr.mxu0 0.0
    %929 = vmatpush1.msra.mxu0 0.0
    %930 = vmatprep.subr.mxu0 0.0
    %931 = vmatpush1.msra.mxu0 0.0
    %932 = vmatprep.subr.mxu0 0.0
    %933 = vmatpush1.msra.mxu0 0.0
    %934 = vmatprep.mubr.f32.mxu0 0.0
    %935 = vmatmul.mubr.f32.gmra.mrb[0].mxu0 %v798
    %v936 = vpop.f32.mrb[0].mxu0
    %v937 = vadd.f32 %v610, %v936
    %v938 = vpop.f32.mrb[0].mxu0
    %939 = vdwg.mxu0
    %940 = vmatprep.subr.mxu0 %v533
    %941 = vmatpush1.msra.mxu0 %v532
    %942 = vmatprep.subr.mxu0 %v536
    %943 = vmatpush1.msra.mxu0 %v535
    %944 = vmatprep.subr.mxu0 %v539
    %945 = vmatpush1.msra.mxu0 %v538
    %946 = vmatprep.subr.mxu0 %v542
    %947 = vmatpush1.msra.mxu0 %v541
    %948 = vmatprep.subr.mxu0 %v545
    %949 = vmatpush1.msra.mxu0 %v544
    %950 = vmatprep.subr.mxu0 %v548
    %951 = vmatpush1.msra.mxu0 %v547
    %952 = vmatprep.subr.mxu0 %v551
    %953 = vmatpush1.msra.mxu0 %v550
    %954 = vmatprep.subr.mxu0 %v554
    %955 = vmatpush1.msra.mxu0 %v553
    %956 = vmatprep.subr.mxu0 %v557
    %957 = vmatpush1.msra.mxu0 %v556
    %958 = vmatprep.subr.mxu0 %v560
    %959 = vmatpush1.msra.mxu0 %v559
    %960 = vmatprep.subr.mxu0 %v563
    %961 = vmatpush1.msra.mxu0 %v562
    %962 = vmatprep.subr.mxu0 %v566
    %963 = vmatpush1.msra.mxu0 %v565
    %964 = vmatprep.subr.mxu0 %v569
    %965 = vmatpush1.msra.mxu0 %v568
    %966 = vmatprep.subr.mxu0 %v572
    %967 = vmatpush1.msra.mxu0 %v571
    %968 = vmatprep.subr.mxu0 %v575
    %969 = vmatpush1.msra.mxu0 %v574
    %970 = vmatprep.subr.mxu0 %v578
    %971 = vmatpush1.msra.mxu0 %v577
    %972 = vmatprep.subr.mxu0 0.0
    %973 = vmatpush1.msra.mxu0 0.0
    %974 = vmatprep.subr.mxu0 0.0
    %975 = vmatpush1.msra.mxu0 0.0
    %976 = vmatprep.subr.mxu0 0.0
    %977 = vmatpush1.msra.mxu0 0.0
    %978 = vmatprep.subr.mxu0 0.0
    %979 = vmatpush1.msra.mxu0 0.0
    %980 = vmatprep.subr.mxu0 0.0
    %981 = vmatpush1.msra.mxu0 0.0
    %982 = vmatprep.subr.mxu0 0.0
    %983 = vmatpush1.msra.mxu0 0.0
    %984 = vmatprep.subr.mxu0 0.0
    %985 = vmatpush1.msra.mxu0 0.0
    %986 = vmatprep.subr.mxu0 0.0
    %987 = vmatpush1.msra.mxu0 0.0
    %988 = vmatprep.subr.mxu0 0.0
    %989 = vmatpush1.msra.mxu0 0.0
    %990 = vmatprep.subr.mxu0 0.0
    %991 = vmatpush1.msra.mxu0 0.0
    %992 = vmatprep.subr.mxu0 0.0
    %993 = vmatpush1.msra.mxu0 0.0
    %994 = vmatprep.subr.mxu0 0.0
    %995 = vmatpush1.msra.mxu0 0.0
    %996 = vmatprep.subr.mxu0 0.0
    %997 = vmatpush1.msra.mxu0 0.0
    %998 = vmatprep.subr.mxu0 0.0
    %999 = vmatpush1.msra.mxu0 0.0
    %1000 = vmatprep.subr.mxu0 0.0
    %1001 = vmatpush1.msra.mxu0 0.0
    %1002 = vmatprep.subr.mxu0 0.0
    %1003 = vmatpush1.msra.mxu0 0.0
    %1004 = vmatprep.mubr.f32.mxu0 0.0
    %1005 = vmatmul.mubr.f32.gmra.mrb[0].mxu0 0.0
    %v1006 = vpop.f32.mrb[0].mxu0
    %v1007 = vadd.f32 %v619, %v1006
    %v1008 = vpop.f32.mrb[0].mxu0
    %v1009 = vadd.f32 %v623, %v1008
    %1010 = vdwg.mxu0
    %1011 = vmatprep.subr.mxu0 0.0
    %1012 = vmatpush1.msra.mxu0 %v534
    %1013 = vmatprep.subr.mxu0 0.0
    %1014 = vmatpush1.msra.mxu0 %v537
    %1015 = vmatprep.subr.mxu0 0.0
    %1016 = vmatpush1.msra.mxu0 %v540
    %1017 = vmatprep.subr.mxu0 0.0
    %1018 = vmatpush1.msra.mxu0 %v543
    %1019 = vmatprep.subr.mxu0 0.0
    %1020 = vmatpush1.msra.mxu0 %v546
    %1021 = vmatprep.subr.mxu0 0.0
    %1022 = vmatpush1.msra.mxu0 %v549
    %1023 = vmatprep.subr.mxu0 0.0
    %1024 = vmatpush1.msra.mxu0 %v552
    %1025 = vmatprep.subr.mxu0 0.0
    %1026 = vmatpush1.msra.mxu0 %v555
    %1027 = vmatprep.subr.mxu0 0.0
    %1028 = vmatpush1.msra.mxu0 %v558
    %1029 = vmatprep.subr.mxu0 0.0
    %1030 = vmatpush1.msra.mxu0 %v561
    %1031 = vmatprep.subr.mxu0 0.0
    %1032 = vmatpush1.msra.mxu0 %v564
    %1033 = vmatprep.subr.mxu0 0.0
    %1034 = vmatpush1.msra.mxu0 %v567
    %1035 = vmatprep.subr.mxu0 0.0
    %1036 = vmatpush1.msra.mxu0 %v570
    %1037 = vmatprep.subr.mxu0 0.0
    %1038 = vmatpush1.msra.mxu0 %v573
    %1039 = vmatprep.subr.mxu0 0.0
    %1040 = vmatpush1.msra.mxu0 %v576
    %1041 = vmatprep.subr.mxu0 0.0
    %1042 = vmatpush1.msra.mxu0 %v579
    %1043 = vmatprep.subr.mxu0 0.0
    %1044 = vmatpush1.msra.mxu0 0.0
    %1045 = vmatprep.subr.mxu0 0.0
    %1046 = vmatpush1.msra.mxu0 0.0
    %1047 = vmatprep.subr.mxu0 0.0
    %1048 = vmatpush1.msra.mxu0 0.0
    %1049 = vmatprep.subr.mxu0 0.0
    %1050 = vmatpush1.msra.mxu0 0.0
    %1051 = vmatprep.subr.mxu0 0.0
    %1052 = vmatpush1.msra.mxu0 0.0
    %1053 = vmatprep.subr.mxu0 0.0
    %1054 = vmatpush1.msra.mxu0 0.0
    %1055 = vmatprep.subr.mxu0 0.0
    %1056 = vmatpush1.msra.mxu0 0.0
    %1057 = vmatprep.subr.mxu0 0.0
    %1058 = vmatpush1.msra.mxu0 0.0
    %1059 = vmatprep.subr.mxu0 0.0
    %1060 = vmatpush1.msra.mxu0 0.0
    %1061 = vmatprep.subr.mxu0 0.0
    %1062 = vmatpush1.msra.mxu0 0.0
    %1063 = vmatprep.subr.mxu0 0.0
    %1064 = vmatpush1.msra.mxu0 0.0
    %1065 = vmatprep.subr.mxu0 0.0
    %1066 = vmatpush1.msra.mxu0 0.0
    %1067 = vmatprep.subr.mxu0 0.0
    %1068 = vmatpush1.msra.mxu0 0.0
    %1069 = vmatprep.subr.mxu0 0.0
    %1070 = vmatpush1.msra.mxu0 0.0
    %1071 = vmatprep.subr.mxu0 0.0
    %1072 = vmatpush1.msra.mxu0 0.0
    %1073 = vmatprep.subr.mxu0 0.0
    %1074 = vmatpush1.msra.mxu0 0.0
    %1075 = vmatprep.mubr.f32.mxu0 0.0
    %1076 = vmatmul.mubr.f32.gmra.mrb[0].mxu0 0.0
    %v1077 = vpop.f32.mrb[0].mxu0
    %v1078 = vadd.f32 %v627, %v1077
    %v1079 = vpop.f32.mrb[0].mxu0
    %1080 = vdwg.mxu0
    %v1081 = vadd.f32 %v866, %v1007
    %v1082 = vxor.u32 %v1081, 2147483648
    %v1083 = vmul.f32 %v1082, 1.442695
    %v1084 = vpow.pop %v1083
    %v1085 = vadd.f32 %v1084, 1.0
    %v1086 = vrcp.pop %v1085
    %v1087 = vmul.f32 1.0, %v1086
    %v1088 = vadd.f32 %v868, %v1009
    %v1089 = vxor.u32 %v1088, 2147483648
    %v1090 = vmul.f32 %v1089, 1.442695
    %v1091 = vpow.pop %v1090
    %v1092 = vadd.f32 %v1091, 1.0
    %v1093 = vrcp.pop %v1092
    %v1094 = vmul.f32 1.0, %v1093
    %v1095 = vmul.f32 %v1087, %v1078
    %v1096 = vadd.f32 %v937, %v1095
    %v1097 = vtanh.pop %v1096
    %v1098 = vsub.f32 1.0, %v1094
    %v1099 = vmul.f32 %v1098, %v1097
    %v1100 = vmul.f32 %v1094, 0.0
    %v1101 = vadd.f32 %v1099, %v1100
    %s1102 = smul.u32 1, 3
    %s1103 = smul.addr %s1102, 8
    %s1104 = scalar_lea.vmem [#allocation2], %s1103
    %v1105 = vld [vmem:[%s1104] sm:$0xff]
    %v1106 = vld [vmem:[%s1104 + $0x8] sm:$0xff]
    %v1107 = vld [vmem:[%s1104 + $0x10] sm:$0xff]
    %1108 = vmatprep.subr.mxu0 %v437
    %1109 = vmatpush1.msra.mxu0 %v436
    %1110 = vmatprep.subr.mxu0 %v440
    %1111 = vmatpush1.msra.mxu0 %v439
    %1112 = vmatprep.subr.mxu0 %v443
    %1113 = vmatpush1.msra.mxu0 %v442
    %1114 = vmatprep.subr.mxu0 %v446
    %1115 = vmatpush1.msra.mxu0 %v445
    %1116 = vmatprep.subr.mxu0 %v449
    %1117 = vmatpush1.msra.mxu0 %v448
    %1118 = vmatprep.subr.mxu0 %v452
    %1119 = vmatpush1.msra.mxu0 %v451
    %1120 = vmatprep.subr.mxu0 %v455
    %1121 = vmatpush1.msra.mxu0 %v454
    %1122 = vmatprep.subr.mxu0 %v458
    %1123 = vmatpush1.msra.mxu0 %v457
    %1124 = vmatprep.subr.mxu0 %v461
    %1125 = vmatpush1.msra.mxu0 %v460
    %1126 = vmatprep.subr.mxu0 %v464
    %1127 = vmatpush1.msra.mxu0 %v463
    %1128 = vmatprep.subr.mxu0 %v467
    %1129 = vmatpush1.msra.mxu0 %v466
    %1130 = vmatprep.subr.mxu0 %v470
    %1131 = vmatpush1.msra.mxu0 %v469
    %1132 = vmatprep.subr.mxu0 %v473
    %1133 = vmatpush1.msra.mxu0 %v472
    %1134 = vmatprep.subr.mxu0 %v476
    %1135 = vmatpush1.msra.mxu0 %v475
    %1136 = vmatprep.subr.mxu0 %v479
    %1137 = vmatpush1.msra.mxu0 %v478
    %1138 = vmatprep.subr.mxu0 %v482
    %1139 = vmatpush1.msra.mxu0 %v481
    %1140 = vmatprep.subr.mxu0 0.0
    %1141 = vmatpush1.msra.mxu0 0.0
    %1142 = vmatprep.subr.mxu0 0.0
    %1143 = vmatpush1.msra.mxu0 0.0
    %1144 = vmatprep.subr.mxu0 0.0
    %1145 = vmatpush1.msra.mxu0 0.0
    %1146 = vmatprep.subr.mxu0 0.0
    %1147 = vmatpush1.msra.mxu0 0.0
    %1148 = vmatprep.subr.mxu0 0.0
    %1149 = vmatpush1.msra.mxu0 0.0
    %1150 = vmatprep.subr.mxu0 0.0
    %1151 = vmatpush1.msra.mxu0 0.0
    %1152 = vmatprep.subr.mxu0 0.0
    %1153 = vmatpush1.msra.mxu0 0.0
    %1154 = vmatprep.subr.mxu0 0.0
    %1155 = vmatpush1.msra.mxu0 0.0
    %1156 = vmatprep.subr.mxu0 0.0
    %1157 = vmatpush1.msra.mxu0 0.0
    %1158 = vmatprep.subr.mxu0 0.0
    %1159 = vmatpush1.msra.mxu0 0.0
    %1160 = vmatprep.subr.mxu0 0.0
    %1161 = vmatpush1.msra.mxu0 0.0
    %1162 = vmatprep.subr.mxu0 0.0
    %1163 = vmatpush1.msra.mxu0 0.0
    %1164 = vmatprep.subr.mxu0 0.0
    %1165 = vmatpush1.msra.mxu0 0.0
    %1166 = vmatprep.subr.mxu0 0.0
    %1167 = vmatpush1.msra.mxu0 0.0
    %1168 = vmatprep.subr.mxu0 0.0
    %1169 = vmatpush1.msra.mxu0 0.0
    %1170 = vmatprep.subr.mxu0 0.0
    %1171 = vmatpush1.msra.mxu0 0.0
    %1172 = vmatprep.mubr.f32.mxu0 0.0
    %1173 = vmatmul.mubr.f32.gmra.mrb[0].mxu0 %v798
    %v1174 = vpop.f32.mrb[0].mxu0
    %v1175 = vadd.f32 %v585, %v1174
    %v1176 = vpop.f32.mrb[0].mxu0
    %v1177 = vadd.f32 %v589, %v1176
    %1178 = vdwg.mxu0
    %1179 = vmatprep.subr.mxu0 0.0
    %1180 = vmatpush1.msra.mxu0 %v438
    %1181 = vmatprep.subr.mxu0 0.0
    %1182 = vmatpush1.msra.mxu0 %v441
    %1183 = vmatprep.subr.mxu0 0.0
    %1184 = vmatpush1.msra.mxu0 %v444
    %1185 = vmatprep.subr.mxu0 0.0
    %1186 = vmatpush1.msra.mxu0 %v447
    %1187 = vmatprep.subr.mxu0 0.0
    %1188 = vmatpush1.msra.mxu0 %v450
    %1189 = vmatprep.subr.mxu0 0.0
    %1190 = vmatpush1.msra.mxu0 %v453
    %1191 = vmatprep.subr.mxu0 0.0
    %1192 = vmatpush1.msra.mxu0 %v456
    %1193 = vmatprep.subr.mxu0 0.0
    %1194 = vmatpush1.msra.mxu0 %v459
    %1195 = vmatprep.subr.mxu0 0.0
    %1196 = vmatpush1.msra.mxu0 %v462
    %1197 = vmatprep.subr.mxu0 0.0
    %1198 = vmatpush1.msra.mxu0 %v465
    %1199 = vmatprep.subr.mxu0 0.0
    %1200 = vmatpush1.msra.mxu0 %v468
    %1201 = vmatprep.subr.mxu0 0.0
    %1202 = vmatpush1.msra.mxu0 %v471
    %1203 = vmatprep.subr.mxu0 0.0
    %1204 = vmatpush1.msra.mxu0 %v474
    %1205 = vmatprep.subr.mxu0 0.0
    %1206 = vmatpush1.msra.mxu0 %v477
    %1207 = vmatprep.subr.mxu0 0.0
    %1208 = vmatpush1.msra.mxu0 %v480
    %1209 = vmatprep.subr.mxu0 0.0
    %1210 = vmatpush1.msra.mxu0 %v483
    %1211 = vmatprep.subr.mxu0 0.0
    %1212 = vmatpush1.msra.mxu0 0.0
    %1213 = vmatprep.subr.mxu0 0.0
    %1214 = vmatpush1.msra.mxu0 0.0
    %1215 = vmatprep.subr.mxu0 0.0
    %1216 = vmatpush1.msra.mxu0 0.0
    %1217 = vmatprep.subr.mxu0 0.0
    %1218 = vmatpush1.msra.mxu0 0.0
    %1219 = vmatprep.subr.mxu0 0.0
    %1220 = vmatpush1.msra.mxu0 0.0
    %1221 = vmatprep.subr.mxu0 0.0
    %1222 = vmatpush1.msra.mxu0 0.0
    %1223 = vmatprep.subr.mxu0 0.0
    %1224 = vmatpush1.msra.mxu0 0.0
    %1225 = vmatprep.subr.mxu0 0.0
    %1226 = vmatpush1.msra.mxu0 0.0
    %1227 = vmatprep.subr.mxu0 0.0
    %1228 = vmatpush1.msra.mxu0 0.0
    %1229 = vmatprep.subr.mxu0 0.0
    %1230 = vmatpush1.msra.mxu0 0.0
    %1231 = vmatprep.subr.mxu0 0.0
    %1232 = vmatpush1.msra.mxu0 0.0
    %1233 = vmatprep.subr.mxu0 0.0
    %1234 = vmatpush1.msra.mxu0 0.0
    %1235 = vmatprep.subr.mxu0 0.0
    %1236 = vmatpush1.msra.mxu0 0.0
    %1237 = vmatprep.subr.mxu0 0.0
    %1238 = vmatpush1.msra.mxu0 0.0
    %1239 = vmatprep.subr.mxu0 0.0
    %1240 = vmatpush1.msra.mxu0 0.0
    %1241 = vmatprep.subr.mxu0 0.0
    %1242 = vmatpush1.msra.mxu0 0.0
    %1243 = vmatprep.mubr.f32.mxu0 0.0
    %1244 = vmatmul.mubr.f32.gmra.mrb[0].mxu0 %v798
    %v1245 = vpop.f32.mrb[0].mxu0
    %v1246 = vadd.f32 %v593, %v1245
    %v1247 = vpop.f32.mrb[0].mxu0
    %1248 = vdwg.mxu0
    %v1249 = vadd.f32 %v1105, %v1175
    %v1250 = vxor.u32 %v1249, 2147483648
    %v1251 = vmul.f32 %v1250, 1.442695
    %v1252 = vpow.pop %v1251
    %v1253 = vadd.f32 %v1252, 1.0
    %v1254 = vrcp.pop %v1253
    %v1255 = vmul.f32 1.0, %v1254
    %v1256 = vadd.f32 %v1106, %v1177
    %v1257 = vxor.u32 %v1256, 2147483648
    %v1258 = vmul.f32 %v1257, 1.442695
    %v1259 = vpow.pop %v1258
    %v1260 = vadd.f32 %v1259, 1.0
    %v1261 = vrcp.pop %v1260
    %v1262 = vmul.f32 1.0, %v1261
    %v1263 = vmul.f32 %v1255, %v1246
    %v1264 = vadd.f32 %v1107, %v1263
    %v1265 = vtanh.pop %v1264
    %v1266 = vsub.f32 1.0, %v1262
    %v1267 = vmul.f32 %v1266, %v1265
    %v1268 = vmul.f32 %v1262, %v798
    %v1269 = vadd.f32 %v1267, %v1268
    %1270 = vmatprep.subr.mxu0 %v485
    %1271 = vmatpush1.msra.mxu0 %v484
    %1272 = vmatprep.subr.mxu0 %v488
    %1273 = vmatpush1.msra.mxu0 %v487
    %1274 = vmatprep.subr.mxu0 %v491
    %1275 = vmatpush1.msra.mxu0 %v490
    %1276 = vmatprep.subr.mxu0 %v494
    %1277 = vmatpush1.msra.mxu0 %v493
    %1278 = vmatprep.subr.mxu0 %v497
    %1279 = vmatpush1.msra.mxu0 %v496
    %1280 = vmatprep.subr.mxu0 %v500
    %1281 = vmatpush1.msra.mxu0 %v499
    %1282 = vmatprep.subr.mxu0 %v503
    %1283 = vmatpush1.msra.mxu0 %v502
    %1284 = vmatprep.subr.mxu0 %v506
    %1285 = vmatpush1.msra.mxu0 %v505
    %1286 = vmatprep.subr.mxu0 %v509
    %1287 = vmatpush1.msra.mxu0 %v508
    %1288 = vmatprep.subr.mxu0 %v512
    %1289 = vmatpush1.msra.mxu0 %v511
    %1290 = vmatprep.subr.mxu0 %v515
    %1291 = vmatpush1.msra.mxu0 %v514
    %1292 = vmatprep.subr.mxu0 %v518
    %1293 = vmatpush1.msra.mxu0 %v517
    %1294 = vmatprep.subr.mxu0 %v521
    %1295 = vmatpush1.msra.mxu0 %v520
    %1296 = vmatprep.subr.mxu0 %v524
    %1297 = vmatpush1.msra.mxu0 %v523
    %1298 = vmatprep.subr.mxu0 %v527
    %1299 = vmatpush1.msra.mxu0 %v526
    %1300 = vmatprep.subr.mxu0 %v530
    %1301 = vmatpush1.msra.mxu0 %v529
    %1302 = vmatprep.subr.mxu0 0.0
    %1303 = vmatpush1.msra.mxu0 0.0
    %1304 = vmatprep.subr.mxu0 0.0
    %1305 = vmatpush1.msra.mxu0 0.0
    %1306 = vmatprep.subr.mxu0 0.0
    %1307 = vmatpush1.msra.mxu0 0.0
    %1308 = vmatprep.subr.mxu0 0.0
    %1309 = vmatpush1.msra.mxu0 0.0
    %1310 = vmatprep.subr.mxu0 0.0
    %1311 = vmatpush1.msra.mxu0 0.0
    %1312 = vmatprep.subr.mxu0 0.0
    %1313 = vmatpush1.msra.mxu0 0.0
    %1314 = vmatprep.subr.mxu0 0.0
    %1315 = vmatpush1.msra.mxu0 0.0
    %1316 = vmatprep.subr.mxu0 0.0
    %1317 = vmatpush1.msra.mxu0 0.0
    %1318 = vmatprep.subr.mxu0 0.0
    %1319 = vmatpush1.msra.mxu0 0.0
    %1320 = vmatprep.subr.mxu0 0.0
    %1321 = vmatpush1.msra.mxu0 0.0
    %1322 = vmatprep.subr.mxu0 0.0
    %1323 = vmatpush1.msra.mxu0 0.0
    %1324 = vmatprep.subr.mxu0 0.0
    %1325 = vmatpush1.msra.mxu0 0.0
    %1326 = vmatprep.subr.mxu0 0.0
    %1327 = vmatpush1.msra.mxu0 0.0
    %1328 = vmatprep.subr.mxu0 0.0
    %1329 = vmatpush1.msra.mxu0 0.0
    %1330 = vmatprep.subr.mxu0 0.0
    %1331 = vmatpush1.msra.mxu0 0.0
    %1332 = vmatprep.subr.mxu0 0.0
    %1333 = vmatpush1.msra.mxu0 0.0
    %1334 = vmatprep.mubr.f32.mxu0 0.0
    %1335 = vmatmul.mubr.f32.gmra.mrb[0].mxu0 %v1269
    %v1336 = vpop.f32.mrb[0].mxu0
    %v1337 = vadd.f32 %v602, %v1336
    %v1338 = vpop.f32.mrb[0].mxu0
    %v1339 = vadd.f32 %v606, %v1338
    %1340 = vdwg.mxu0
    %1341 = vmatprep.subr.mxu0 0.0
    %1342 = vmatpush1.msra.mxu0 %v486
    %1343 = vmatprep.subr.mxu0 0.0
    %1344 = vmatpush1.msra.mxu0 %v489
    %1345 = vmatprep.subr.mxu0 0.0
    %1346 = vmatpush1.msra.mxu0 %v492
    %1347 = vmatprep.subr.mxu0 0.0
    %1348 = vmatpush1.msra.mxu0 %v495
    %1349 = vmatprep.subr.mxu0 0.0
    %1350 = vmatpush1.msra.mxu0 %v498
    %1351 = vmatprep.subr.mxu0 0.0
    %1352 = vmatpush1.msra.mxu0 %v501
    %1353 = vmatprep.subr.mxu0 0.0
    %1354 = vmatpush1.msra.mxu0 %v504
    %1355 = vmatprep.subr.mxu0 0.0
    %1356 = vmatpush1.msra.mxu0 %v507
    %1357 = vmatprep.subr.mxu0 0.0
    %1358 = vmatpush1.msra.mxu0 %v510
    %1359 = vmatprep.subr.mxu0 0.0
    %1360 = vmatpush1.msra.mxu0 %v513
    %1361 = vmatprep.subr.mxu0 0.0
    %1362 = vmatpush1.msra.mxu0 %v516
    %1363 = vmatprep.subr.mxu0 0.0
    %1364 = vmatpush1.msra.mxu0 %v519
    %1365 = vmatprep.subr.mxu0 0.0
    %1366 = vmatpush1.msra.mxu0 %v522
    %1367 = vmatprep.subr.mxu0 0.0
    %1368 = vmatpush1.msra.mxu0 %v525
    %1369 = vmatprep.subr.mxu0 0.0
    %1370 = vmatpush1.msra.mxu0 %v528
    %1371 = vmatprep.subr.mxu0 0.0
    %1372 = vmatpush1.msra.mxu0 %v531
    %1373 = vmatprep.subr.mxu0 0.0
    %1374 = vmatpush1.msra.mxu0 0.0
    %1375 = vmatprep.subr.mxu0 0.0
    %1376 = vmatpush1.msra.mxu0 0.0
    %1377 = vmatprep.subr.mxu0 0.0
    %1378 = vmatpush1.msra.mxu0 0.0
    %1379 = vmatprep.subr.mxu0 0.0
    %1380 = vmatpush1.msra.mxu0 0.0
    %1381 = vmatprep.subr.mxu0 0.0
    %1382 = vmatpush1.msra.mxu0 0.0
    %1383 = vmatprep.subr.mxu0 0.0
    %1384 = vmatpush1.msra.mxu0 0.0
    %1385 = vmatprep.subr.mxu0 0.0
    %1386 = vmatpush1.msra.mxu0 0.0
    %1387 = vmatprep.subr.mxu0 0.0
    %1388 = vmatpush1.msra.mxu0 0.0
    %1389 = vmatprep.subr.mxu0 0.0
    %1390 = vmatpush1.msra.mxu0 0.0
    %1391 = vmatprep.subr.mxu0 0.0
    %1392 = vmatpush1.msra.mxu0 0.0
    %1393 = vmatprep.subr.mxu0 0.0
    %1394 = vmatpush1.msra.mxu0 0.0
    %1395 = vmatprep.subr.mxu0 0.0
    %1396 = vmatpush1.msra.mxu0 0.0
    %1397 = vmatprep.subr.mxu0 0.0
    %1398 = vmatpush1.msra.mxu0 0.0
    %1399 = vmatprep.subr.mxu0 0.0
    %1400 = vmatpush1.msra.mxu0 0.0
    %1401 = vmatprep.subr.mxu0 0.0
    %1402 = vmatpush1.msra.mxu0 0.0
    %1403 = vmatprep.subr.mxu0 0.0
    %1404 = vmatpush1.msra.mxu0 0.0
    %1405 = vmatprep.mubr.f32.mxu0 0.0
    %1406 = vmatmul.mubr.f32.gmra.mrb[0].mxu0 %v1269
    %v1407 = vpop.f32.mrb[0].mxu0
    %v1408 = vadd.f32 %v610, %v1407
    %v1409 = vpop.f32.mrb[0].mxu0
    %1410 = vdwg.mxu0
    %1411 = vmatprep.subr.mxu0 %v533
    %1412 = vmatpush1.msra.mxu0 %v532
    %1413 = vmatprep.subr.mxu0 %v536
    %1414 = vmatpush1.msra.mxu0 %v535
    %1415 = vmatprep.subr.mxu0 %v539
    %1416 = vmatpush1.msra.mxu0 %v538
    %1417 = vmatprep.subr.mxu0 %v542
    %1418 = vmatpush1.msra.mxu0 %v541
    %1419 = vmatprep.subr.mxu0 %v545
    %1420 = vmatpush1.msra.mxu0 %v544
    %1421 = vmatprep.subr.mxu0 %v548
    %1422 = vmatpush1.msra.mxu0 %v547
    %1423 = vmatprep.subr.mxu0 %v551
    %1424 = vmatpush1.msra.mxu0 %v550
    %1425 = vmatprep.subr.mxu0 %v554
    %1426 = vmatpush1.msra.mxu0 %v553
    %1427 = vmatprep.subr.mxu0 %v557
    %1428 = vmatpush1.msra.mxu0 %v556
    %1429 = vmatprep.subr.mxu0 %v560
    %1430 = vmatpush1.msra.mxu0 %v559
    %1431 = vmatprep.subr.mxu0 %v563
    %1432 = vmatpush1.msra.mxu0 %v562
    %1433 = vmatprep.subr.mxu0 %v566
    %1434 = vmatpush1.msra.mxu0 %v565
    %1435 = vmatprep.subr.mxu0 %v569
    %1436 = vmatpush1.msra.mxu0 %v568
    %1437 = vmatprep.subr.mxu0 %v572
    %1438 = vmatpush1.msra.mxu0 %v571
    %1439 = vmatprep.subr.mxu0 %v575
    %1440 = vmatpush1.msra.mxu0 %v574
    %1441 = vmatprep.subr.mxu0 %v578
    %1442 = vmatpush1.msra.mxu0 %v577
    %1443 = vmatprep.subr.mxu0 0.0
    %1444 = vmatpush1.msra.mxu0 0.0
    %1445 = vmatprep.subr.mxu0 0.0
    %1446 = vmatpush1.msra.mxu0 0.0
    %1447 = vmatprep.subr.mxu0 0.0
    %1448 = vmatpush1.msra.mxu0 0.0
    %1449 = vmatprep.subr.mxu0 0.0
    %1450 = vmatpush1.msra.mxu0 0.0
    %1451 = vmatprep.subr.mxu0 0.0
    %1452 = vmatpush1.msra.mxu0 0.0
    %1453 = vmatprep.subr.mxu0 0.0
    %1454 = vmatpush1.msra.mxu0 0.0
    %1455 = vmatprep.subr.mxu0 0.0
    %1456 = vmatpush1.msra.mxu0 0.0
    %1457 = vmatprep.subr.mxu0 0.0
    %1458 = vmatpush1.msra.mxu0 0.0
    %1459 = vmatprep.subr.mxu0 0.0
    %1460 = vmatpush1.msra.mxu0 0.0
    %1461 = vmatprep.subr.mxu0 0.0
    %1462 = vmatpush1.msra.mxu0 0.0
    %1463 = vmatprep.subr.mxu0 0.0
    %1464 = vmatpush1.msra.mxu0 0.0
    %1465 = vmatprep.subr.mxu0 0.0
    %1466 = vmatpush1.msra.mxu0 0.0
    %1467 = vmatprep.subr.mxu0 0.0
    %1468 = vmatpush1.msra.mxu0 0.0
    %1469 = vmatprep.subr.mxu0 0.0
    %1470 = vmatpush1.msra.mxu0 0.0
    %1471 = vmatprep.subr.mxu0 0.0
    %1472 = vmatpush1.msra.mxu0 0.0
    %1473 = vmatprep.subr.mxu0 0.0
    %1474 = vmatpush1.msra.mxu0 0.0
    %1475 = vmatprep.mubr.f32.mxu0 0.0
    %1476 = vmatmul.mubr.f32.gmra.mrb[0].mxu0 %v1101
    %v1477 = vpop.f32.mrb[0].mxu0
    %v1478 = vadd.f32 %v619, %v1477
    %v1479 = vpop.f32.mrb[0].mxu0
    %v1480 = vadd.f32 %v623, %v1479
    %1481 = vdwg.mxu0
    %1482 = vmatprep.subr.mxu0 0.0
    %1483 = vmatpush1.msra.mxu0 %v534
    %1484 = vmatprep.subr.mxu0 0.0
    %1485 = vmatpush1.msra.mxu0 %v537
    %1486 = vmatprep.subr.mxu0 0.0
    %1487 = vmatpush1.msra.mxu0 %v540
    %1488 = vmatprep.subr.mxu0 0.0
    %1489 = vmatpush1.msra.mxu0 %v543
    %1490 = vmatprep.subr.mxu0 0.0
    %1491 = vmatpush1.msra.mxu0 %v546
    %1492 = vmatprep.subr.mxu0 0.0
    %1493 = vmatpush1.msra.mxu0 %v549
    %1494 = vmatprep.subr.mxu0 0.0
    %1495 = vmatpush1.msra.mxu0 %v552
    %1496 = vmatprep.subr.mxu0 0.0
    %1497 = vmatpush1.msra.mxu0 %v555
    %1498 = vmatprep.subr.mxu0 0.0
    %1499 = vmatpush1.msra.mxu0 %v558
    %1500 = vmatprep.subr.mxu0 0.0
    %1501 = vmatpush1.msra.mxu0 %v561
    %1502 = vmatprep.subr.mxu0 0.0
    %1503 = vmatpush1.msra.mxu0 %v564
    %1504 = vmatprep.subr.mxu0 0.0
    %1505 = vmatpush1.msra.mxu0 %v567
    %1506 = vmatprep.subr.mxu0 0.0
    %1507 = vmatpush1.msra.mxu0 %v570
    %1508 = vmatprep.subr.mxu0 0.0
    %1509 = vmatpush1.msra.mxu0 %v573
    %1510 = vmatprep.subr.mxu0 0.0
    %1511 = vmatpush1.msra.mxu0 %v576
    %1512 = vmatprep.subr.mxu0 0.0
    %1513 = vmatpush1.msra.mxu0 %v579
    %1514 = vmatprep.subr.mxu0 0.0
    %1515 = vmatpush1.msra.mxu0 0.0
    %1516 = vmatprep.subr.mxu0 0.0
    %1517 = vmatpush1.msra.mxu0 0.0
    %1518 = vmatprep.subr.mxu0 0.0
    %1519 = vmatpush1.msra.mxu0 0.0
    %1520 = vmatprep.subr.mxu0 0.0
    %1521 = vmatpush1.msra.mxu0 0.0
    %1522 = vmatprep.subr.mxu0 0.0
    %1523 = vmatpush1.msra.mxu0 0.0
    %1524 = vmatprep.subr.mxu0 0.0
    %1525 = vmatpush1.msra.mxu0 0.0
    %1526 = vmatprep.subr.mxu0 0.0
    %1527 = vmatpush1.msra.mxu0 0.0
    %1528 = vmatprep.subr.mxu0 0.0
    %1529 = vmatpush1.msra.mxu0 0.0
    %1530 = vmatprep.subr.mxu0 0.0
    %1531 = vmatpush1.msra.mxu0 0.0
    %1532 = vmatprep.subr.mxu0 0.0
    %1533 = vmatpush1.msra.mxu0 0.0
    %1534 = vmatprep.subr.mxu0 0.0
    %1535 = vmatpush1.msra.mxu0 0.0
    %1536 = vmatprep.subr.mxu0 0.0
    %1537 = vmatpush1.msra.mxu0 0.0
    %1538 = vmatprep.subr.mxu0 0.0
    %1539 = vmatpush1.msra.mxu0 0.0
    %1540 = vmatprep.subr.mxu0 0.0
    %1541 = vmatpush1.msra.mxu0 0.0
    %1542 = vmatprep.subr.mxu0 0.0
    %1543 = vmatpush1.msra.mxu0 0.0
    %1544 = vmatprep.subr.mxu0 0.0
    %1545 = vmatpush1.msra.mxu0 0.0
    %1546 = vmatprep.mubr.f32.mxu0 0.0
    %1547 = vmatmul.mubr.f32.gmra.mrb[0].mxu0 %v1101
    %v1548 = vpop.f32.mrb[0].mxu0
    %v1549 = vadd.f32 %v627, %v1548
    %v1550 = vpop.f32.mrb[0].mxu0
    %1551 = vdwg.mxu0
    %v1552 = vadd.f32 %v1337, %v1478
    %v1553 = vxor.u32 %v1552, 2147483648
    %v1554 = vmul.f32 %v1553, 1.442695
    %v1555 = vpow.pop %v1554
    %v1556 = vadd.f32 %v1555, 1.0
    %v1557 = vrcp.pop %v1556
    %v1558 = vmul.f32 1.0, %v1557
    %v1559 = vadd.f32 %v1339, %v1480
    %v1560 = vxor.u32 %v1559, 2147483648
    %v1561 = vmul.f32 %v1560, 1.442695
    %v1562 = vpow.pop %v1561
    %v1563 = vadd.f32 %v1562, 1.0
    %v1564 = vrcp.pop %v1563
    %v1565 = vmul.f32 1.0, %v1564
    %v1566 = vmul.f32 %v1558, %v1549
    %v1567 = vadd.f32 %v1408, %v1566
    %v1568 = vtanh.pop %v1567
    %v1569 = vsub.f32 1.0, %v1565
    %v1570 = vmul.f32 %v1569, %v1568
    %v1571 = vmul.f32 %v1565, %v1101
    %v1572 = vadd.f32 %v1570, %v1571
    %s1573 = smul.u32 2, 3
    %s1574 = smul.addr %s1573, 8
    %s1575 = scalar_lea.vmem [#allocation2], %s1574
    %v1576 = vld [vmem:[%s1575] sm:$0xff]
    %v1577 = vld [vmem:[%s1575 + $0x8] sm:$0xff]
    %v1578 = vld [vmem:[%s1575 + $0x10] sm:$0xff]
    %1579 = vmatprep.subr.mxu0 %v437
    %1580 = vmatpush1.msra.mxu0 %v436
    %1581 = vmatprep.subr.mxu0 %v440
    %1582 = vmatpush1.msra.mxu0 %v439
    %1583 = vmatprep.subr.mxu0 %v443
    %1584 = vmatpush1.msra.mxu0 %v442
    %1585 = vmatprep.subr.mxu0 %v446
    %1586 = vmatpush1.msra.mxu0 %v445
    %1587 = vmatprep.subr.mxu0 %v449
    %1588 = vmatpush1.msra.mxu0 %v448
    %1589 = vmatprep.subr.mxu0 %v452
    %1590 = vmatpush1.msra.mxu0 %v451
    %1591 = vmatprep.subr.mxu0 %v455
    %1592 = vmatpush1.msra.mxu0 %v454
    %1593 = vmatprep.subr.mxu0 %v458
    %1594 = vmatpush1.msra.mxu0 %v457
    %1595 = vmatprep.subr.mxu0 %v461
    %1596 = vmatpush1.msra.mxu0 %v460
    %1597 = vmatprep.subr.mxu0 %v464
    %1598 = vmatpush1.msra.mxu0 %v463
    %1599 = vmatprep.subr.mxu0 %v467
    %1600 = vmatpush1.msra.mxu0 %v466
    %1601 = vmatprep.subr.mxu0 %v470
    %1602 = vmatpush1.msra.mxu0 %v469
    %1603 = vmatprep.subr.mxu0 %v473
    %1604 = vmatpush1.msra.mxu0 %v472
    %1605 = vmatprep.subr.mxu0 %v476
    %1606 = vmatpush1.msra.mxu0 %v475
    %1607 = vmatprep.subr.mxu0 %v479
    %1608 = vmatpush1.msra.mxu0 %v478
    %1609 = vmatprep.subr.mxu0 %v482
    %1610 = vmatpush1.msra.mxu0 %v481
    %1611 = vmatprep.subr.mxu0 0.0
    %1612 = vmatpush1.msra.mxu0 0.0
    %1613 = vmatprep.subr.mxu0 0.0
    %1614 = vmatpush1.msra.mxu0 0.0
    %1615 = vmatprep.subr.mxu0 0.0
    %1616 = vmatpush1.msra.mxu0 0.0
    %1617 = vmatprep.subr.mxu0 0.0
    %1618 = vmatpush1.msra.mxu0 0.0
    %1619 = vmatprep.subr.mxu0 0.0
    %1620 = vmatpush1.msra.mxu0 0.0
    %1621 = vmatprep.subr.mxu0 0.0
    %1622 = vmatpush1.msra.mxu0 0.0
    %1623 = vmatprep.subr.mxu0 0.0
    %1624 = vmatpush1.msra.mxu0 0.0
    %1625 = vmatprep.subr.mxu0 0.0
    %1626 = vmatpush1.msra.mxu0 0.0
    %1627 = vmatprep.subr.mxu0 0.0
    %1628 = vmatpush1.msra.mxu0 0.0
    %1629 = vmatprep.subr.mxu0 0.0
    %1630 = vmatpush1.msra.mxu0 0.0
    %1631 = vmatprep.subr.mxu0 0.0
    %1632 = vmatpush1.msra.mxu0 0.0
    %1633 = vmatprep.subr.mxu0 0.0
    %1634 = vmatpush1.msra.mxu0 0.0
    %1635 = vmatprep.subr.mxu0 0.0
    %1636 = vmatpush1.msra.mxu0 0.0
    %1637 = vmatprep.subr.mxu0 0.0
    %1638 = vmatpush1.msra.mxu0 0.0
    %1639 = vmatprep.subr.mxu0 0.0
    %1640 = vmatpush1.msra.mxu0 0.0
    %1641 = vmatprep.subr.mxu0 0.0
    %1642 = vmatpush1.msra.mxu0 0.0
    %1643 = vmatprep.mubr.f32.mxu0 0.0
    %1644 = vmatmul.mubr.f32.gmra.mrb[0].mxu0 %v1269
    %v1645 = vpop.f32.mrb[0].mxu0
    %v1646 = vadd.f32 %v585, %v1645
    %v1647 = vpop.f32.mrb[0].mxu0
    %v1648 = vadd.f32 %v589, %v1647
    %1649 = vdwg.mxu0
    %1650 = vmatprep.subr.mxu0 0.0
    %1651 = vmatpush1.msra.mxu0 %v438
    %1652 = vmatprep.subr.mxu0 0.0
    %1653 = vmatpush1.msra.mxu0 %v441
    %1654 = vmatprep.subr.mxu0 0.0
    %1655 = vmatpush1.msra.mxu0 %v444
    %1656 = vmatprep.subr.mxu0 0.0
    %1657 = vmatpush1.msra.mxu0 %v447
    %1658 = vmatprep.subr.mxu0 0.0
    %1659 = vmatpush1.msra.mxu0 %v450
    %1660 = vmatprep.subr.mxu0 0.0
    %1661 = vmatpush1.msra.mxu0 %v453
    %1662 = vmatprep.subr.mxu0 0.0
    %1663 = vmatpush1.msra.mxu0 %v456
    %1664 = vmatprep.subr.mxu0 0.0
    %1665 = vmatpush1.msra.mxu0 %v459
    %1666 = vmatprep.subr.mxu0 0.0
    %1667 = vmatpush1.msra.mxu0 %v462
    %1668 = vmatprep.subr.mxu0 0.0
    %1669 = vmatpush1.msra.mxu0 %v465
    %1670 = vmatprep.subr.mxu0 0.0
    %1671 = vmatpush1.msra.mxu0 %v468
    %1672 = vmatprep.subr.mxu0 0.0
    %1673 = vmatpush1.msra.mxu0 %v471
    %1674 = vmatprep.subr.mxu0 0.0
    %1675 = vmatpush1.msra.mxu0 %v474
    %1676 = vmatprep.subr.mxu0 0.0
    %1677 = vmatpush1.msra.mxu0 %v477
    %1678 = vmatprep.subr.mxu0 0.0
    %1679 = vmatpush1.msra.mxu0 %v480
    %1680 = vmatprep.subr.mxu0 0.0
    %1681 = vmatpush1.msra.mxu0 %v483
    %1682 = vmatprep.subr.mxu0 0.0
    %1683 = vmatpush1.msra.mxu0 0.0
    %1684 = vmatprep.subr.mxu0 0.0
    %1685 = vmatpush1.msra.mxu0 0.0
    %1686 = vmatprep.subr.mxu0 0.0
    %1687 = vmatpush1.msra.mxu0 0.0
    %1688 = vmatprep.subr.mxu0 0.0
    %1689 = vmatpush1.msra.mxu0 0.0
    %1690 = vmatprep.subr.mxu0 0.0
    %1691 = vmatpush1.msra.mxu0 0.0
    %1692 = vmatprep.subr.mxu0 0.0
    %1693 = vmatpush1.msra.mxu0 0.0
    %1694 = vmatprep.subr.mxu0 0.0
    %1695 = vmatpush1.msra.mxu0 0.0
    %1696 = vmatprep.subr.mxu0 0.0
    %1697 = vmatpush1.msra.mxu0 0.0
    %1698 = vmatprep.subr.mxu0 0.0
    %1699 = vmatpush1.msra.mxu0 0.0
    %1700 = vmatprep.subr.mxu0 0.0
    %1701 = vmatpush1.msra.mxu0 0.0
    %1702 = vmatprep.subr.mxu0 0.0
    %1703 = vmatpush1.msra.mxu0 0.0
    %1704 = vmatprep.subr.mxu0 0.0
    %1705 = vmatpush1.msra.mxu0 0.0
    %1706 = vmatprep.subr.mxu0 0.0
    %1707 = vmatpush1.msra.mxu0 0.0
    %1708 = vmatprep.subr.mxu0 0.0
    %1709 = vmatpush1.msra.mxu0 0.0
    %1710 = vmatprep.subr.mxu0 0.0
    %1711 = vmatpush1.msra.mxu0 0.0
    %1712 = vmatprep.subr.mxu0 0.0
    %1713 = vmatpush1.msra.mxu0 0.0
    %1714 = vmatprep.mubr.f32.mxu0 0.0
    %1715 = vmatmul.mubr.f32.gmra.mrb[0].mxu0 %v1269
    %v1716 = vpop.f32.mrb[0].mxu0
    %v1717 = vadd.f32 %v593, %v1716
    %v1718 = vpop.f32.mrb[0].mxu0
    %1719 = vdwg.mxu0
    %v1720 = vadd.f32 %v1576, %v1646
    %v1721 = vxor.u32 %v1720, 2147483648
    %v1722 = vmul.f32 %v1721, 1.442695
    %v1723 = vpow.pop %v1722
    %v1724 = vadd.f32 %v1723, 1.0
    %v1725 = vrcp.pop %v1724
    %v1726 = vmul.f32 1.0, %v1725
    %v1727 = vadd.f32 %v1577, %v1648
    %v1728 = vxor.u32 %v1727, 2147483648
    %v1729 = vmul.f32 %v1728, 1.442695
    %v1730 = vpow.pop %v1729
    %v1731 = vadd.f32 %v1730, 1.0
    %v1732 = vrcp.pop %v1731
    %v1733 = vmul.f32 1.0, %v1732
    %v1734 = vmul.f32 %v1726, %v1717
    %v1735 = vadd.f32 %v1578, %v1734
    %v1736 = vtanh.pop %v1735
    %v1737 = vsub.f32 1.0, %v1733
    %v1738 = vmul.f32 %v1737, %v1736
    %v1739 = vmul.f32 %v1733, %v1269
    %v1740 = vadd.f32 %v1738, %v1739
    %1741 = vmatprep.subr.mxu0 %v485
    %1742 = vmatpush1.msra.mxu0 %v484
    %1743 = vmatprep.subr.mxu0 %v488
    %1744 = vmatpush1.msra.mxu0 %v487
    %1745 = vmatprep.subr.mxu0 %v491
    %1746 = vmatpush1.msra.mxu0 %v490
    %1747 = vmatprep.subr.mxu0 %v494
    %1748 = vmatpush1.msra.mxu0 %v493
    %1749 = vmatprep.subr.mxu0 %v497
    %1750 = vmatpush1.msra.mxu0 %v496
    %1751 = vmatprep.subr.mxu0 %v500
    %1752 = vmatpush1.msra.mxu0 %v499
    %1753 = vmatprep.subr.mxu0 %v503
    %1754 = vmatpush1.msra.mxu0 %v502
    %1755 = vmatprep.subr.mxu0 %v506
    %1756 = vmatpush1.msra.mxu0 %v505
    %1757 = vmatprep.subr.mxu0 %v509
    %1758 = vmatpush1.msra.mxu0 %v508
    %1759 = vmatprep.subr.mxu0 %v512
    %1760 = vmatpush1.msra.mxu0 %v511
    %1761 = vmatprep.subr.mxu0 %v515
    %1762 = vmatpush1.msra.mxu0 %v514
    %1763 = vmatprep.subr.mxu0 %v518
    %1764 = vmatpush1.msra.mxu0 %v517
    %1765 = vmatprep.subr.mxu0 %v521
    %1766 = vmatpush1.msra.mxu0 %v520
    %1767 = vmatprep.subr.mxu0 %v524
    %1768 = vmatpush1.msra.mxu0 %v523
    %1769 = vmatprep.subr.mxu0 %v527
    %1770 = vmatpush1.msra.mxu0 %v526
    %1771 = vmatprep.subr.mxu0 %v530
    %1772 = vmatpush1.msra.mxu0 %v529
    %1773 = vmatprep.subr.mxu0 0.0
    %1774 = vmatpush1.msra.mxu0 0.0
    %1775 = vmatprep.subr.mxu0 0.0
    %1776 = vmatpush1.msra.mxu0 0.0
    %1777 = vmatprep.subr.mxu0 0.0
    %1778 = vmatpush1.msra.mxu0 0.0
    %1779 = vmatprep.subr.mxu0 0.0
    %1780 = vmatpush1.msra.mxu0 0.0
    %1781 = vmatprep.subr.mxu0 0.0
    %1782 = vmatpush1.msra.mxu0 0.0
    %1783 = vmatprep.subr.mxu0 0.0
    %1784 = vmatpush1.msra.mxu0 0.0
    %1785 = vmatprep.subr.mxu0 0.0
    %1786 = vmatpush1.msra.mxu0 0.0
    %1787 = vmatprep.subr.mxu0 0.0
    %1788 = vmatpush1.msra.mxu0 0.0
    %1789 = vmatprep.subr.mxu0 0.0
    %1790 = vmatpush1.msra.mxu0 0.0
    %1791 = vmatprep.subr.mxu0 0.0
    %1792 = vmatpush1.msra.mxu0 0.0
    %1793 = vmatprep.subr.mxu0 0.0
    %1794 = vmatpush1.msra.mxu0 0.0
    %1795 = vmatprep.subr.mxu0 0.0
    %1796 = vmatpush1.msra.mxu0 0.0
    %1797 = vmatprep.subr.mxu0 0.0
    %1798 = vmatpush1.msra.mxu0 0.0
    %1799 = vmatprep.subr.mxu0 0.0
    %1800 = vmatpush1.msra.mxu0 0.0
    %1801 = vmatprep.subr.mxu0 0.0
    %1802 = vmatpush1.msra.mxu0 0.0
    %1803 = vmatprep.subr.mxu0 0.0
    %1804 = vmatpush1.msra.mxu0 0.0
    %1805 = vmatprep.mubr.f32.mxu0 0.0
    %1806 = vmatmul.mubr.f32.gmra.mrb[0].mxu0 %v1740
    %v1807 = vpop.f32.mrb[0].mxu0
    %v1808 = vadd.f32 %v602, %v1807
    %v1809 = vpop.f32.mrb[0].mxu0
    %v1810 = vadd.f32 %v606, %v1809
    %1811 = vdwg.mxu0
    %1812 = vmatprep.subr.mxu0 0.0
    %1813 = vmatpush1.msra.mxu0 %v486
    %1814 = vmatprep.subr.mxu0 0.0
    %1815 = vmatpush1.msra.mxu0 %v489
    %1816 = vmatprep.subr.mxu0 0.0
    %1817 = vmatpush1.msra.mxu0 %v492
    %1818 = vmatprep.subr.mxu0 0.0
    %1819 = vmatpush1.msra.mxu0 %v495
    %1820 = vmatprep.subr.mxu0 0.0
    %1821 = vmatpush1.msra.mxu0 %v498
    %1822 = vmatprep.subr.mxu0 0.0
    %1823 = vmatpush1.msra.mxu0 %v501
    %1824 = vmatprep.subr.mxu0 0.0
    %1825 = vmatpush1.msra.mxu0 %v504
    %1826 = vmatprep.subr.mxu0 0.0
    %1827 = vmatpush1.msra.mxu0 %v507
    %1828 = vmatprep.subr.mxu0 0.0
    %1829 = vmatpush1.msra.mxu0 %v510
    %1830 = vmatprep.subr.mxu0 0.0
    %1831 = vmatpush1.msra.mxu0 %v513
    %1832 = vmatprep.subr.mxu0 0.0
    %1833 = vmatpush1.msra.mxu0 %v516
    %1834 = vmatprep.subr.mxu0 0.0
    %1835 = vmatpush1.msra.mxu0 %v519
    %1836 = vmatprep.subr.mxu0 0.0
    %1837 = vmatpush1.msra.mxu0 %v522
    %1838 = vmatprep.subr.mxu0 0.0
    %1839 = vmatpush1.msra.mxu0 %v525
    %1840 = vmatprep.subr.mxu0 0.0
    %1841 = vmatpush1.msra.mxu0 %v528
    %1842 = vmatprep.subr.mxu0 0.0
    %1843 = vmatpush1.msra.mxu0 %v531
    %1844 = vmatprep.subr.mxu0 0.0
    %1845 = vmatpush1.msra.mxu0 0.0
    %1846 = vmatprep.subr.mxu0 0.0
    %1847 = vmatpush1.msra.mxu0 0.0
    %1848 = vmatprep.subr.mxu0 0.0
    %1849 = vmatpush1.msra.mxu0 0.0
    %1850 = vmatprep.subr.mxu0 0.0
    %1851 = vmatpush1.msra.mxu0 0.0
    %1852 = vmatprep.subr.mxu0 0.0
    %1853 = vmatpush1.msra.mxu0 0.0
    %1854 = vmatprep.subr.mxu0 0.0
    %1855 = vmatpush1.msra.mxu0 0.0
    %1856 = vmatprep.subr.mxu0 0.0
    %1857 = vmatpush1.msra.mxu0 0.0
    %1858 = vmatprep.subr.mxu0 0.0
    %1859 = vmatpush1.msra.mxu0 0.0
    %1860 = vmatprep.subr.mxu0 0.0
    %1861 = vmatpush1.msra.mxu0 0.0
    %1862 = vmatprep.subr.mxu0 0.0
    %1863 = vmatpush1.msra.mxu0 0.0
    %1864 = vmatprep.subr.mxu0 0.0
    %1865 = vmatpush1.msra.mxu0 0.0
    %1866 = vmatprep.subr.mxu0 0.0
    %1867 = vmatpush1.msra.mxu0 0.0
    %1868 = vmatprep.subr.mxu0 0.0
    %1869 = vmatpush1.msra.mxu0 0.0
    %1870 = vmatprep.subr.mxu0 0.0
    %1871 = vmatpush1.msra.mxu0 0.0
    %1872 = vmatprep.subr.mxu0 0.0
    %1873 = vmatpush1.msra.mxu0 0.0
    %1874 = vmatprep.subr.mxu0 0.0
    %1875 = vmatpush1.msra.mxu0 0.0
    %1876 = vmatprep.mubr.f32.mxu0 0.0
    %1877 = vmatmul.mubr.f32.gmra.mrb[0].mxu0 %v1740
    %v1878 = vpop.f32.mrb[0].mxu0
    %v1879 = vadd.f32 %v610, %v1878
    %v1880 = vpop.f32.mrb[0].mxu0
    %1881 = vdwg.mxu0
    %1882 = vmatprep.subr.mxu0 %v533
    %1883 = vmatpush1.msra.mxu0 %v532
    %1884 = vmatprep.subr.mxu0 %v536
    %1885 = vmatpush1.msra.mxu0 %v535
    %1886 = vmatprep.subr.mxu0 %v539
    %1887 = vmatpush1.msra.mxu0 %v538
    %1888 = vmatprep.subr.mxu0 %v542
    %1889 = vmatpush1.msra.mxu0 %v541
    %1890 = vmatprep.subr.mxu0 %v545
    %1891 = vmatpush1.msra.mxu0 %v544
    %1892 = vmatprep.subr.mxu0 %v548
    %1893 = vmatpush1.msra.mxu0 %v547
    %1894 = vmatprep.subr.mxu0 %v551
    %1895 = vmatpush1.msra.mxu0 %v550
    %1896 = vmatprep.subr.mxu0 %v554
    %1897 = vmatpush1.msra.mxu0 %v553
    %1898 = vmatprep.subr.mxu0 %v557
    %1899 = vmatpush1.msra.mxu0 %v556
    %1900 = vmatprep.subr.mxu0 %v560
    %1901 = vmatpush1.msra.mxu0 %v559
    %1902 = vmatprep.subr.mxu0 %v563
    %1903 = vmatpush1.msra.mxu0 %v562
    %1904 = vmatprep.subr.mxu0 %v566
    %1905 = vmatpush1.msra.mxu0 %v565
    %1906 = vmatprep.subr.mxu0 %v569
    %1907 = vmatpush1.msra.mxu0 %v568
    %1908 = vmatprep.subr.mxu0 %v572
    %1909 = vmatpush1.msra.mxu0 %v571
    %1910 = vmatprep.subr.mxu0 %v575
    %1911 = vmatpush1.msra.mxu0 %v574
    %1912 = vmatprep.subr.mxu0 %v578
    %1913 = vmatpush1.msra.mxu0 %v577
    %1914 = vmatprep.subr.mxu0 0.0
    %1915 = vmatpush1.msra.mxu0 0.0
    %1916 = vmatprep.subr.mxu0 0.0
    %1917 = vmatpush1.msra.mxu0 0.0
    %1918 = vmatprep.subr.mxu0 0.0
    %1919 = vmatpush1.msra.mxu0 0.0
    %1920 = vmatprep.subr.mxu0 0.0
    %1921 = vmatpush1.msra.mxu0 0.0
    %1922 = vmatprep.subr.mxu0 0.0
    %1923 = vmatpush1.msra.mxu0 0.0
    %1924 = vmatprep.subr.mxu0 0.0
    %1925 = vmatpush1.msra.mxu0 0.0
    %1926 = vmatprep.subr.mxu0 0.0
    %1927 = vmatpush1.msra.mxu0 0.0
    %1928 = vmatprep.subr.mxu0 0.0
    %1929 = vmatpush1.msra.mxu0 0.0
    %1930 = vmatprep.subr.mxu0 0.0
    %1931 = vmatpush1.msra.mxu0 0.0
    %1932 = vmatprep.subr.mxu0 0.0
    %1933 = vmatpush1.msra.mxu0 0.0
    %1934 = vmatprep.subr.mxu0 0.0
    %1935 = vmatpush1.msra.mxu0 0.0
    %1936 = vmatprep.subr.mxu0 0.0
    %1937 = vmatpush1.msra.mxu0 0.0
    %1938 = vmatprep.subr.mxu0 0.0
    %1939 = vmatpush1.msra.mxu0 0.0
    %1940 = vmatprep.subr.mxu0 0.0
    %1941 = vmatpush1.msra.mxu0 0.0
    %1942 = vmatprep.subr.mxu0 0.0
    %1943 = vmatpush1.msra.mxu0 0.0
    %1944 = vmatprep.subr.mxu0 0.0
    %1945 = vmatpush1.msra.mxu0 0.0
    %1946 = vmatprep.mubr.f32.mxu0 0.0
    %1947 = vmatmul.mubr.f32.gmra.mrb[0].mxu0 %v1572
    %v1948 = vpop.f32.mrb[0].mxu0
    %v1949 = vadd.f32 %v619, %v1948
    %v1950 = vpop.f32.mrb[0].mxu0
    %v1951 = vadd.f32 %v623, %v1950
    %1952 = vdwg.mxu0
    %1953 = vmatprep.subr.mxu0 0.0
    %1954 = vmatpush1.msra.mxu0 %v534
    %1955 = vmatprep.subr.mxu0 0.0
    %1956 = vmatpush1.msra.mxu0 %v537
    %1957 = vmatprep.subr.mxu0 0.0
    %1958 = vmatpush1.msra.mxu0 %v540
    %1959 = vmatprep.subr.mxu0 0.0
    %1960 = vmatpush1.msra.mxu0 %v543
    %1961 = vmatprep.subr.mxu0 0.0
    %1962 = vmatpush1.msra.mxu0 %v546
    %1963 = vmatprep.subr.mxu0 0.0
    %1964 = vmatpush1.msra.mxu0 %v549
    %1965 = vmatprep.subr.mxu0 0.0
    %1966 = vmatpush1.msra.mxu0 %v552
    %1967 = vmatprep.subr.mxu0 0.0
    %1968 = vmatpush1.msra.mxu0 %v555
    %1969 = vmatprep.subr.mxu0 0.0
    %1970 = vmatpush1.msra.mxu0 %v558
    %1971 = vmatprep.subr.mxu0 0.0
    %1972 = vmatpush1.msra.mxu0 %v561
    %1973 = vmatprep.subr.mxu0 0.0
    %1974 = vmatpush1.msra.mxu0 %v564
    %1975 = vmatprep.subr.mxu0 0.0
    %1976 = vmatpush1.msra.mxu0 %v567
    %1977 = vmatprep.subr.mxu0 0.0
    %1978 = vmatpush1.msra.mxu0 %v570
    %1979 = vmatprep.subr.mxu0 0.0
    %1980 = vmatpush1.msra.mxu0 %v573
    %1981 = vmatprep.subr.mxu0 0.0
    %1982 = vmatpush1.msra.mxu0 %v576
    %1983 = vmatprep.subr.mxu0 0.0
    %1984 = vmatpush1.msra.mxu0 %v579
    %1985 = vmatprep.subr.mxu0 0.0
    %1986 = vmatpush1.msra.mxu0 0.0
    %1987 = vmatprep.subr.mxu0 0.0
    %1988 = vmatpush1.msra.mxu0 0.0
    %1989 = vmatprep.subr.mxu0 0.0
    %1990 = vmatpush1.msra.mxu0 0.0
    %1991 = vmatprep.subr.mxu0 0.0
    %1992 = vmatpush1.msra.mxu0 0.0
    %1993 = vmatprep.subr.mxu0 0.0
    %1994 = vmatpush1.msra.mxu0 0.0
    %1995 = vmatprep.subr.mxu0 0.0
    %1996 = vmatpush1.msra.mxu0 0.0
    %1997 = vmatprep.subr.mxu0 0.0
    %1998 = vmatpush1.msra.mxu0 0.0
    %1999 = vmatprep.subr.mxu0 0.0
    %2000 = vmatpush1.msra.mxu0 0.0
    %2001 = vmatprep.subr.mxu0 0.0
    %2002 = vmatpush1.msra.mxu0 0.0
    %2003 = vmatprep.subr.mxu0 0.0
    %2004 = vmatpush1.msra.mxu0 0.0
    %2005 = vmatprep.subr.mxu0 0.0
    %2006 = vmatpush1.msra.mxu0 0.0
    %2007 = vmatprep.subr.mxu0 0.0
    %2008 = vmatpush1.msra.mxu0 0.0
    %2009 = vmatprep.subr.mxu0 0.0
    %2010 = vmatpush1.msra.mxu0 0.0
    %2011 = vmatprep.subr.mxu0 0.0
    %2012 = vmatpush1.msra.mxu0 0.0
    %2013 = vmatprep.subr.mxu0 0.0
    %2014 = vmatpush1.msra.mxu0 0.0
    %2015 = vmatprep.subr.mxu0 0.0
    %2016 = vmatpush1.msra.mxu0 0.0
    %2017 = vmatprep.mubr.f32.mxu0 0.0
    %2018 = vmatmul.mubr.f32.gmra.mrb[0].mxu0 %v1572
    %v2019 = vpop.f32.mrb[0].mxu0
    %v2020 = vadd.f32 %v627, %v2019
    %v2021 = vpop.f32.mrb[0].mxu0
    %2022 = vdwg.mxu0
    %v2023 = vadd.f32 %v1808, %v1949
    %v2024 = vxor.u32 %v2023, 2147483648
    %v2025 = vmul.f32 %v2024, 1.442695
    %v2026 = vpow.pop %v2025
    %v2027 = vadd.f32 %v2026, 1.0
    %v2028 = vrcp.pop %v2027
    %v2029 = vmul.f32 1.0, %v2028
    %v2030 = vadd.f32 %v1810, %v1951
    %v2031 = vxor.u32 %v2030, 2147483648
    %v2032 = vmul.f32 %v2031, 1.442695
    %v2033 = vpow.pop %v2032
    %v2034 = vadd.f32 %v2033, 1.0
    %v2035 = vrcp.pop %v2034
    %v2036 = vmul.f32 1.0, %v2035
    %v2037 = vmul.f32 %v2029, %v2020
    %v2038 = vadd.f32 %v1879, %v2037
    %v2039 = vtanh.pop %v2038
    %v2040 = vsub.f32 1.0, %v2036
    %v2041 = vmul.f32 %v2040, %v2039
    %v2042 = vmul.f32 %v2036, %v1572
    %v2043 = vadd.f32 %v2041, %v2042
    %s2044 = smul.u32 3, 3
    %s2045 = smul.addr %s2044, 8
    %s2046 = scalar_lea.vmem [#allocation2], %s2045
    %v2047 = vld [vmem:[%s2046] sm:$0xff]
    %v2048 = vld [vmem:[%s2046 + $0x8] sm:$0xff]
    %v2049 = vld [vmem:[%s2046 + $0x10] sm:$0xff]
    %2050 = vmatprep.subr.mxu0 %v437
    %2051 = vmatpush1.msra.mxu0 %v436
    %2052 = vmatprep.subr.mxu0 %v440
    %2053 = vmatpush1.msra.mxu0 %v439
    %2054 = vmatprep.subr.mxu0 %v443
    %2055 = vmatpush1.msra.mxu0 %v442
    %2056 = vmatprep.subr.mxu0 %v446
    %2057 = vmatpush1.msra.mxu0 %v445
    %2058 = vmatprep.subr.mxu0 %v449
    %2059 = vmatpush1.msra.mxu0 %v448
    %2060 = vmatprep.subr.mxu0 %v452
    %2061 = vmatpush1.msra.mxu0 %v451
    %2062 = vmatprep.subr.mxu0 %v455
    %2063 = vmatpush1.msra.mxu0 %v454
    %2064 = vmatprep.subr.mxu0 %v458
    %2065 = vmatpush1.msra.mxu0 %v457
    %2066 = vmatprep.subr.mxu0 %v461
    %2067 = vmatpush1.msra.mxu0 %v460
    %2068 = vmatprep.subr.mxu0 %v464
    %2069 = vmatpush1.msra.mxu0 %v463
    %2070 = vmatprep.subr.mxu0 %v467
    %2071 = vmatpush1.msra.mxu0 %v466
    %2072 = vmatprep.subr.mxu0 %v470
    %2073 = vmatpush1.msra.mxu0 %v469
    %2074 = vmatprep.subr.mxu0 %v473
    %2075 = vmatpush1.msra.mxu0 %v472
    %2076 = vmatprep.subr.mxu0 %v476
    %2077 = vmatpush1.msra.mxu0 %v475
    %2078 = vmatprep.subr.mxu0 %v479
    %2079 = vmatpush1.msra.mxu0 %v478
    %2080 = vmatprep.subr.mxu0 %v482
    %2081 = vmatpush1.msra.mxu0 %v481
    %2082 = vmatprep.subr.mxu0 0.0
    %2083 = vmatpush1.msra.mxu0 0.0
    %2084 = vmatprep.subr.mxu0 0.0
    %2085 = vmatpush1.msra.mxu0 0.0
    %2086 = vmatprep.subr.mxu0 0.0
    %2087 = vmatpush1.msra.mxu0 0.0
    %2088 = vmatprep.subr.mxu0 0.0
    %2089 = vmatpush1.msra.mxu0 0.0
    %2090 = vmatprep.subr.mxu0 0.0
    %2091 = vmatpush1.msra.mxu0 0.0
    %2092 = vmatprep.subr.mxu0 0.0
    %2093 = vmatpush1.msra.mxu0 0.0
    %2094 = vmatprep.subr.mxu0 0.0
    %2095 = vmatpush1.msra.mxu0 0.0
    %2096 = vmatprep.subr.mxu0 0.0
    %2097 = vmatpush1.msra.mxu0 0.0
    %2098 = vmatprep.subr.mxu0 0.0
    %2099 = vmatpush1.msra.mxu0 0.0
    %2100 = vmatprep.subr.mxu0 0.0
    %2101 = vmatpush1.msra.mxu0 0.0
    %2102 = vmatprep.subr.mxu0 0.0
    %2103 = vmatpush1.msra.mxu0 0.0
    %2104 = vmatprep.subr.mxu0 0.0
    %2105 = vmatpush1.msra.mxu0 0.0
    %2106 = vmatprep.subr.mxu0 0.0
    %2107 = vmatpush1.msra.mxu0 0.0
    %2108 = vmatprep.subr.mxu0 0.0
    %2109 = vmatpush1.msra.mxu0 0.0
    %2110 = vmatprep.subr.mxu0 0.0
    %2111 = vmatpush1.msra.mxu0 0.0
    %2112 = vmatprep.subr.mxu0 0.0
    %2113 = vmatpush1.msra.mxu0 0.0
    %2114 = vmatprep.mubr.f32.mxu0 0.0
    %2115 = vmatmul.mubr.f32.gmra.mrb[0].mxu0 %v1740
    %v2116 = vpop.f32.mrb[0].mxu0
    %v2117 = vadd.f32 %v585, %v2116
    %v2118 = vpop.f32.mrb[0].mxu0
    %v2119 = vadd.f32 %v589, %v2118
    %2120 = vdwg.mxu0
    %2121 = vmatprep.subr.mxu0 0.0
    %2122 = vmatpush1.msra.mxu0 %v438
    %2123 = vmatprep.subr.mxu0 0.0
    %2124 = vmatpush1.msra.mxu0 %v441
    %2125 = vmatprep.subr.mxu0 0.0
    %2126 = vmatpush1.msra.mxu0 %v444
    %2127 = vmatprep.subr.mxu0 0.0
    %2128 = vmatpush1.msra.mxu0 %v447
    %2129 = vmatprep.subr.mxu0 0.0
    %2130 = vmatpush1.msra.mxu0 %v450
    %2131 = vmatprep.subr.mxu0 0.0
    %2132 = vmatpush1.msra.mxu0 %v453
    %2133 = vmatprep.subr.mxu0 0.0
    %2134 = vmatpush1.msra.mxu0 %v456
    %2135 = vmatprep.subr.mxu0 0.0
    %2136 = vmatpush1.msra.mxu0 %v459
    %2137 = vmatprep.subr.mxu0 0.0
    %2138 = vmatpush1.msra.mxu0 %v462
    %2139 = vmatprep.subr.mxu0 0.0
    %2140 = vmatpush1.msra.mxu0 %v465
    %2141 = vmatprep.subr.mxu0 0.0
    %2142 = vmatpush1.msra.mxu0 %v468
    %2143 = vmatprep.subr.mxu0 0.0
    %2144 = vmatpush1.msra.mxu0 %v471
    %2145 = vmatprep.subr.mxu0 0.0
    %2146 = vmatpush1.msra.mxu0 %v474
    %2147 = vmatprep.subr.mxu0 0.0
    %2148 = vmatpush1.msra.mxu0 %v477
    %2149 = vmatprep.subr.mxu0 0.0
    %2150 = vmatpush1.msra.mxu0 %v480
    %2151 = vmatprep.subr.mxu0 0.0
    %2152 = vmatpush1.msra.mxu0 %v483
    %2153 = vmatprep.subr.mxu0 0.0
    %2154 = vmatpush1.msra.mxu0 0.0
    %2155 = vmatprep.subr.mxu0 0.0
    %2156 = vmatpush1.msra.mxu0 0.0
    %2157 = vmatprep.subr.mxu0 0.0
    %2158 = vmatpush1.msra.mxu0 0.0
    %2159 = vmatprep.subr.mxu0 0.0
    %2160 = vmatpush1.msra.mxu0 0.0
    %2161 = vmatprep.subr.mxu0 0.0
    %2162 = vmatpush1.msra.mxu0 0.0
    %2163 = vmatprep.subr.mxu0 0.0
    %2164 = vmatpush1.msra.mxu0 0.0
    %2165 = vmatprep.subr.mxu0 0.0
    %2166 = vmatpush1.msra.mxu0 0.0
    %2167 = vmatprep.subr.mxu0 0.0
    %2168 = vmatpush1.msra.mxu0 0.0
    %2169 = vmatprep.subr.mxu0 0.0
    %2170 = vmatpush1.msra.mxu0 0.0
    %2171 = vmatprep.subr.mxu0 0.0
    %2172 = vmatpush1.msra.mxu0 0.0
    %2173 = vmatprep.subr.mxu0 0.0
    %2174 = vmatpush1.msra.mxu0 0.0
    %2175 = vmatprep.subr.mxu0 0.0
    %2176 = vmatpush1.msra.mxu0 0.0
    %2177 = vmatprep.subr.mxu0 0.0
    %2178 = vmatpush1.msra.mxu0 0.0
    %2179 = vmatprep.subr.mxu0 0.0
    %2180 = vmatpush1.msra.mxu0 0.0
    %2181 = vmatprep.subr.mxu0 0.0
    %2182 = vmatpush1.msra.mxu0 0.0
    %2183 = vmatprep.subr.mxu0 0.0
    %2184 = vmatpush1.msra.mxu0 0.0
    %2185 = vmatprep.mubr.f32.mxu0 0.0
    %2186 = vmatmul.mubr.f32.gmra.mrb[0].mxu0 %v1740
    %v2187 = vpop.f32.mrb[0].mxu0
    %v2188 = vadd.f32 %v593, %v2187
    %v2189 = vpop.f32.mrb[0].mxu0
    %2190 = vdwg.mxu0
    %v2191 = vadd.f32 %v2047, %v2117
    %v2192 = vxor.u32 %v2191, 2147483648
    %v2193 = vmul.f32 %v2192, 1.442695
    %v2194 = vpow.pop %v2193
    %v2195 = vadd.f32 %v2194, 1.0
    %v2196 = vrcp.pop %v2195
    %v2197 = vmul.f32 1.0, %v2196
    %v2198 = vadd.f32 %v2048, %v2119
    %v2199 = vxor.u32 %v2198, 2147483648
    %v2200 = vmul.f32 %v2199, 1.442695
    %v2201 = vpow.pop %v2200
    %v2202 = vadd.f32 %v2201, 1.0
    %v2203 = vrcp.pop %v2202
    %v2204 = vmul.f32 1.0, %v2203
    %v2205 = vmul.f32 %v2197, %v2188
    %v2206 = vadd.f32 %v2049, %v2205
    %v2207 = vtanh.pop %v2206
    %v2208 = vsub.f32 1.0, %v2204
    %v2209 = vmul.f32 %v2208, %v2207
    %v2210 = vmul.f32 %v2204, %v1740
    %v2211 = vadd.f32 %v2209, %v2210
    %2212 = vmatprep.subr.mxu0 %v485
    %2213 = vmatpush1.msra.mxu0 %v484
    %2214 = vmatprep.subr.mxu0 %v488
    %2215 = vmatpush1.msra.mxu0 %v487
    %2216 = vmatprep.subr.mxu0 %v491
    %2217 = vmatpush1.msra.mxu0 %v490
    %2218 = vmatprep.subr.mxu0 %v494
    %2219 = vmatpush1.msra.mxu0 %v493
    %2220 = vmatprep.subr.mxu0 %v497
    %2221 = vmatpush1.msra.mxu0 %v496
    %2222 = vmatprep.subr.mxu0 %v500
    %2223 = vmatpush1.msra.mxu0 %v499
    %2224 = vmatprep.subr.mxu0 %v503
    %2225 = vmatpush1.msra.mxu0 %v502
    %2226 = vmatprep.subr.mxu0 %v506
    %2227 = vmatpush1.msra.mxu0 %v505
    %2228 = vmatprep.subr.mxu0 %v509
    %2229 = vmatpush1.msra.mxu0 %v508
    %2230 = vmatprep.subr.mxu0 %v512
    %2231 = vmatpush1.msra.mxu0 %v511
    %2232 = vmatprep.subr.mxu0 %v515
    %2233 = vmatpush1.msra.mxu0 %v514
    %2234 = vmatprep.subr.mxu0 %v518
    %2235 = vmatpush1.msra.mxu0 %v517
    %2236 = vmatprep.subr.mxu0 %v521
    %2237 = vmatpush1.msra.mxu0 %v520
    %2238 = vmatprep.subr.mxu0 %v524
    %2239 = vmatpush1.msra.mxu0 %v523
    %2240 = vmatprep.subr.mxu0 %v527
    %2241 = vmatpush1.msra.mxu0 %v526
    %2242 = vmatprep.subr.mxu0 %v530
    %2243 = vmatpush1.msra.mxu0 %v529
    %2244 = vmatprep.subr.mxu0 0.0
    %2245 = vmatpush1.msra.mxu0 0.0
    %2246 = vmatprep.subr.mxu0 0.0
    %2247 = vmatpush1.msra.mxu0 0.0
    %2248 = vmatprep.subr.mxu0 0.0
    %2249 = vmatpush1.msra.mxu0 0.0
    %2250 = vmatprep.subr.mxu0 0.0
    %2251 = vmatpush1.msra.mxu0 0.0
    %2252 = vmatprep.subr.mxu0 0.0
    %2253 = vmatpush1.msra.mxu0 0.0
    %2254 = vmatprep.subr.mxu0 0.0
    %2255 = vmatpush1.msra.mxu0 0.0
    %2256 = vmatprep.subr.mxu0 0.0
    %2257 = vmatpush1.msra.mxu0 0.0
    %2258 = vmatprep.subr.mxu0 0.0
    %2259 = vmatpush1.msra.mxu0 0.0
    %2260 = vmatprep.subr.mxu0 0.0
    %2261 = vmatpush1.msra.mxu0 0.0
    %2262 = vmatprep.subr.mxu0 0.0
    %2263 = vmatpush1.msra.mxu0 0.0
    %2264 = vmatprep.subr.mxu0 0.0
    %2265 = vmatpush1.msra.mxu0 0.0
    %2266 = vmatprep.subr.mxu0 0.0
    %2267 = vmatpush1.msra.mxu0 0.0
    %2268 = vmatprep.subr.mxu0 0.0
    %2269 = vmatpush1.msra.mxu0 0.0
    %2270 = vmatprep.subr.mxu0 0.0
    %2271 = vmatpush1.msra.mxu0 0.0
    %2272 = vmatprep.subr.mxu0 0.0
    %2273 = vmatpush1.msra.mxu0 0.0
    %2274 = vmatprep.subr.mxu0 0.0
    %2275 = vmatpush1.msra.mxu0 0.0
    %2276 = vmatprep.mubr.f32.mxu0 0.0
    %2277 = vmatmul.mubr.f32.gmra.mrb[0].mxu0 %v2211
    %v2278 = vpop.f32.mrb[0].mxu0
    %v2279 = vadd.f32 %v602, %v2278
    %v2280 = vpop.f32.mrb[0].mxu0
    %v2281 = vadd.f32 %v606, %v2280
    %2282 = vdwg.mxu0
    %2283 = vmatprep.subr.mxu0 0.0
    %2284 = vmatpush1.msra.mxu0 %v486
    %2285 = vmatprep.subr.mxu0 0.0
    %2286 = vmatpush1.msra.mxu0 %v489
    %2287 = vmatprep.subr.mxu0 0.0
    %2288 = vmatpush1.msra.mxu0 %v492
    %2289 = vmatprep.subr.mxu0 0.0
    %2290 = vmatpush1.msra.mxu0 %v495
    %2291 = vmatprep.subr.mxu0 0.0
    %2292 = vmatpush1.msra.mxu0 %v498
    %2293 = vmatprep.subr.mxu0 0.0
    %2294 = vmatpush1.msra.mxu0 %v501
    %2295 = vmatprep.subr.mxu0 0.0
    %2296 = vmatpush1.msra.mxu0 %v504
    %2297 = vmatprep.subr.mxu0 0.0
    %2298 = vmatpush1.msra.mxu0 %v507
    %2299 = vmatprep.subr.mxu0 0.0
    %2300 = vmatpush1.msra.mxu0 %v510
    %2301 = vmatprep.subr.mxu0 0.0
    %2302 = vmatpush1.msra.mxu0 %v513
    %2303 = vmatprep.subr.mxu0 0.0
    %2304 = vmatpush1.msra.mxu0 %v516
    %2305 = vmatprep.subr.mxu0 0.0
    %2306 = vmatpush1.msra.mxu0 %v519
    %2307 = vmatprep.subr.mxu0 0.0
    %2308 = vmatpush1.msra.mxu0 %v522
    %2309 = vmatprep.subr.mxu0 0.0
    %2310 = vmatpush1.msra.mxu0 %v525
    %2311 = vmatprep.subr.mxu0 0.0
    %2312 = vmatpush1.msra.mxu0 %v528
    %2313 = vmatprep.subr.mxu0 0.0
    %2314 = vmatpush1.msra.mxu0 %v531
    %2315 = vmatprep.subr.mxu0 0.0
    %2316 = vmatpush1.msra.mxu0 0.0
    %2317 = vmatprep.subr.mxu0 0.0
    %2318 = vmatpush1.msra.mxu0 0.0
    %2319 = vmatprep.subr.mxu0 0.0
    %2320 = vmatpush1.msra.mxu0 0.0
    %2321 = vmatprep.subr.mxu0 0.0
    %2322 = vmatpush1.msra.mxu0 0.0
    %2323 = vmatprep.subr.mxu0 0.0
    %2324 = vmatpush1.msra.mxu0 0.0
    %2325 = vmatprep.subr.mxu0 0.0
    %2326 = vmatpush1.msra.mxu0 0.0
    %2327 = vmatprep.subr.mxu0 0.0
    %2328 = vmatpush1.msra.mxu0 0.0
    %2329 = vmatprep.subr.mxu0 0.0
    %2330 = vmatpush1.msra.mxu0 0.0
    %2331 = vmatprep.subr.mxu0 0.0
    %2332 = vmatpush1.msra.mxu0 0.0
    %2333 = vmatprep.subr.mxu0 0.0
    %2334 = vmatpush1.msra.mxu0 0.0
    %2335 = vmatprep.subr.mxu0 0.0
    %2336 = vmatpush1.msra.mxu0 0.0
    %2337 = vmatprep.subr.mxu0 0.0
    %2338 = vmatpush1.msra.mxu0 0.0
    %2339 = vmatprep.subr.mxu0 0.0
    %2340 = vmatpush1.msra.mxu0 0.0
    %2341 = vmatprep.subr.mxu0 0.0
    %2342 = vmatpush1.msra.mxu0 0.0
    %2343 = vmatprep.subr.mxu0 0.0
    %2344 = vmatpush1.msra.mxu0 0.0
    %2345 = vmatprep.subr.mxu0 0.0
    %2346 = vmatpush1.msra.mxu0 0.0
    %2347 = vmatprep.mubr.f32.mxu0 0.0
    %2348 = vmatmul.mubr.f32.gmra.mrb[0].mxu0 %v2211
    %v2349 = vpop.f32.mrb[0].mxu0
    %v2350 = vadd.f32 %v610, %v2349
    %v2351 = vpop.f32.mrb[0].mxu0
    %2352 = vdwg.mxu0
    %2353 = vmatprep.subr.mxu0 %v533
    %2354 = vmatpush1.msra.mxu0 %v532
    %2355 = vmatprep.subr.mxu0 %v536
    %2356 = vmatpush1.msra.mxu0 %v535
    %2357 = vmatprep.subr.mxu0 %v539
    %2358 = vmatpush1.msra.mxu0 %v538
    %2359 = vmatprep.subr.mxu0 %v542
    %2360 = vmatpush1.msra.mxu0 %v541
    %2361 = vmatprep.subr.mxu0 %v545
    %2362 = vmatpush1.msra.mxu0 %v544
    %2363 = vmatprep.subr.mxu0 %v548
    %2364 = vmatpush1.msra.mxu0 %v547
    %2365 = vmatprep.subr.mxu0 %v551
    %2366 = vmatpush1.msra.mxu0 %v550
    %2367 = vmatprep.subr.mxu0 %v554
    %2368 = vmatpush1.msra.mxu0 %v553
    %2369 = vmatprep.subr.mxu0 %v557
    %2370 = vmatpush1.msra.mxu0 %v556
    %2371 = vmatprep.subr.mxu0 %v560
    %2372 = vmatpush1.msra.mxu0 %v559
    %2373 = vmatprep.subr.mxu0 %v563
    %2374 = vmatpush1.msra.mxu0 %v562
    %2375 = vmatprep.subr.mxu0 %v566
    %2376 = vmatpush1.msra.mxu0 %v565
    %2377 = vmatprep.subr.mxu0 %v569
    %2378 = vmatpush1.msra.mxu0 %v568
    %2379 = vmatprep.subr.mxu0 %v572
    %2380 = vmatpush1.msra.mxu0 %v571
    %2381 = vmatprep.subr.mxu0 %v575
    %2382 = vmatpush1.msra.mxu0 %v574
    %2383 = vmatprep.subr.mxu0 %v578
    %2384 = vmatpush1.msra.mxu0 %v577
    %2385 = vmatprep.subr.mxu0 0.0
    %2386 = vmatpush1.msra.mxu0 0.0
    %2387 = vmatprep.subr.mxu0 0.0
    %2388 = vmatpush1.msra.mxu0 0.0
    %2389 = vmatprep.subr.mxu0 0.0
    %2390 = vmatpush1.msra.mxu0 0.0
    %2391 = vmatprep.subr.mxu0 0.0
    %2392 = vmatpush1.msra.mxu0 0.0
    %2393 = vmatprep.subr.mxu0 0.0
    %2394 = vmatpush1.msra.mxu0 0.0
    %2395 = vmatprep.subr.mxu0 0.0
    %2396 = vmatpush1.msra.mxu0 0.0
    %2397 = vmatprep.subr.mxu0 0.0
    %2398 = vmatpush1.msra.mxu0 0.0
    %2399 = vmatprep.subr.mxu0 0.0
    %2400 = vmatpush1.msra.mxu0 0.0
    %2401 = vmatprep.subr.mxu0 0.0
    %2402 = vmatpush1.msra.mxu0 0.0
    %2403 = vmatprep.subr.mxu0 0.0
    %2404 = vmatpush1.msra.mxu0 0.0
    %2405 = vmatprep.subr.mxu0 0.0
    %2406 = vmatpush1.msra.mxu0 0.0
    %2407 = vmatprep.subr.mxu0 0.0
    %2408 = vmatpush1.msra.mxu0 0.0
    %2409 = vmatprep.subr.mxu0 0.0
    %2410 = vmatpush1.msra.mxu0 0.0
    %2411 = vmatprep.subr.mxu0 0.0
    %2412 = vmatpush1.msra.mxu0 0.0
    %2413 = vmatprep.subr.mxu0 0.0
    %2414 = vmatpush1.msra.mxu0 0.0
    %2415 = vmatprep.subr.mxu0 0.0
    %2416 = vmatpush1.msra.mxu0 0.0
    %2417 = vmatprep.mubr.f32.mxu0 0.0
    %2418 = vmatmul.mubr.f32.gmra.mrb[0].mxu0 %v2043
    %v2419 = vpop.f32.mrb[0].mxu0
    %v2420 = vadd.f32 %v619, %v2419
    %v2421 = vpop.f32.mrb[0].mxu0
    %v2422 = vadd.f32 %v623, %v2421
    %2423 = vdwg.mxu0
    %2424 = vmatprep.subr.mxu0 0.0
    %2425 = vmatpush1.msra.mxu0 %v534
    %2426 = vmatprep.subr.mxu0 0.0
    %2427 = vmatpush1.msra.mxu0 %v537
    %2428 = vmatprep.subr.mxu0 0.0
    %2429 = vmatpush1.msra.mxu0 %v540
    %2430 = vmatprep.subr.mxu0 0.0
    %2431 = vmatpush1.msra.mxu0 %v543
    %2432 = vmatprep.subr.mxu0 0.0
    %2433 = vmatpush1.msra.mxu0 %v546
    %2434 = vmatprep.subr.mxu0 0.0
    %2435 = vmatpush1.msra.mxu0 %v549
    %2436 = vmatprep.subr.mxu0 0.0
    %2437 = vmatpush1.msra.mxu0 %v552
    %2438 = vmatprep.subr.mxu0 0.0
    %2439 = vmatpush1.msra.mxu0 %v555
    %2440 = vmatprep.subr.mxu0 0.0
    %2441 = vmatpush1.msra.mxu0 %v558
    %2442 = vmatprep.subr.mxu0 0.0
    %2443 = vmatpush1.msra.mxu0 %v561
    %2444 = vmatprep.subr.mxu0 0.0
    %2445 = vmatpush1.msra.mxu0 %v564
    %2446 = vmatprep.subr.mxu0 0.0
    %2447 = vmatpush1.msra.mxu0 %v567
    %2448 = vmatprep.subr.mxu0 0.0
    %2449 = vmatpush1.msra.mxu0 %v570
    %2450 = vmatprep.subr.mxu0 0.0
    %2451 = vmatpush1.msra.mxu0 %v573
    %2452 = vmatprep.subr.mxu0 0.0
    %2453 = vmatpush1.msra.mxu0 %v576
    %2454 = vmatprep.subr.mxu0 0.0
    %2455 = vmatpush1.msra.mxu0 %v579
    %2456 = vmatprep.subr.mxu0 0.0
    %2457 = vmatpush1.msra.mxu0 0.0
    %2458 = vmatprep.subr.mxu0 0.0
    %2459 = vmatpush1.msra.mxu0 0.0
    %2460 = vmatprep.subr.mxu0 0.0
    %2461 = vmatpush1.msra.mxu0 0.0
    %2462 = vmatprep.subr.mxu0 0.0
    %2463 = vmatpush1.msra.mxu0 0.0
    %2464 = vmatprep.subr.mxu0 0.0
    %2465 = vmatpush1.msra.mxu0 0.0
    %2466 = vmatprep.subr.mxu0 0.0
    %2467 = vmatpush1.msra.mxu0 0.0
    %2468 = vmatprep.subr.mxu0 0.0
    %2469 = vmatpush1.msra.mxu0 0.0
    %2470 = vmatprep.subr.mxu0 0.0
    %2471 = vmatpush1.msra.mxu0 0.0
    %2472 = vmatprep.subr.mxu0 0.0
    %2473 = vmatpush1.msra.mxu0 0.0
    %2474 = vmatprep.subr.mxu0 0.0
    %2475 = vmatpush1.msra.mxu0 0.0
    %2476 = vmatprep.subr.mxu0 0.0
    %2477 = vmatpush1.msra.mxu0 0.0
    %2478 = vmatprep.subr.mxu0 0.0
    %2479 = vmatpush1.msra.mxu0 0.0
    %2480 = vmatprep.subr.mxu0 0.0
    %2481 = vmatpush1.msra.mxu0 0.0
    %2482 = vmatprep.subr.mxu0 0.0
    %2483 = vmatpush1.msra.mxu0 0.0
    %2484 = vmatprep.subr.mxu0 0.0
    %2485 = vmatpush1.msra.mxu0 0.0
    %2486 = vmatprep.subr.mxu0 0.0
    %2487 = vmatpush1.msra.mxu0 0.0
    %2488 = vmatprep.mubr.f32.mxu0 0.0
    %2489 = vmatmul.mubr.f32.gmra.mrb[0].mxu0 %v2043
    %v2490 = vpop.f32.mrb[0].mxu0
    %v2491 = vadd.f32 %v627, %v2490
    %v2492 = vpop.f32.mrb[0].mxu0
    %2493 = vdwg.mxu0
    %v2494 = vadd.f32 %v2279, %v2420
    %v2495 = vxor.u32 %v2494, 2147483648
    %v2496 = vmul.f32 %v2495, 1.442695
    %v2497 = vpow.pop %v2496
    %v2498 = vadd.f32 %v2497, 1.0
    %v2499 = vrcp.pop %v2498
    %v2500 = vmul.f32 1.0, %v2499
    %v2501 = vadd.f32 %v2281, %v2422
    %v2502 = vxor.u32 %v2501, 2147483648
    %v2503 = vmul.f32 %v2502, 1.442695
    %v2504 = vpow.pop %v2503
    %v2505 = vadd.f32 %v2504, 1.0
    %v2506 = vrcp.pop %v2505
    %v2507 = vmul.f32 1.0, %v2506
    %v2508 = vmul.f32 %v2500, %v2491
    %v2509 = vadd.f32 %v2350, %v2508
    %v2510 = vtanh.pop %v2509
    %v2511 = vsub.f32 1.0, %v2507
    %v2512 = vmul.f32 %v2511, %v2510
    %v2513 = vmul.f32 %v2507, %v2043
    %v2514 = vadd.f32 %v2512, %v2513
    %s2515 = smul.u32 4, 3
    %s2516 = smul.addr %s2515, 8
    %s2517 = scalar_lea.vmem [#allocation2], %s2516
    %v2518 = vld [vmem:[%s2517] sm:$0xff]
    %v2519 = vld [vmem:[%s2517 + $0x8] sm:$0xff]
    %v2520 = vld [vmem:[%s2517 + $0x10] sm:$0xff]
    %2521 = vmatprep.subr.mxu0 %v437
    %2522 = vmatpush1.msra.mxu0 %v436
    %2523 = vmatprep.subr.mxu0 %v440
    %2524 = vmatpush1.msra.mxu0 %v439
    %2525 = vmatprep.subr.mxu0 %v443
    %2526 = vmatpush1.msra.mxu0 %v442
    %2527 = vmatprep.subr.mxu0 %v446
    %2528 = vmatpush1.msra.mxu0 %v445
    %2529 = vmatprep.subr.mxu0 %v449
    %2530 = vmatpush1.msra.mxu0 %v448
    %2531 = vmatprep.subr.mxu0 %v452
    %2532 = vmatpush1.msra.mxu0 %v451
    %2533 = vmatprep.subr.mxu0 %v455
    %2534 = vmatpush1.msra.mxu0 %v454
    %2535 = vmatprep.subr.mxu0 %v458
    %2536 = vmatpush1.msra.mxu0 %v457
    %2537 = vmatprep.subr.mxu0 %v461
    %2538 = vmatpush1.msra.mxu0 %v460
    %2539 = vmatprep.subr.mxu0 %v464
    %2540 = vmatpush1.msra.mxu0 %v463
    %2541 = vmatprep.subr.mxu0 %v467
    %2542 = vmatpush1.msra.mxu0 %v466
    %2543 = vmatprep.subr.mxu0 %v470
    %2544 = vmatpush1.msra.mxu0 %v469
    %2545 = vmatprep.subr.mxu0 %v473
    %2546 = vmatpush1.msra.mxu0 %v472
    %2547 = vmatprep.subr.mxu0 %v476
    %2548 = vmatpush1.msra.mxu0 %v475
    %2549 = vmatprep.subr.mxu0 %v479
    %2550 = vmatpush1.msra.mxu0 %v478
    %2551 = vmatprep.subr.mxu0 %v482
    %2552 = vmatpush1.msra.mxu0 %v481
    %2553 = vmatprep.subr.mxu0 0.0
    %2554 = vmatpush1.msra.mxu0 0.0
    %2555 = vmatprep.subr.mxu0 0.0
    %2556 = vmatpush1.msra.mxu0 0.0
    %2557 = vmatprep.subr.mxu0 0.0
    %2558 = vmatpush1.msra.mxu0 0.0
    %2559 = vmatprep.subr.mxu0 0.0
    %2560 = vmatpush1.msra.mxu0 0.0
    %2561 = vmatprep.subr.mxu0 0.0
    %2562 = vmatpush1.msra.mxu0 0.0
    %2563 = vmatprep.subr.mxu0 0.0
    %2564 = vmatpush1.msra.mxu0 0.0
    %2565 = vmatprep.subr.mxu0 0.0
    %2566 = vmatpush1.msra.mxu0 0.0
    %2567 = vmatprep.subr.mxu0 0.0
    %2568 = vmatpush1.msra.mxu0 0.0
    %2569 = vmatprep.subr.mxu0 0.0
    %2570 = vmatpush1.msra.mxu0 0.0
    %2571 = vmatprep.subr.mxu0 0.0
    %2572 = vmatpush1.msra.mxu0 0.0
    %2573 = vmatprep.subr.mxu0 0.0
    %2574 = vmatpush1.msra.mxu0 0.0
    %2575 = vmatprep.subr.mxu0 0.0
    %2576 = vmatpush1.msra.mxu0 0.0
    %2577 = vmatprep.subr.mxu0 0.0
    %2578 = vmatpush1.msra.mxu0 0.0
    %2579 = vmatprep.subr.mxu0 0.0
    %2580 = vmatpush1.msra.mxu0 0.0
    %2581 = vmatprep.subr.mxu0 0.0
    %2582 = vmatpush1.msra.mxu0 0.0
    %2583 = vmatprep.subr.mxu0 0.0
    %2584 = vmatpush1.msra.mxu0 0.0
    %2585 = vmatprep.mubr.f32.mxu0 0.0
    %2586 = vmatmul.mubr.f32.gmra.mrb[0].mxu0 %v2211
    %v2587 = vpop.f32.mrb[0].mxu0
    %v2588 = vadd.f32 %v585, %v2587
    %v2589 = vpop.f32.mrb[0].mxu0
    %v2590 = vadd.f32 %v589, %v2589
    %2591 = vdwg.mxu0
    %2592 = vmatprep.subr.mxu0 0.0
    %2593 = vmatpush1.msra.mxu0 %v438
    %2594 = vmatprep.subr.mxu0 0.0
    %2595 = vmatpush1.msra.mxu0 %v441
    %2596 = vmatprep.subr.mxu0 0.0
    %2597 = vmatpush1.msra.mxu0 %v444
    %2598 = vmatprep.subr.mxu0 0.0
    %2599 = vmatpush1.msra.mxu0 %v447
    %2600 = vmatprep.subr.mxu0 0.0
    %2601 = vmatpush1.msra.mxu0 %v450
    %2602 = vmatprep.subr.mxu0 0.0
    %2603 = vmatpush1.msra.mxu0 %v453
    %2604 = vmatprep.subr.mxu0 0.0
    %2605 = vmatpush1.msra.mxu0 %v456
    %2606 = vmatprep.subr.mxu0 0.0
    %2607 = vmatpush1.msra.mxu0 %v459
    %2608 = vmatprep.subr.mxu0 0.0
    %2609 = vmatpush1.msra.mxu0 %v462
    %2610 = vmatprep.subr.mxu0 0.0
    %2611 = vmatpush1.msra.mxu0 %v465
    %2612 = vmatprep.subr.mxu0 0.0
    %2613 = vmatpush1.msra.mxu0 %v468
    %2614 = vmatprep.subr.mxu0 0.0
    %2615 = vmatpush1.msra.mxu0 %v471
    %2616 = vmatprep.subr.mxu0 0.0
    %2617 = vmatpush1.msra.mxu0 %v474
    %2618 = vmatprep.subr.mxu0 0.0
    %2619 = vmatpush1.msra.mxu0 %v477
    %2620 = vmatprep.subr.mxu0 0.0
    %2621 = vmatpush1.msra.mxu0 %v480
    %2622 = vmatprep.subr.mxu0 0.0
    %2623 = vmatpush1.msra.mxu0 %v483
    %2624 = vmatprep.subr.mxu0 0.0
    %2625 = vmatpush1.msra.mxu0 0.0
    %2626 = vmatprep.subr.mxu0 0.0
    %2627 = vmatpush1.msra.mxu0 0.0
    %2628 = vmatprep.subr.mxu0 0.0
    %2629 = vmatpush1.msra.mxu0 0.0
    %2630 = vmatprep.subr.mxu0 0.0
    %2631 = vmatpush1.msra.mxu0 0.0
    %2632 = vmatprep.subr.mxu0 0.0
    %2633 = vmatpush1.msra.mxu0 0.0
    %2634 = vmatprep.subr.mxu0 0.0
    %2635 = vmatpush1.msra.mxu0 0.0
    %2636 = vmatprep.subr.mxu0 0.0
    %2637 = vmatpush1.msra.mxu0 0.0
    %2638 = vmatprep.subr.mxu0 0.0
    %2639 = vmatpush1.msra.mxu0 0.0
    %2640 = vmatprep.subr.mxu0 0.0
    %2641 = vmatpush1.msra.mxu0 0.0
    %2642 = vmatprep.subr.mxu0 0.0
    %2643 = vmatpush1.msra.mxu0 0.0
    %2644 = vmatprep.subr.mxu0 0.0
    %2645 = vmatpush1.msra.mxu0 0.0
    %2646 = vmatprep.subr.mxu0 0.0
    %2647 = vmatpush1.msra.mxu0 0.0
    %2648 = vmatprep.subr.mxu0 0.0
    %2649 = vmatpush1.msra.mxu0 0.0
    %2650 = vmatprep.subr.mxu0 0.0
    %2651 = vmatpush1.msra.mxu0 0.0
    %2652 = vmatprep.subr.mxu0 0.0
    %2653 = vmatpush1.msra.mxu0 0.0
    %2654 = vmatprep.subr.mxu0 0.0
    %2655 = vmatpush1.msra.mxu0 0.0
    %2656 = vmatprep.mubr.f32.mxu0 0.0
    %2657 = vmatmul.mubr.f32.gmra.mrb[0].mxu0 %v2211
    %v2658 = vpop.f32.mrb[0].mxu0
    %v2659 = vadd.f32 %v593, %v2658
    %v2660 = vpop.f32.mrb[0].mxu0
    %2661 = vdwg.mxu0
    %v2662 = vadd.f32 %v2518, %v2588
    %v2663 = vxor.u32 %v2662, 2147483648
    %v2664 = vmul.f32 %v2663, 1.442695
    %v2665 = vpow.pop %v2664
    %v2666 = vadd.f32 %v2665, 1.0
    %v2667 = vrcp.pop %v2666
    %v2668 = vmul.f32 1.0, %v2667
    %v2669 = vadd.f32 %v2519, %v2590
    %v2670 = vxor.u32 %v2669, 2147483648
    %v2671 = vmul.f32 %v2670, 1.442695
    %v2672 = vpow.pop %v2671
    %v2673 = vadd.f32 %v2672, 1.0
    %v2674 = vrcp.pop %v2673
    %v2675 = vmul.f32 1.0, %v2674
    %v2676 = vmul.f32 %v2668, %v2659
    %v2677 = vadd.f32 %v2520, %v2676
    %v2678 = vtanh.pop %v2677
    %v2679 = vsub.f32 1.0, %v2675
    %v2680 = vmul.f32 %v2679, %v2678
    %v2681 = vmul.f32 %v2675, %v2211
    %v2682 = vadd.f32 %v2680, %v2681
    %2683 = vmatprep.subr.mxu0 %v485
    %2684 = vmatpush1.msra.mxu0 %v484
    %2685 = vmatprep.subr.mxu0 %v488
    %2686 = vmatpush1.msra.mxu0 %v487
    %2687 = vmatprep.subr.mxu0 %v491
    %2688 = vmatpush1.msra.mxu0 %v490
    %2689 = vmatprep.subr.mxu0 %v494
    %2690 = vmatpush1.msra.mxu0 %v493
    %2691 = vmatprep.subr.mxu0 %v497
    %2692 = vmatpush1.msra.mxu0 %v496
    %2693 = vmatprep.subr.mxu0 %v500
    %2694 = vmatpush1.msra.mxu0 %v499
    %2695 = vmatprep.subr.mxu0 %v503
    %2696 = vmatpush1.msra.mxu0 %v502
    %2697 = vmatprep.subr.mxu0 %v506
    %2698 = vmatpush1.msra.mxu0 %v505
    %2699 = vmatprep.subr.mxu0 %v509
    %2700 = vmatpush1.msra.mxu0 %v508
    %2701 = vmatprep.subr.mxu0 %v512
    %2702 = vmatpush1.msra.mxu0 %v511
    %2703 = vmatprep.subr.mxu0 %v515
    %2704 = vmatpush1.msra.mxu0 %v514
    %2705 = vmatprep.subr.mxu0 %v518
    %2706 = vmatpush1.msra.mxu0 %v517
    %2707 = vmatprep.subr.mxu0 %v521
    %2708 = vmatpush1.msra.mxu0 %v520
    %2709 = vmatprep.subr.mxu0 %v524
    %2710 = vmatpush1.msra.mxu0 %v523
    %2711 = vmatprep.subr.mxu0 %v527
    %2712 = vmatpush1.msra.mxu0 %v526
    %2713 = vmatprep.subr.mxu0 %v530
    %2714 = vmatpush1.msra.mxu0 %v529
    %2715 = vmatprep.subr.mxu0 0.0
    %2716 = vmatpush1.msra.mxu0 0.0
    %2717 = vmatprep.subr.mxu0 0.0
    %2718 = vmatpush1.msra.mxu0 0.0
    %2719 = vmatprep.subr.mxu0 0.0
    %2720 = vmatpush1.msra.mxu0 0.0
    %2721 = vmatprep.subr.mxu0 0.0
    %2722 = vmatpush1.msra.mxu0 0.0
    %2723 = vmatprep.subr.mxu0 0.0
    %2724 = vmatpush1.msra.mxu0 0.0
    %2725 = vmatprep.subr.mxu0 0.0
    %2726 = vmatpush1.msra.mxu0 0.0
    %2727 = vmatprep.subr.mxu0 0.0
    %2728 = vmatpush1.msra.mxu0 0.0
    %2729 = vmatprep.subr.mxu0 0.0
    %2730 = vmatpush1.msra.mxu0 0.0
    %2731 = vmatprep.subr.mxu0 0.0
    %2732 = vmatpush1.msra.mxu0 0.0
    %2733 = vmatprep.subr.mxu0 0.0
    %2734 = vmatpush1.msra.mxu0 0.0
    %2735 = vmatprep.subr.mxu0 0.0
    %2736 = vmatpush1.msra.mxu0 0.0
    %2737 = vmatprep.subr.mxu0 0.0
    %2738 = vmatpush1.msra.mxu0 0.0
    %2739 = vmatprep.subr.mxu0 0.0
    %2740 = vmatpush1.msra.mxu0 0.0
    %2741 = vmatprep.subr.mxu0 0.0
    %2742 = vmatpush1.msra.mxu0 0.0
    %2743 = vmatprep.subr.mxu0 0.0
    %2744 = vmatpush1.msra.mxu0 0.0
    %2745 = vmatprep.subr.mxu0 0.0
    %2746 = vmatpush1.msra.mxu0 0.0
    %2747 = vmatprep.mubr.f32.mxu0 0.0
    %2748 = vmatmul.mubr.f32.gmra.mrb[0].mxu0 %v2682
    %v2749 = vpop.f32.mrb[0].mxu0
    %v2750 = vadd.f32 %v602, %v2749
    %v2751 = vpop.f32.mrb[0].mxu0
    %v2752 = vadd.f32 %v606, %v2751
    %2753 = vdwg.mxu0
    %2754 = vmatprep.subr.mxu0 0.0
    %2755 = vmatpush1.msra.mxu0 %v486
    %2756 = vmatprep.subr.mxu0 0.0
    %2757 = vmatpush1.msra.mxu0 %v489
    %2758 = vmatprep.subr.mxu0 0.0
    %2759 = vmatpush1.msra.mxu0 %v492
    %2760 = vmatprep.subr.mxu0 0.0
    %2761 = vmatpush1.msra.mxu0 %v495
    %2762 = vmatprep.subr.mxu0 0.0
    %2763 = vmatpush1.msra.mxu0 %v498
    %2764 = vmatprep.subr.mxu0 0.0
    %2765 = vmatpush1.msra.mxu0 %v501
    %2766 = vmatprep.subr.mxu0 0.0
    %2767 = vmatpush1.msra.mxu0 %v504
    %2768 = vmatprep.subr.mxu0 0.0
    %2769 = vmatpush1.msra.mxu0 %v507
    %2770 = vmatprep.subr.mxu0 0.0
    %2771 = vmatpush1.msra.mxu0 %v510
    %2772 = vmatprep.subr.mxu0 0.0
    %2773 = vmatpush1.msra.mxu0 %v513
    %2774 = vmatprep.subr.mxu0 0.0
    %2775 = vmatpush1.msra.mxu0 %v516
    %2776 = vmatprep.subr.mxu0 0.0
    %2777 = vmatpush1.msra.mxu0 %v519
    %2778 = vmatprep.subr.mxu0 0.0
    %2779 = vmatpush1.msra.mxu0 %v522
    %2780 = vmatprep.subr.mxu0 0.0
    %2781 = vmatpush1.msra.mxu0 %v525
    %2782 = vmatprep.subr.mxu0 0.0
    %2783 = vmatpush1.msra.mxu0 %v528
    %2784 = vmatprep.subr.mxu0 0.0
    %2785 = vmatpush1.msra.mxu0 %v531
    %2786 = vmatprep.subr.mxu0 0.0
    %2787 = vmatpush1.msra.mxu0 0.0
    %2788 = vmatprep.subr.mxu0 0.0
    %2789 = vmatpush1.msra.mxu0 0.0
    %2790 = vmatprep.subr.mxu0 0.0
    %2791 = vmatpush1.msra.mxu0 0.0
    %2792 = vmatprep.subr.mxu0 0.0
    %2793 = vmatpush1.msra.mxu0 0.0
    %2794 = vmatprep.subr.mxu0 0.0
    %2795 = vmatpush1.msra.mxu0 0.0
    %2796 = vmatprep.subr.mxu0 0.0
    %2797 = vmatpush1.msra.mxu0 0.0
    %2798 = vmatprep.subr.mxu0 0.0
    %2799 = vmatpush1.msra.mxu0 0.0
    %2800 = vmatprep.subr.mxu0 0.0
    %2801 = vmatpush1.msra.mxu0 0.0
    %2802 = vmatprep.subr.mxu0 0.0
    %2803 = vmatpush1.msra.mxu0 0.0
    %2804 = vmatprep.subr.mxu0 0.0
    %2805 = vmatpush1.msra.mxu0 0.0
    %2806 = vmatprep.subr.mxu0 0.0
    %2807 = vmatpush1.msra.mxu0 0.0
    %2808 = vmatprep.subr.mxu0 0.0
    %2809 = vmatpush1.msra.mxu0 0.0
    %2810 = vmatprep.subr.mxu0 0.0
    %2811 = vmatpush1.msra.mxu0 0.0
    %2812 = vmatprep.subr.mxu0 0.0
    %2813 = vmatpush1.msra.mxu0 0.0
    %2814 = vmatprep.subr.mxu0 0.0
    %2815 = vmatpush1.msra.mxu0 0.0
    %2816 = vmatprep.subr.mxu0 0.0
    %2817 = vmatpush1.msra.mxu0 0.0
    %2818 = vmatprep.mubr.f32.mxu0 0.0
    %2819 = vmatmul.mubr.f32.gmra.mrb[0].mxu0 %v2682
    %v2820 = vpop.f32.mrb[0].mxu0
    %v2821 = vadd.f32 %v610, %v2820
    %v2822 = vpop.f32.mrb[0].mxu0
    %2823 = vdwg.mxu0
    %2824 = vmatprep.subr.mxu0 %v533
    %2825 = vmatpush1.msra.mxu0 %v532
    %2826 = vmatprep.subr.mxu0 %v536
    %2827 = vmatpush1.msra.mxu0 %v535
    %2828 = vmatprep.subr.mxu0 %v539
    %2829 = vmatpush1.msra.mxu0 %v538
    %2830 = vmatprep.subr.mxu0 %v542
    %2831 = vmatpush1.msra.mxu0 %v541
    %2832 = vmatprep.subr.mxu0 %v545
    %2833 = vmatpush1.msra.mxu0 %v544
    %2834 = vmatprep.subr.mxu0 %v548
    %2835 = vmatpush1.msra.mxu0 %v547
    %2836 = vmatprep.subr.mxu0 %v551
    %2837 = vmatpush1.msra.mxu0 %v550
    %2838 = vmatprep.subr.mxu0 %v554
    %2839 = vmatpush1.msra.mxu0 %v553
    %2840 = vmatprep.subr.mxu0 %v557
    %2841 = vmatpush1.msra.mxu0 %v556
    %2842 = vmatprep.subr.mxu0 %v560
    %2843 = vmatpush1.msra.mxu0 %v559
    %2844 = vmatprep.subr.mxu0 %v563
    %2845 = vmatpush1.msra.mxu0 %v562
    %2846 = vmatprep.subr.mxu0 %v566
    %2847 = vmatpush1.msra.mxu0 %v565
    %2848 = vmatprep.subr.mxu0 %v569
    %2849 = vmatpush1.msra.mxu0 %v568
    %2850 = vmatprep.subr.mxu0 %v572
    %2851 = vmatpush1.msra.mxu0 %v571
    %2852 = vmatprep.subr.mxu0 %v575
    %2853 = vmatpush1.msra.mxu0 %v574
    %2854 = vmatprep.subr.mxu0 %v578
    %2855 = vmatpush1.msra.mxu0 %v577
    %2856 = vmatprep.subr.mxu0 0.0
    %2857 = vmatpush1.msra.mxu0 0.0
    %2858 = vmatprep.subr.mxu0 0.0
    %2859 = vmatpush1.msra.mxu0 0.0
    %2860 = vmatprep.subr.mxu0 0.0
    %2861 = vmatpush1.msra.mxu0 0.0
    %2862 = vmatprep.subr.mxu0 0.0
    %2863 = vmatpush1.msra.mxu0 0.0
    %2864 = vmatprep.subr.mxu0 0.0
    %2865 = vmatpush1.msra.mxu0 0.0
    %2866 = vmatprep.subr.mxu0 0.0
    %2867 = vmatpush1.msra.mxu0 0.0
    %2868 = vmatprep.subr.mxu0 0.0
    %2869 = vmatpush1.msra.mxu0 0.0
    %2870 = vmatprep.subr.mxu0 0.0
    %2871 = vmatpush1.msra.mxu0 0.0
    %2872 = vmatprep.subr.mxu0 0.0
    %2873 = vmatpush1.msra.mxu0 0.0
    %2874 = vmatprep.subr.mxu0 0.0
    %2875 = vmatpush1.msra.mxu0 0.0
    %2876 = vmatprep.subr.mxu0 0.0
    %2877 = vmatpush1.msra.mxu0 0.0
    %2878 = vmatprep.subr.mxu0 0.0
    %2879 = vmatpush1.msra.mxu0 0.0
    %2880 = vmatprep.subr.mxu0 0.0
    %2881 = vmatpush1.msra.mxu0 0.0
    %2882 = vmatprep.subr.mxu0 0.0
    %2883 = vmatpush1.msra.mxu0 0.0
    %2884 = vmatprep.subr.mxu0 0.0
    %2885 = vmatpush1.msra.mxu0 0.0
    %2886 = vmatprep.subr.mxu0 0.0
    %2887 = vmatpush1.msra.mxu0 0.0
    %2888 = vmatprep.mubr.f32.mxu0 0.0
    %2889 = vmatmul.mubr.f32.gmra.mrb[0].mxu0 %v2514
    %v2890 = vpop.f32.mrb[0].mxu0
    %v2891 = vadd.f32 %v619, %v2890
    %v2892 = vpop.f32.mrb[0].mxu0
    %v2893 = vadd.f32 %v623, %v2892
    %2894 = vdwg.mxu0
    %2895 = vmatprep.subr.mxu0 0.0
    %2896 = vmatpush1.msra.mxu0 %v534
    %2897 = vmatprep.subr.mxu0 0.0
    %2898 = vmatpush1.msra.mxu0 %v537
    %2899 = vmatprep.subr.mxu0 0.0
    %2900 = vmatpush1.msra.mxu0 %v540
    %2901 = vmatprep.subr.mxu0 0.0
    %2902 = vmatpush1.msra.mxu0 %v543
    %2903 = vmatprep.subr.mxu0 0.0
    %2904 = vmatpush1.msra.mxu0 %v546
    %2905 = vmatprep.subr.mxu0 0.0
    %2906 = vmatpush1.msra.mxu0 %v549
    %2907 = vmatprep.subr.mxu0 0.0
    %2908 = vmatpush1.msra.mxu0 %v552
    %2909 = vmatprep.subr.mxu0 0.0
    %2910 = vmatpush1.msra.mxu0 %v555
    %2911 = vmatprep.subr.mxu0 0.0
    %2912 = vmatpush1.msra.mxu0 %v558
    %2913 = vmatprep.subr.mxu0 0.0
    %2914 = vmatpush1.msra.mxu0 %v561
    %2915 = vmatprep.subr.mxu0 0.0
    %2916 = vmatpush1.msra.mxu0 %v564
    %2917 = vmatprep.subr.mxu0 0.0
    %2918 = vmatpush1.msra.mxu0 %v567
    %2919 = vmatprep.subr.mxu0 0.0
    %2920 = vmatpush1.msra.mxu0 %v570
    %2921 = vmatprep.subr.mxu0 0.0
    %2922 = vmatpush1.msra.mxu0 %v573
    %2923 = vmatprep.subr.mxu0 0.0
    %2924 = vmatpush1.msra.mxu0 %v576
    %2925 = vmatprep.subr.mxu0 0.0
    %2926 = vmatpush1.msra.mxu0 %v579
    %2927 = vmatprep.subr.mxu0 0.0
    %2928 = vmatpush1.msra.mxu0 0.0
    %2929 = vmatprep.subr.mxu0 0.0
    %2930 = vmatpush1.msra.mxu0 0.0
    %2931 = vmatprep.subr.mxu0 0.0
    %2932 = vmatpush1.msra.mxu0 0.0
    %2933 = vmatprep.subr.mxu0 0.0
    %2934 = vmatpush1.msra.mxu0 0.0
    %2935 = vmatprep.subr.mxu0 0.0
    %2936 = vmatpush1.msra.mxu0 0.0
    %2937 = vmatprep.subr.mxu0 0.0
    %2938 = vmatpush1.msra.mxu0 0.0
    %2939 = vmatprep.subr.mxu0 0.0
    %2940 = vmatpush1.msra.mxu0 0.0
    %2941 = vmatprep.subr.mxu0 0.0
    %2942 = vmatpush1.msra.mxu0 0.0
    %2943 = vmatprep.subr.mxu0 0.0
    %2944 = vmatpush1.msra.mxu0 0.0
    %2945 = vmatprep.subr.mxu0 0.0
    %2946 = vmatpush1.msra.mxu0 0.0
    %2947 = vmatprep.subr.mxu0 0.0
    %2948 = vmatpush1.msra.mxu0 0.0
    %2949 = vmatprep.subr.mxu0 0.0
    %2950 = vmatpush1.msra.mxu0 0.0
    %2951 = vmatprep.subr.mxu0 0.0
    %2952 = vmatpush1.msra.mxu0 0.0
    %2953 = vmatprep.subr.mxu0 0.0
    %2954 = vmatpush1.msra.mxu0 0.0
    %2955 = vmatprep.subr.mxu0 0.0
    %2956 = vmatpush1.msra.mxu0 0.0
    %2957 = vmatprep.subr.mxu0 0.0
    %2958 = vmatpush1.msra.mxu0 0.0
    %2959 = vmatprep.mubr.f32.mxu0 0.0
    %2960 = vmatmul.mubr.f32.gmra.mrb[0].mxu0 %v2514
    %v2961 = vpop.f32.mrb[0].mxu0
    %v2962 = vadd.f32 %v627, %v2961
    %v2963 = vpop.f32.mrb[0].mxu0
    %2964 = vdwg.mxu0
    %v2965 = vadd.f32 %v2750, %v2891
    %v2966 = vxor.u32 %v2965, 2147483648
    %v2967 = vmul.f32 %v2966, 1.442695
    %v2968 = vpow.pop %v2967
    %v2969 = vadd.f32 %v2968, 1.0
    %v2970 = vrcp.pop %v2969
    %v2971 = vmul.f32 1.0, %v2970
    %v2972 = vadd.f32 %v2752, %v2893
    %v2973 = vxor.u32 %v2972, 2147483648
    %v2974 = vmul.f32 %v2973, 1.442695
    %v2975 = vpow.pop %v2974
    %v2976 = vadd.f32 %v2975, 1.0
    %v2977 = vrcp.pop %v2976
    %v2978 = vmul.f32 1.0, %v2977
    %v2979 = vmul.f32 %v2971, %v2962
    %v2980 = vadd.f32 %v2821, %v2979
    %v2981 = vtanh.pop %v2980
    %v2982 = vsub.f32 1.0, %v2978
    %v2983 = vmul.f32 %v2982, %v2981
    %v2984 = vmul.f32 %v2978, %v2514
    %v2985 = vadd.f32 %v2983, %v2984
    %s2986 = smul.u32 5, 3
    %s2987 = smul.addr %s2986, 8
    %s2988 = scalar_lea.vmem [#allocation2], %s2987
    %v2989 = vld [vmem:[%s2988] sm:$0xff]
    %v2990 = vld [vmem:[%s2988 + $0x8] sm:$0xff]
    %v2991 = vld [vmem:[%s2988 + $0x10] sm:$0xff]
    %2992 = vmatprep.subr.mxu0 %v437
    %2993 = vmatpush1.msra.mxu0 %v436
    %2994 = vmatprep.subr.mxu0 %v440
    %2995 = vmatpush1.msra.mxu0 %v439
    %2996 = vmatprep.subr.mxu0 %v443
    %2997 = vmatpush1.msra.mxu0 %v442
    %2998 = vmatprep.subr.mxu0 %v446
    %2999 = vmatpush1.msra.mxu0 %v445
    %3000 = vmatprep.subr.mxu0 %v449
    %3001 = vmatpush1.msra.mxu0 %v448
    %3002 = vmatprep.subr.mxu0 %v452
    %3003 = vmatpush1.msra.mxu0 %v451
    %3004 = vmatprep.subr.mxu0 %v455
    %3005 = vmatpush1.msra.mxu0 %v454
    %3006 = vmatprep.subr.mxu0 %v458
    %3007 = vmatpush1.msra.mxu0 %v457
    %3008 = vmatprep.subr.mxu0 %v461
    %3009 = vmatpush1.msra.mxu0 %v460
    %3010 = vmatprep.subr.mxu0 %v464
    %3011 = vmatpush1.msra.mxu0 %v463
    %3012 = vmatprep.subr.mxu0 %v467
    %3013 = vmatpush1.msra.mxu0 %v466
    %3014 = vmatprep.subr.mxu0 %v470
    %3015 = vmatpush1.msra.mxu0 %v469
    %3016 = vmatprep.subr.mxu0 %v473
    %3017 = vmatpush1.msra.mxu0 %v472
    %3018 = vmatprep.subr.mxu0 %v476
    %3019 = vmatpush1.msra.mxu0 %v475
    %3020 = vmatprep.subr.mxu0 %v479
    %3021 = vmatpush1.msra.mxu0 %v478
    %3022 = vmatprep.subr.mxu0 %v482
    %3023 = vmatpush1.msra.mxu0 %v481
    %3024 = vmatprep.subr.mxu0 0.0
    %3025 = vmatpush1.msra.mxu0 0.0
    %3026 = vmatprep.subr.mxu0 0.0
    %3027 = vmatpush1.msra.mxu0 0.0
    %3028 = vmatprep.subr.mxu0 0.0
    %3029 = vmatpush1.msra.mxu0 0.0
    %3030 = vmatprep.subr.mxu0 0.0
    %3031 = vmatpush1.msra.mxu0 0.0
    %3032 = vmatprep.subr.mxu0 0.0
    %3033 = vmatpush1.msra.mxu0 0.0
    %3034 = vmatprep.subr.mxu0 0.0
    %3035 = vmatpush1.msra.mxu0 0.0
    %3036 = vmatprep.subr.mxu0 0.0
    %3037 = vmatpush1.msra.mxu0 0.0
    %3038 = vmatprep.subr.mxu0 0.0
    %3039 = vmatpush1.msra.mxu0 0.0
    %3040 = vmatprep.subr.mxu0 0.0
    %3041 = vmatpush1.msra.mxu0 0.0
    %3042 = vmatprep.subr.mxu0 0.0
    %3043 = vmatpush1.msra.mxu0 0.0
    %3044 = vmatprep.subr.mxu0 0.0
    %3045 = vmatpush1.msra.mxu0 0.0
    %3046 = vmatprep.subr.mxu0 0.0
    %3047 = vmatpush1.msra.mxu0 0.0
    %3048 = vmatprep.subr.mxu0 0.0
    %3049 = vmatpush1.msra.mxu0 0.0
    %3050 = vmatprep.subr.mxu0 0.0
    %3051 = vmatpush1.msra.mxu0 0.0
    %3052 = vmatprep.subr.mxu0 0.0
    %3053 = vmatpush1.msra.mxu0 0.0
    %3054 = vmatprep.subr.mxu0 0.0
    %3055 = vmatpush1.msra.mxu0 0.0
    %3056 = vmatprep.mubr.f32.mxu0 0.0
    %3057 = vmatmul.mubr.f32.gmra.mrb[0].mxu0 %v2682
    %v3058 = vpop.f32.mrb[0].mxu0
    %v3059 = vadd.f32 %v585, %v3058
    %v3060 = vpop.f32.mrb[0].mxu0
    %v3061 = vadd.f32 %v589, %v3060
    %3062 = vdwg.mxu0
    %3063 = vmatprep.subr.mxu0 0.0
    %3064 = vmatpush1.msra.mxu0 %v438
    %3065 = vmatprep.subr.mxu0 0.0
    %3066 = vmatpush1.msra.mxu0 %v441
    %3067 = vmatprep.subr.mxu0 0.0
    %3068 = vmatpush1.msra.mxu0 %v444
    %3069 = vmatprep.subr.mxu0 0.0
    %3070 = vmatpush1.msra.mxu0 %v447
    %3071 = vmatprep.subr.mxu0 0.0
    %3072 = vmatpush1.msra.mxu0 %v450
    %3073 = vmatprep.subr.mxu0 0.0
    %3074 = vmatpush1.msra.mxu0 %v453
    %3075 = vmatprep.subr.mxu0 0.0
    %3076 = vmatpush1.msra.mxu0 %v456
    %3077 = vmatprep.subr.mxu0 0.0
    %3078 = vmatpush1.msra.mxu0 %v459
    %3079 = vmatprep.subr.mxu0 0.0
    %3080 = vmatpush1.msra.mxu0 %v462
    %3081 = vmatprep.subr.mxu0 0.0
    %3082 = vmatpush1.msra.mxu0 %v465
    %3083 = vmatprep.subr.mxu0 0.0
    %3084 = vmatpush1.msra.mxu0 %v468
    %3085 = vmatprep.subr.mxu0 0.0
    %3086 = vmatpush1.msra.mxu0 %v471
    %3087 = vmatprep.subr.mxu0 0.0
    %3088 = vmatpush1.msra.mxu0 %v474
    %3089 = vmatprep.subr.mxu0 0.0
    %3090 = vmatpush1.msra.mxu0 %v477
    %3091 = vmatprep.subr.mxu0 0.0
    %3092 = vmatpush1.msra.mxu0 %v480
    %3093 = vmatprep.subr.mxu0 0.0
    %3094 = vmatpush1.msra.mxu0 %v483
    %3095 = vmatprep.subr.mxu0 0.0
    %3096 = vmatpush1.msra.mxu0 0.0
    %3097 = vmatprep.subr.mxu0 0.0
    %3098 = vmatpush1.msra.mxu0 0.0
    %3099 = vmatprep.subr.mxu0 0.0
    %3100 = vmatpush1.msra.mxu0 0.0
    %3101 = vmatprep.subr.mxu0 0.0
    %3102 = vmatpush1.msra.mxu0 0.0
    %3103 = vmatprep.subr.mxu0 0.0
    %3104 = vmatpush1.msra.mxu0 0.0
    %3105 = vmatprep.subr.mxu0 0.0
    %3106 = vmatpush1.msra.mxu0 0.0
    %3107 = vmatprep.subr.mxu0 0.0
    %3108 = vmatpush1.msra.mxu0 0.0
    %3109 = vmatprep.subr.mxu0 0.0
    %3110 = vmatpush1.msra.mxu0 0.0
    %3111 = vmatprep.subr.mxu0 0.0
    %3112 = vmatpush1.msra.mxu0 0.0
    %3113 = vmatprep.subr.mxu0 0.0
    %3114 = vmatpush1.msra.mxu0 0.0
    %3115 = vmatprep.subr.mxu0 0.0
    %3116 = vmatpush1.msra.mxu0 0.0
    %3117 = vmatprep.subr.mxu0 0.0
    %3118 = vmatpush1.msra.mxu0 0.0
    %3119 = vmatprep.subr.mxu0 0.0
    %3120 = vmatpush1.msra.mxu0 0.0
    %3121 = vmatprep.subr.mxu0 0.0
    %3122 = vmatpush1.msra.mxu0 0.0
    %3123 = vmatprep.subr.mxu0 0.0
    %3124 = vmatpush1.msra.mxu0 0.0
    %3125 = vmatprep.subr.mxu0 0.0
    %3126 = vmatpush1.msra.mxu0 0.0
    %3127 = vmatprep.mubr.f32.mxu0 0.0
    %3128 = vmatmul.mubr.f32.gmra.mrb[0].mxu0 %v2682
    %v3129 = vpop.f32.mrb[0].mxu0
    %v3130 = vadd.f32 %v593, %v3129
    %v3131 = vpop.f32.mrb[0].mxu0
    %3132 = vdwg.mxu0
    %v3133 = vadd.f32 %v2989, %v3059
    %v3134 = vxor.u32 %v3133, 2147483648
    %v3135 = vmul.f32 %v3134, 1.442695
    %v3136 = vpow.pop %v3135
    %v3137 = vadd.f32 %v3136, 1.0
    %v3138 = vrcp.pop %v3137
    %v3139 = vmul.f32 1.0, %v3138
    %v3140 = vadd.f32 %v2990, %v3061
    %v3141 = vxor.u32 %v3140, 2147483648
    %v3142 = vmul.f32 %v3141, 1.442695
    %v3143 = vpow.pop %v3142
    %v3144 = vadd.f32 %v3143, 1.0
    %v3145 = vrcp.pop %v3144
    %v3146 = vmul.f32 1.0, %v3145
    %v3147 = vmul.f32 %v3139, %v3130
    %v3148 = vadd.f32 %v2991, %v3147
    %v3149 = vtanh.pop %v3148
    %v3150 = vsub.f32 1.0, %v3146
    %v3151 = vmul.f32 %v3150, %v3149
    %v3152 = vmul.f32 %v3146, %v2682
    %v3153 = vadd.f32 %v3151, %v3152
    %3154 = vmatprep.subr.mxu0 %v485
    %3155 = vmatpush1.msra.mxu0 %v484
    %3156 = vmatprep.subr.mxu0 %v488
    %3157 = vmatpush1.msra.mxu0 %v487
    %3158 = vmatprep.subr.mxu0 %v491
    %3159 = vmatpush1.msra.mxu0 %v490
    %3160 = vmatprep.subr.mxu0 %v494
    %3161 = vmatpush1.msra.mxu0 %v493
    %3162 = vmatprep.subr.mxu0 %v497
    %3163 = vmatpush1.msra.mxu0 %v496
    %3164 = vmatprep.subr.mxu0 %v500
    %3165 = vmatpush1.msra.mxu0 %v499
    %3166 = vmatprep.subr.mxu0 %v503
    %3167 = vmatpush1.msra.mxu0 %v502
    %3168 = vmatprep.subr.mxu0 %v506
    %3169 = vmatpush1.msra.mxu0 %v505
    %3170 = vmatprep.subr.mxu0 %v509
    %3171 = vmatpush1.msra.mxu0 %v508
    %3172 = vmatprep.subr.mxu0 %v512
    %3173 = vmatpush1.msra.mxu0 %v511
    %3174 = vmatprep.subr.mxu0 %v515
    %3175 = vmatpush1.msra.mxu0 %v514
    %3176 = vmatprep.subr.mxu0 %v518
    %3177 = vmatpush1.msra.mxu0 %v517
    %3178 = vmatprep.subr.mxu0 %v521
    %3179 = vmatpush1.msra.mxu0 %v520
    %3180 = vmatprep.subr.mxu0 %v524
    %3181 = vmatpush1.msra.mxu0 %v523
    %3182 = vmatprep.subr.mxu0 %v527
    %3183 = vmatpush1.msra.mxu0 %v526
    %3184 = vmatprep.subr.mxu0 %v530
    %3185 = vmatpush1.msra.mxu0 %v529
    %3186 = vmatprep.subr.mxu0 0.0
    %3187 = vmatpush1.msra.mxu0 0.0
    %3188 = vmatprep.subr.mxu0 0.0
    %3189 = vmatpush1.msra.mxu0 0.0
    %3190 = vmatprep.subr.mxu0 0.0
    %3191 = vmatpush1.msra.mxu0 0.0
    %3192 = vmatprep.subr.mxu0 0.0
    %3193 = vmatpush1.msra.mxu0 0.0
    %3194 = vmatprep.subr.mxu0 0.0
    %3195 = vmatpush1.msra.mxu0 0.0
    %3196 = vmatprep.subr.mxu0 0.0
    %3197 = vmatpush1.msra.mxu0 0.0
    %3198 = vmatprep.subr.mxu0 0.0
    %3199 = vmatpush1.msra.mxu0 0.0
    %3200 = vmatprep.subr.mxu0 0.0
    %3201 = vmatpush1.msra.mxu0 0.0
    %3202 = vmatprep.subr.mxu0 0.0
    %3203 = vmatpush1.msra.mxu0 0.0
    %3204 = vmatprep.subr.mxu0 0.0
    %3205 = vmatpush1.msra.mxu0 0.0
    %3206 = vmatprep.subr.mxu0 0.0
    %3207 = vmatpush1.msra.mxu0 0.0
    %3208 = vmatprep.subr.mxu0 0.0
    %3209 = vmatpush1.msra.mxu0 0.0
    %3210 = vmatprep.subr.mxu0 0.0
    %3211 = vmatpush1.msra.mxu0 0.0
    %3212 = vmatprep.subr.mxu0 0.0
    %3213 = vmatpush1.msra.mxu0 0.0
    %3214 = vmatprep.subr.mxu0 0.0
    %3215 = vmatpush1.msra.mxu0 0.0
    %3216 = vmatprep.subr.mxu0 0.0
    %3217 = vmatpush1.msra.mxu0 0.0
    %3218 = vmatprep.mubr.f32.mxu0 0.0
    %3219 = vmatmul.mubr.f32.gmra.mrb[0].mxu0 %v3153
    %v3220 = vpop.f32.mrb[0].mxu0
    %v3221 = vadd.f32 %v602, %v3220
    %v3222 = vpop.f32.mrb[0].mxu0
    %v3223 = vadd.f32 %v606, %v3222
    %3224 = vdwg.mxu0
    %3225 = vmatprep.subr.mxu0 0.0
    %3226 = vmatpush1.msra.mxu0 %v486
    %3227 = vmatprep.subr.mxu0 0.0
    %3228 = vmatpush1.msra.mxu0 %v489
    %3229 = vmatprep.subr.mxu0 0.0
    %3230 = vmatpush1.msra.mxu0 %v492
    %3231 = vmatprep.subr.mxu0 0.0
    %3232 = vmatpush1.msra.mxu0 %v495
    %3233 = vmatprep.subr.mxu0 0.0
    %3234 = vmatpush1.msra.mxu0 %v498
    %3235 = vmatprep.subr.mxu0 0.0
    %3236 = vmatpush1.msra.mxu0 %v501
    %3237 = vmatprep.subr.mxu0 0.0
    %3238 = vmatpush1.msra.mxu0 %v504
    %3239 = vmatprep.subr.mxu0 0.0
    %3240 = vmatpush1.msra.mxu0 %v507
    %3241 = vmatprep.subr.mxu0 0.0
    %3242 = vmatpush1.msra.mxu0 %v510
    %3243 = vmatprep.subr.mxu0 0.0
    %3244 = vmatpush1.msra.mxu0 %v513
    %3245 = vmatprep.subr.mxu0 0.0
    %3246 = vmatpush1.msra.mxu0 %v516
    %3247 = vmatprep.subr.mxu0 0.0
    %3248 = vmatpush1.msra.mxu0 %v519
    %3249 = vmatprep.subr.mxu0 0.0
    %3250 = vmatpush1.msra.mxu0 %v522
    %3251 = vmatprep.subr.mxu0 0.0
    %3252 = vmatpush1.msra.mxu0 %v525
    %3253 = vmatprep.subr.mxu0 0.0
    %3254 = vmatpush1.msra.mxu0 %v528
    %3255 = vmatprep.subr.mxu0 0.0
    %3256 = vmatpush1.msra.mxu0 %v531
    %3257 = vmatprep.subr.mxu0 0.0
    %3258 = vmatpush1.msra.mxu0 0.0
    %3259 = vmatprep.subr.mxu0 0.0
    %3260 = vmatpush1.msra.mxu0 0.0
    %3261 = vmatprep.subr.mxu0 0.0
    %3262 = vmatpush1.msra.mxu0 0.0
    %3263 = vmatprep.subr.mxu0 0.0
    %3264 = vmatpush1.msra.mxu0 0.0
    %3265 = vmatprep.subr.mxu0 0.0
    %3266 = vmatpush1.msra.mxu0 0.0
    %3267 = vmatprep.subr.mxu0 0.0
    %3268 = vmatpush1.msra.mxu0 0.0
    %3269 = vmatprep.subr.mxu0 0.0
    %3270 = vmatpush1.msra.mxu0 0.0
    %3271 = vmatprep.subr.mxu0 0.0
    %3272 = vmatpush1.msra.mxu0 0.0
    %3273 = vmatprep.subr.mxu0 0.0
    %3274 = vmatpush1.msra.mxu0 0.0
    %3275 = vmatprep.subr.mxu0 0.0
    %3276 = vmatpush1.msra.mxu0 0.0
    %3277 = vmatprep.subr.mxu0 0.0
    %3278 = vmatpush1.msra.mxu0 0.0
    %3279 = vmatprep.subr.mxu0 0.0
    %3280 = vmatpush1.msra.mxu0 0.0
    %3281 = vmatprep.subr.mxu0 0.0
    %3282 = vmatpush1.msra.mxu0 0.0
    %3283 = vmatprep.subr.mxu0 0.0
    %3284 = vmatpush1.msra.mxu0 0.0
    %3285 = vmatprep.subr.mxu0 0.0
    %3286 = vmatpush1.msra.mxu0 0.0
    %3287 = vmatprep.subr.mxu0 0.0
    %3288 = vmatpush1.msra.mxu0 0.0
    %3289 = vmatprep.mubr.f32.mxu0 0.0
    %3290 = vmatmul.mubr.f32.gmra.mrb[0].mxu0 %v3153
    %v3291 = vpop.f32.mrb[0].mxu0
    %v3292 = vadd.f32 %v610, %v3291
    %v3293 = vpop.f32.mrb[0].mxu0
    %3294 = vdwg.mxu0
    %3295 = vmatprep.subr.mxu0 %v533
    %3296 = vmatpush1.msra.mxu0 %v532
    %3297 = vmatprep.subr.mxu0 %v536
    %3298 = vmatpush1.msra.mxu0 %v535
    %3299 = vmatprep.subr.mxu0 %v539
    %3300 = vmatpush1.msra.mxu0 %v538
    %3301 = vmatprep.subr.mxu0 %v542
    %3302 = vmatpush1.msra.mxu0 %v541
    %3303 = vmatprep.subr.mxu0 %v545
    %3304 = vmatpush1.msra.mxu0 %v544
    %3305 = vmatprep.subr.mxu0 %v548
    %3306 = vmatpush1.msra.mxu0 %v547
    %3307 = vmatprep.subr.mxu0 %v551
    %3308 = vmatpush1.msra.mxu0 %v550
    %3309 = vmatprep.subr.mxu0 %v554
    %3310 = vmatpush1.msra.mxu0 %v553
    %3311 = vmatprep.subr.mxu0 %v557
    %3312 = vmatpush1.msra.mxu0 %v556
    %3313 = vmatprep.subr.mxu0 %v560
    %3314 = vmatpush1.msra.mxu0 %v559
    %3315 = vmatprep.subr.mxu0 %v563
    %3316 = vmatpush1.msra.mxu0 %v562
    %3317 = vmatprep.subr.mxu0 %v566
    %3318 = vmatpush1.msra.mxu0 %v565
    %3319 = vmatprep.subr.mxu0 %v569
    %3320 = vmatpush1.msra.mxu0 %v568
    %3321 = vmatprep.subr.mxu0 %v572
    %3322 = vmatpush1.msra.mxu0 %v571
    %3323 = vmatprep.subr.mxu0 %v575
    %3324 = vmatpush1.msra.mxu0 %v574
    %3325 = vmatprep.subr.mxu0 %v578
    %3326 = vmatpush1.msra.mxu0 %v577
    %3327 = vmatprep.subr.mxu0 0.0
    %3328 = vmatpush1.msra.mxu0 0.0
    %3329 = vmatprep.subr.mxu0 0.0
    %3330 = vmatpush1.msra.mxu0 0.0
    %3331 = vmatprep.subr.mxu0 0.0
    %3332 = vmatpush1.msra.mxu0 0.0
    %3333 = vmatprep.subr.mxu0 0.0
    %3334 = vmatpush1.msra.mxu0 0.0
    %3335 = vmatprep.subr.mxu0 0.0
    %3336 = vmatpush1.msra.mxu0 0.0
    %3337 = vmatprep.subr.mxu0 0.0
    %3338 = vmatpush1.msra.mxu0 0.0
    %3339 = vmatprep.subr.mxu0 0.0
    %3340 = vmatpush1.msra.mxu0 0.0
    %3341 = vmatprep.subr.mxu0 0.0
    %3342 = vmatpush1.msra.mxu0 0.0
    %3343 = vmatprep.subr.mxu0 0.0
    %3344 = vmatpush1.msra.mxu0 0.0
    %3345 = vmatprep.subr.mxu0 0.0
    %3346 = vmatpush1.msra.mxu0 0.0
    %3347 = vmatprep.subr.mxu0 0.0
    %3348 = vmatpush1.msra.mxu0 0.0
    %3349 = vmatprep.subr.mxu0 0.0
    %3350 = vmatpush1.msra.mxu0 0.0
    %3351 = vmatprep.subr.mxu0 0.0
    %3352 = vmatpush1.msra.mxu0 0.0
    %3353 = vmatprep.subr.mxu0 0.0
    %3354 = vmatpush1.msra.mxu0 0.0
    %3355 = vmatprep.subr.mxu0 0.0
    %3356 = vmatpush1.msra.mxu0 0.0
    %3357 = vmatprep.subr.mxu0 0.0
    %3358 = vmatpush1.msra.mxu0 0.0
    %3359 = vmatprep.mubr.f32.mxu0 0.0
    %3360 = vmatmul.mubr.f32.gmra.mrb[0].mxu0 %v2985
    %v3361 = vpop.f32.mrb[0].mxu0
    %v3362 = vadd.f32 %v619, %v3361
    %v3363 = vpop.f32.mrb[0].mxu0
    %v3364 = vadd.f32 %v623, %v3363
    %3365 = vdwg.mxu0
    %3366 = vmatprep.subr.mxu0 0.0
    %3367 = vmatpush1.msra.mxu0 %v534
    %3368 = vmatprep.subr.mxu0 0.0
    %3369 = vmatpush1.msra.mxu0 %v537
    %3370 = vmatprep.subr.mxu0 0.0
    %3371 = vmatpush1.msra.mxu0 %v540
    %3372 = vmatprep.subr.mxu0 0.0
    %3373 = vmatpush1.msra.mxu0 %v543
    %3374 = vmatprep.subr.mxu0 0.0
    %3375 = vmatpush1.msra.mxu0 %v546
    %3376 = vmatprep.subr.mxu0 0.0
    %3377 = vmatpush1.msra.mxu0 %v549
    %3378 = vmatprep.subr.mxu0 0.0
    %3379 = vmatpush1.msra.mxu0 %v552
    %3380 = vmatprep.subr.mxu0 0.0
    %3381 = vmatpush1.msra.mxu0 %v555
    %3382 = vmatprep.subr.mxu0 0.0
    %3383 = vmatpush1.msra.mxu0 %v558
    %3384 = vmatprep.subr.mxu0 0.0
    %3385 = vmatpush1.msra.mxu0 %v561
    %3386 = vmatprep.subr.mxu0 0.0
    %3387 = vmatpush1.msra.mxu0 %v564
    %3388 = vmatprep.subr.mxu0 0.0
    %3389 = vmatpush1.msra.mxu0 %v567
    %3390 = vmatprep.subr.mxu0 0.0
    %3391 = vmatpush1.msra.mxu0 %v570
    %3392 = vmatprep.subr.mxu0 0.0
    %3393 = vmatpush1.msra.mxu0 %v573
    %3394 = vmatprep.subr.mxu0 0.0
    %3395 = vmatpush1.msra.mxu0 %v576
    %3396 = vmatprep.subr.mxu0 0.0
    %3397 = vmatpush1.msra.mxu0 %v579
    %3398 = vmatprep.subr.mxu0 0.0
    %3399 = vmatpush1.msra.mxu0 0.0
    %3400 = vmatprep.subr.mxu0 0.0
    %3401 = vmatpush1.msra.mxu0 0.0
    %3402 = vmatprep.subr.mxu0 0.0
    %3403 = vmatpush1.msra.mxu0 0.0
    %3404 = vmatprep.subr.mxu0 0.0
    %3405 = vmatpush1.msra.mxu0 0.0
    %3406 = vmatprep.subr.mxu0 0.0
    %3407 = vmatpush1.msra.mxu0 0.0
    %3408 = vmatprep.subr.mxu0 0.0
    %3409 = vmatpush1.msra.mxu0 0.0
    %3410 = vmatprep.subr.mxu0 0.0
    %3411 = vmatpush1.msra.mxu0 0.0
    %3412 = vmatprep.subr.mxu0 0.0
    %3413 = vmatpush1.msra.mxu0 0.0
    %3414 = vmatprep.subr.mxu0 0.0
    %3415 = vmatpush1.msra.mxu0 0.0
    %3416 = vmatprep.subr.mxu0 0.0
    %3417 = vmatpush1.msra.mxu0 0.0
    %3418 = vmatprep.subr.mxu0 0.0
    %3419 = vmatpush1.msra.mxu0 0.0
    %3420 = vmatprep.subr.mxu0 0.0
    %3421 = vmatpush1.msra.mxu0 0.0
    %3422 = vmatprep.subr.mxu0 0.0
    %3423 = vmatpush1.msra.mxu0 0.0
    %3424 = vmatprep.subr.mxu0 0.0
    %3425 = vmatpush1.msra.mxu0 0.0
    %3426 = vmatprep.subr.mxu0 0.0
    %3427 = vmatpush1.msra.mxu0 0.0
    %3428 = vmatprep.subr.mxu0 0.0
    %3429 = vmatpush1.msra.mxu0 0.0
    %3430 = vmatprep.mubr.f32.mxu0 0.0
    %3431 = vmatmul.mubr.f32.gmra.mrb[0].mxu0 %v2985
    %v3432 = vpop.f32.mrb[0].mxu0
    %v3433 = vadd.f32 %v627, %v3432
    %v3434 = vpop.f32.mrb[0].mxu0
    %3435 = vdwg.mxu0
    %v3436 = vadd.f32 %v3221, %v3362
    %v3437 = vxor.u32 %v3436, 2147483648
    %v3438 = vmul.f32 %v3437, 1.442695
    %v3439 = vpow.pop %v3438
    %v3440 = vadd.f32 %v3439, 1.0
    %v3441 = vrcp.pop %v3440
    %v3442 = vmul.f32 1.0, %v3441
    %v3443 = vadd.f32 %v3223, %v3364
    %v3444 = vxor.u32 %v3443, 2147483648
    %v3445 = vmul.f32 %v3444, 1.442695
    %v3446 = vpow.pop %v3445
    %v3447 = vadd.f32 %v3446, 1.0
    %v3448 = vrcp.pop %v3447
    %v3449 = vmul.f32 1.0, %v3448
    %v3450 = vmul.f32 %v3442, %v3433
    %v3451 = vadd.f32 %v3292, %v3450
    %v3452 = vtanh.pop %v3451
    %v3453 = vsub.f32 1.0, %v3449
    %v3454 = vmul.f32 %v3453, %v3452
    %v3455 = vmul.f32 %v3449, %v2985
    %v3456 = vadd.f32 %v3454, %v3455
    %s3457 = smul.u32 6, 3
    %s3458 = smul.addr %s3457, 8
    %s3459 = scalar_lea.vmem [#allocation2], %s3458
    %v3460 = vld [vmem:[%s3459] sm:$0xff]
    %v3461 = vld [vmem:[%s3459 + $0x8] sm:$0xff]
    %v3462 = vld [vmem:[%s3459 + $0x10] sm:$0xff]
    %3463 = vmatprep.subr.mxu0 %v437
    %3464 = vmatpush1.msra.mxu0 %v436
    %3465 = vmatprep.subr.mxu0 %v440
    %3466 = vmatpush1.msra.mxu0 %v439
    %3467 = vmatprep.subr.mxu0 %v443
    %3468 = vmatpush1.msra.mxu0 %v442
    %3469 = vmatprep.subr.mxu0 %v446
    %3470 = vmatpush1.msra.mxu0 %v445
    %3471 = vmatprep.subr.mxu0 %v449
    %3472 = vmatpush1.msra.mxu0 %v448
    %3473 = vmatprep.subr.mxu0 %v452
    %3474 = vmatpush1.msra.mxu0 %v451
    %3475 = vmatprep.subr.mxu0 %v455
    %3476 = vmatpush1.msra.mxu0 %v454
    %3477 = vmatprep.subr.mxu0 %v458
    %3478 = vmatpush1.msra.mxu0 %v457
    %3479 = vmatprep.subr.mxu0 %v461
    %3480 = vmatpush1.msra.mxu0 %v460
    %3481 = vmatprep.subr.mxu0 %v464
    %3482 = vmatpush1.msra.mxu0 %v463
    %3483 = vmatprep.subr.mxu0 %v467
    %3484 = vmatpush1.msra.mxu0 %v466
    %3485 = vmatprep.subr.mxu0 %v470
    %3486 = vmatpush1.msra.mxu0 %v469
    %3487 = vmatprep.subr.mxu0 %v473
    %3488 = vmatpush1.msra.mxu0 %v472
    %3489 = vmatprep.subr.mxu0 %v476
    %3490 = vmatpush1.msra.mxu0 %v475
    %3491 = vmatprep.subr.mxu0 %v479
    %3492 = vmatpush1.msra.mxu0 %v478
    %3493 = vmatprep.subr.mxu0 %v482
    %3494 = vmatpush1.msra.mxu0 %v481
    %3495 = vmatprep.subr.mxu0 0.0
    %3496 = vmatpush1.msra.mxu0 0.0
    %3497 = vmatprep.subr.mxu0 0.0
    %3498 = vmatpush1.msra.mxu0 0.0
    %3499 = vmatprep.subr.mxu0 0.0
    %3500 = vmatpush1.msra.mxu0 0.0
    %3501 = vmatprep.subr.mxu0 0.0
    %3502 = vmatpush1.msra.mxu0 0.0
    %3503 = vmatprep.subr.mxu0 0.0
    %3504 = vmatpush1.msra.mxu0 0.0
    %3505 = vmatprep.subr.mxu0 0.0
    %3506 = vmatpush1.msra.mxu0 0.0
    %3507 = vmatprep.subr.mxu0 0.0
    %3508 = vmatpush1.msra.mxu0 0.0
    %3509 = vmatprep.subr.mxu0 0.0
    %3510 = vmatpush1.msra.mxu0 0.0
    %3511 = vmatprep.subr.mxu0 0.0
    %3512 = vmatpush1.msra.mxu0 0.0
    %3513 = vmatprep.subr.mxu0 0.0
    %3514 = vmatpush1.msra.mxu0 0.0
    %3515 = vmatprep.subr.mxu0 0.0
    %3516 = vmatpush1.msra.mxu0 0.0
    %3517 = vmatprep.subr.mxu0 0.0
    %3518 = vmatpush1.msra.mxu0 0.0
    %3519 = vmatprep.subr.mxu0 0.0
    %3520 = vmatpush1.msra.mxu0 0.0
    %3521 = vmatprep.subr.mxu0 0.0
    %3522 = vmatpush1.msra.mxu0 0.0
    %3523 = vmatprep.subr.mxu0 0.0
    %3524 = vmatpush1.msra.mxu0 0.0
    %3525 = vmatprep.subr.mxu0 0.0
    %3526 = vmatpush1.msra.mxu0 0.0
    %3527 = vmatprep.mubr.f32.mxu0 0.0
    %3528 = vmatmul.mubr.f32.gmra.mrb[0].mxu0 %v3153
    %v3529 = vpop.f32.mrb[0].mxu0
    %v3530 = vadd.f32 %v585, %v3529
    %v3531 = vpop.f32.mrb[0].mxu0
    %v3532 = vadd.f32 %v589, %v3531
    %3533 = vdwg.mxu0
    %3534 = vmatprep.subr.mxu0 0.0
    %3535 = vmatpush1.msra.mxu0 %v438
    %3536 = vmatprep.subr.mxu0 0.0
    %3537 = vmatpush1.msra.mxu0 %v441
    %3538 = vmatprep.subr.mxu0 0.0
    %3539 = vmatpush1.msra.mxu0 %v444
    %3540 = vmatprep.subr.mxu0 0.0
    %3541 = vmatpush1.msra.mxu0 %v447
    %3542 = vmatprep.subr.mxu0 0.0
    %3543 = vmatpush1.msra.mxu0 %v450
    %3544 = vmatprep.subr.mxu0 0.0
    %3545 = vmatpush1.msra.mxu0 %v453
    %3546 = vmatprep.subr.mxu0 0.0
    %3547 = vmatpush1.msra.mxu0 %v456
    %3548 = vmatprep.subr.mxu0 0.0
    %3549 = vmatpush1.msra.mxu0 %v459
    %3550 = vmatprep.subr.mxu0 0.0
    %3551 = vmatpush1.msra.mxu0 %v462
    %3552 = vmatprep.subr.mxu0 0.0
    %3553 = vmatpush1.msra.mxu0 %v465
    %3554 = vmatprep.subr.mxu0 0.0
    %3555 = vmatpush1.msra.mxu0 %v468
    %3556 = vmatprep.subr.mxu0 0.0
    %3557 = vmatpush1.msra.mxu0 %v471
    %3558 = vmatprep.subr.mxu0 0.0
    %3559 = vmatpush1.msra.mxu0 %v474
    %3560 = vmatprep.subr.mxu0 0.0
    %3561 = vmatpush1.msra.mxu0 %v477
    %3562 = vmatprep.subr.mxu0 0.0
    %3563 = vmatpush1.msra.mxu0 %v480
    %3564 = vmatprep.subr.mxu0 0.0
    %3565 = vmatpush1.msra.mxu0 %v483
    %3566 = vmatprep.subr.mxu0 0.0
    %3567 = vmatpush1.msra.mxu0 0.0
    %3568 = vmatprep.subr.mxu0 0.0
    %3569 = vmatpush1.msra.mxu0 0.0
    %3570 = vmatprep.subr.mxu0 0.0
    %3571 = vmatpush1.msra.mxu0 0.0
    %3572 = vmatprep.subr.mxu0 0.0
    %3573 = vmatpush1.msra.mxu0 0.0
    %3574 = vmatprep.subr.mxu0 0.0
    %3575 = vmatpush1.msra.mxu0 0.0
    %3576 = vmatprep.subr.mxu0 0.0
    %3577 = vmatpush1.msra.mxu0 0.0
    %3578 = vmatprep.subr.mxu0 0.0
    %3579 = vmatpush1.msra.mxu0 0.0
    %3580 = vmatprep.subr.mxu0 0.0
    %3581 = vmatpush1.msra.mxu0 0.0
    %3582 = vmatprep.subr.mxu0 0.0
    %3583 = vmatpush1.msra.mxu0 0.0
    %3584 = vmatprep.subr.mxu0 0.0
    %3585 = vmatpush1.msra.mxu0 0.0
    %3586 = vmatprep.subr.mxu0 0.0
    %3587 = vmatpush1.msra.mxu0 0.0
    %3588 = vmatprep.subr.mxu0 0.0
    %3589 = vmatpush1.msra.mxu0 0.0
    %3590 = vmatprep.subr.mxu0 0.0
    %3591 = vmatpush1.msra.mxu0 0.0
    %3592 = vmatprep.subr.mxu0 0.0
    %3593 = vmatpush1.msra.mxu0 0.0
    %3594 = vmatprep.subr.mxu0 0.0
    %3595 = vmatpush1.msra.mxu0 0.0
    %3596 = vmatprep.subr.mxu0 0.0
    %3597 = vmatpush1.msra.mxu0 0.0
    %3598 = vmatprep.mubr.f32.mxu0 0.0
    %3599 = vmatmul.mubr.f32.gmra.mrb[0].mxu0 %v3153
    %v3600 = vpop.f32.mrb[0].mxu0
    %v3601 = vadd.f32 %v593, %v3600
    %v3602 = vpop.f32.mrb[0].mxu0
    %3603 = vdwg.mxu0
    %v3604 = vadd.f32 %v3460, %v3530
    %v3605 = vxor.u32 %v3604, 2147483648
    %v3606 = vmul.f32 %v3605, 1.442695
    %v3607 = vpow.pop %v3606
    %v3608 = vadd.f32 %v3607, 1.0
    %v3609 = vrcp.pop %v3608
    %v3610 = vmul.f32 1.0, %v3609
    %v3611 = vadd.f32 %v3461, %v3532
    %v3612 = vxor.u32 %v3611, 2147483648
    %v3613 = vmul.f32 %v3612, 1.442695
    %v3614 = vpow.pop %v3613
    %v3615 = vadd.f32 %v3614, 1.0
    %v3616 = vrcp.pop %v3615
    %v3617 = vmul.f32 1.0, %v3616
    %v3618 = vmul.f32 %v3610, %v3601
    %v3619 = vadd.f32 %v3462, %v3618
    %v3620 = vtanh.pop %v3619
    %v3621 = vsub.f32 1.0, %v3617
    %v3622 = vmul.f32 %v3621, %v3620
    %v3623 = vmul.f32 %v3617, %v3153
    %v3624 = vadd.f32 %v3622, %v3623
    %3625 = vmatprep.subr.mxu0 %v485
    %3626 = vmatpush1.msra.mxu0 %v484
    %3627 = vmatprep.subr.mxu0 %v488
    %3628 = vmatpush1.msra.mxu0 %v487
    %3629 = vmatprep.subr.mxu0 %v491
    %3630 = vmatpush1.msra.mxu0 %v490
    %3631 = vmatprep.subr.mxu0 %v494
    %3632 = vmatpush1.msra.mxu0 %v493
    %3633 = vmatprep.subr.mxu0 %v497
    %3634 = vmatpush1.msra.mxu0 %v496
    %3635 = vmatprep.subr.mxu0 %v500
    %3636 = vmatpush1.msra.mxu0 %v499
    %3637 = vmatprep.subr.mxu0 %v503
    %3638 = vmatpush1.msra.mxu0 %v502
    %3639 = vmatprep.subr.mxu0 %v506
    %3640 = vmatpush1.msra.mxu0 %v505
    %3641 = vmatprep.subr.mxu0 %v509
    %3642 = vmatpush1.msra.mxu0 %v508
    %3643 = vmatprep.subr.mxu0 %v512
    %3644 = vmatpush1.msra.mxu0 %v511
    %3645 = vmatprep.subr.mxu0 %v515
    %3646 = vmatpush1.msra.mxu0 %v514
    %3647 = vmatprep.subr.mxu0 %v518
    %3648 = vmatpush1.msra.mxu0 %v517
    %3649 = vmatprep.subr.mxu0 %v521
    %3650 = vmatpush1.msra.mxu0 %v520
    %3651 = vmatprep.subr.mxu0 %v524
    %3652 = vmatpush1.msra.mxu0 %v523
    %3653 = vmatprep.subr.mxu0 %v527
    %3654 = vmatpush1.msra.mxu0 %v526
    %3655 = vmatprep.subr.mxu0 %v530
    %3656 = vmatpush1.msra.mxu0 %v529
    %3657 = vmatprep.subr.mxu0 0.0
    %3658 = vmatpush1.msra.mxu0 0.0
    %3659 = vmatprep.subr.mxu0 0.0
    %3660 = vmatpush1.msra.mxu0 0.0
    %3661 = vmatprep.subr.mxu0 0.0
    %3662 = vmatpush1.msra.mxu0 0.0
    %3663 = vmatprep.subr.mxu0 0.0
    %3664 = vmatpush1.msra.mxu0 0.0
    %3665 = vmatprep.subr.mxu0 0.0
    %3666 = vmatpush1.msra.mxu0 0.0
    %3667 = vmatprep.subr.mxu0 0.0
    %3668 = vmatpush1.msra.mxu0 0.0
    %3669 = vmatprep.subr.mxu0 0.0
    %3670 = vmatpush1.msra.mxu0 0.0
    %3671 = vmatprep.subr.mxu0 0.0
    %3672 = vmatpush1.msra.mxu0 0.0
    %3673 = vmatprep.subr.mxu0 0.0
    %3674 = vmatpush1.msra.mxu0 0.0
    %3675 = vmatprep.subr.mxu0 0.0
    %3676 = vmatpush1.msra.mxu0 0.0
    %3677 = vmatprep.subr.mxu0 0.0
    %3678 = vmatpush1.msra.mxu0 0.0
    %3679 = vmatprep.subr.mxu0 0.0
    %3680 = vmatpush1.msra.mxu0 0.0
    %3681 = vmatprep.subr.mxu0 0.0
    %3682 = vmatpush1.msra.mxu0 0.0
    %3683 = vmatprep.subr.mxu0 0.0
    %3684 = vmatpush1.msra.mxu0 0.0
    %3685 = vmatprep.subr.mxu0 0.0
    %3686 = vmatpush1.msra.mxu0 0.0
    %3687 = vmatprep.subr.mxu0 0.0
    %3688 = vmatpush1.msra.mxu0 0.0
    %3689 = vmatprep.mubr.f32.mxu0 0.0
    %3690 = vmatmul.mubr.f32.gmra.mrb[0].mxu0 %v3624
    %v3691 = vpop.f32.mrb[0].mxu0
    %v3692 = vadd.f32 %v602, %v3691
    %v3693 = vpop.f32.mrb[0].mxu0
    %v3694 = vadd.f32 %v606, %v3693
    %3695 = vdwg.mxu0
    %3696 = vmatprep.subr.mxu0 0.0
    %3697 = vmatpush1.msra.mxu0 %v486
    %3698 = vmatprep.subr.mxu0 0.0
    %3699 = vmatpush1.msra.mxu0 %v489
    %3700 = vmatprep.subr.mxu0 0.0
    %3701 = vmatpush1.msra.mxu0 %v492
    %3702 = vmatprep.subr.mxu0 0.0
    %3703 = vmatpush1.msra.mxu0 %v495
    %3704 = vmatprep.subr.mxu0 0.0
    %3705 = vmatpush1.msra.mxu0 %v498
    %3706 = vmatprep.subr.mxu0 0.0
    %3707 = vmatpush1.msra.mxu0 %v501
    %3708 = vmatprep.subr.mxu0 0.0
    %3709 = vmatpush1.msra.mxu0 %v504
    %3710 = vmatprep.subr.mxu0 0.0
    %3711 = vmatpush1.msra.mxu0 %v507
    %3712 = vmatprep.subr.mxu0 0.0
    %3713 = vmatpush1.msra.mxu0 %v510
    %3714 = vmatprep.subr.mxu0 0.0
    %3715 = vmatpush1.msra.mxu0 %v513
    %3716 = vmatprep.subr.mxu0 0.0
    %3717 = vmatpush1.msra.mxu0 %v516
    %3718 = vmatprep.subr.mxu0 0.0
    %3719 = vmatpush1.msra.mxu0 %v519
    %3720 = vmatprep.subr.mxu0 0.0
    %3721 = vmatpush1.msra.mxu0 %v522
    %3722 = vmatprep.subr.mxu0 0.0
    %3723 = vmatpush1.msra.mxu0 %v525
    %3724 = vmatprep.subr.mxu0 0.0
    %3725 = vmatpush1.msra.mxu0 %v528
    %3726 = vmatprep.subr.mxu0 0.0
    %3727 = vmatpush1.msra.mxu0 %v531
    %3728 = vmatprep.subr.mxu0 0.0
    %3729 = vmatpush1.msra.mxu0 0.0
    %3730 = vmatprep.subr.mxu0 0.0
    %3731 = vmatpush1.msra.mxu0 0.0
    %3732 = vmatprep.subr.mxu0 0.0
    %3733 = vmatpush1.msra.mxu0 0.0
    %3734 = vmatprep.subr.mxu0 0.0
    %3735 = vmatpush1.msra.mxu0 0.0
    %3736 = vmatprep.subr.mxu0 0.0
    %3737 = vmatpush1.msra.mxu0 0.0
    %3738 = vmatprep.subr.mxu0 0.0
    %3739 = vmatpush1.msra.mxu0 0.0
    %3740 = vmatprep.subr.mxu0 0.0
    %3741 = vmatpush1.msra.mxu0 0.0
    %3742 = vmatprep.subr.mxu0 0.0
    %3743 = vmatpush1.msra.mxu0 0.0
    %3744 = vmatprep.subr.mxu0 0.0
    %3745 = vmatpush1.msra.mxu0 0.0
    %3746 = vmatprep.subr.mxu0 0.0
    %3747 = vmatpush1.msra.mxu0 0.0
    %3748 = vmatprep.subr.mxu0 0.0
    %3749 = vmatpush1.msra.mxu0 0.0
    %3750 = vmatprep.subr.mxu0 0.0
    %3751 = vmatpush1.msra.mxu0 0.0
    %3752 = vmatprep.subr.mxu0 0.0
    %3753 = vmatpush1.msra.mxu0 0.0
    %3754 = vmatprep.subr.mxu0 0.0
    %3755 = vmatpush1.msra.mxu0 0.0
    %3756 = vmatprep.subr.mxu0 0.0
    %3757 = vmatpush1.msra.mxu0 0.0
    %3758 = vmatprep.subr.mxu0 0.0
    %3759 = vmatpush1.msra.mxu0 0.0
    %3760 = vmatprep.mubr.f32.mxu0 0.0
    %3761 = vmatmul.mubr.f32.gmra.mrb[0].mxu0 %v3624
    %v3762 = vpop.f32.mrb[0].mxu0
    %v3763 = vadd.f32 %v610, %v3762
    %v3764 = vpop.f32.mrb[0].mxu0
    %3765 = vdwg.mxu0
    %3766 = vmatprep.subr.mxu0 %v533
    %3767 = vmatpush1.msra.mxu0 %v532
    %3768 = vmatprep.subr.mxu0 %v536
    %3769 = vmatpush1.msra.mxu0 %v535
    %3770 = vmatprep.subr.mxu0 %v539
    %3771 = vmatpush1.msra.mxu0 %v538
    %3772 = vmatprep.subr.mxu0 %v542
    %3773 = vmatpush1.msra.mxu0 %v541
    %3774 = vmatprep.subr.mxu0 %v545
    %3775 = vmatpush1.msra.mxu0 %v544
    %3776 = vmatprep.subr.mxu0 %v548
    %3777 = vmatpush1.msra.mxu0 %v547
    %3778 = vmatprep.subr.mxu0 %v551
    %3779 = vmatpush1.msra.mxu0 %v550
    %3780 = vmatprep.subr.mxu0 %v554
    %3781 = vmatpush1.msra.mxu0 %v553
    %3782 = vmatprep.subr.mxu0 %v557
    %3783 = vmatpush1.msra.mxu0 %v556
    %3784 = vmatprep.subr.mxu0 %v560
    %3785 = vmatpush1.msra.mxu0 %v559
    %3786 = vmatprep.subr.mxu0 %v563
    %3787 = vmatpush1.msra.mxu0 %v562
    %3788 = vmatprep.subr.mxu0 %v566
    %3789 = vmatpush1.msra.mxu0 %v565
    %3790 = vmatprep.subr.mxu0 %v569
    %3791 = vmatpush1.msra.mxu0 %v568
    %3792 = vmatprep.subr.mxu0 %v572
    %3793 = vmatpush1.msra.mxu0 %v571
    %3794 = vmatprep.subr.mxu0 %v575
    %3795 = vmatpush1.msra.mxu0 %v574
    %3796 = vmatprep.subr.mxu0 %v578
    %3797 = vmatpush1.msra.mxu0 %v577
    %3798 = vmatprep.subr.mxu0 0.0
    %3799 = vmatpush1.msra.mxu0 0.0
    %3800 = vmatprep.subr.mxu0 0.0
    %3801 = vmatpush1.msra.mxu0 0.0
    %3802 = vmatprep.subr.mxu0 0.0
    %3803 = vmatpush1.msra.mxu0 0.0
    %3804 = vmatprep.subr.mxu0 0.0
    %3805 = vmatpush1.msra.mxu0 0.0
    %3806 = vmatprep.subr.mxu0 0.0
    %3807 = vmatpush1.msra.mxu0 0.0
    %3808 = vmatprep.subr.mxu0 0.0
    %3809 = vmatpush1.msra.mxu0 0.0
    %3810 = vmatprep.subr.mxu0 0.0
    %3811 = vmatpush1.msra.mxu0 0.0
    %3812 = vmatprep.subr.mxu0 0.0
    %3813 = vmatpush1.msra.mxu0 0.0
    %3814 = vmatprep.subr.mxu0 0.0
    %3815 = vmatpush1.msra.mxu0 0.0
    %3816 = vmatprep.subr.mxu0 0.0
    %3817 = vmatpush1.msra.mxu0 0.0
    %3818 = vmatprep.subr.mxu0 0.0
    %3819 = vmatpush1.msra.mxu0 0.0
    %3820 = vmatprep.subr.mxu0 0.0
    %3821 = vmatpush1.msra.mxu0 0.0
    %3822 = vmatprep.subr.mxu0 0.0
    %3823 = vmatpush1.msra.mxu0 0.0
    %3824 = vmatprep.subr.mxu0 0.0
    %3825 = vmatpush1.msra.mxu0 0.0
    %3826 = vmatprep.subr.mxu0 0.0
    %3827 = vmatpush1.msra.mxu0 0.0
    %3828 = vmatprep.subr.mxu0 0.0
    %3829 = vmatpush1.msra.mxu0 0.0
    %3830 = vmatprep.mubr.f32.mxu0 0.0
    %3831 = vmatmul.mubr.f32.gmra.mrb[0].mxu0 %v3456
    %v3832 = vpop.f32.mrb[0].mxu0
    %v3833 = vadd.f32 %v619, %v3832
    %v3834 = vpop.f32.mrb[0].mxu0
    %v3835 = vadd.f32 %v623, %v3834
    %3836 = vdwg.mxu0
    %3837 = vmatprep.subr.mxu0 0.0
    %3838 = vmatpush1.msra.mxu0 %v534
    %3839 = vmatprep.subr.mxu0 0.0
    %3840 = vmatpush1.msra.mxu0 %v537
    %3841 = vmatprep.subr.mxu0 0.0
    %3842 = vmatpush1.msra.mxu0 %v540
    %3843 = vmatprep.subr.mxu0 0.0
    %3844 = vmatpush1.msra.mxu0 %v543
    %3845 = vmatprep.subr.mxu0 0.0
    %3846 = vmatpush1.msra.mxu0 %v546
    %3847 = vmatprep.subr.mxu0 0.0
    %3848 = vmatpush1.msra.mxu0 %v549
    %3849 = vmatprep.subr.mxu0 0.0
    %3850 = vmatpush1.msra.mxu0 %v552
    %3851 = vmatprep.subr.mxu0 0.0
    %3852 = vmatpush1.msra.mxu0 %v555
    %3853 = vmatprep.subr.mxu0 0.0
    %3854 = vmatpush1.msra.mxu0 %v558
    %3855 = vmatprep.subr.mxu0 0.0
    %3856 = vmatpush1.msra.mxu0 %v561
    %3857 = vmatprep.subr.mxu0 0.0
    %3858 = vmatpush1.msra.mxu0 %v564
    %3859 = vmatprep.subr.mxu0 0.0
    %3860 = vmatpush1.msra.mxu0 %v567
    %3861 = vmatprep.subr.mxu0 0.0
    %3862 = vmatpush1.msra.mxu0 %v570
    %3863 = vmatprep.subr.mxu0 0.0
    %3864 = vmatpush1.msra.mxu0 %v573
    %3865 = vmatprep.subr.mxu0 0.0
    %3866 = vmatpush1.msra.mxu0 %v576
    %3867 = vmatprep.subr.mxu0 0.0
    %3868 = vmatpush1.msra.mxu0 %v579
    %3869 = vmatprep.subr.mxu0 0.0
    %3870 = vmatpush1.msra.mxu0 0.0
    %3871 = vmatprep.subr.mxu0 0.0
    %3872 = vmatpush1.msra.mxu0 0.0
    %3873 = vmatprep.subr.mxu0 0.0
    %3874 = vmatpush1.msra.mxu0 0.0
    %3875 = vmatprep.subr.mxu0 0.0
    %3876 = vmatpush1.msra.mxu0 0.0
    %3877 = vmatprep.subr.mxu0 0.0
    %3878 = vmatpush1.msra.mxu0 0.0
    %3879 = vmatprep.subr.mxu0 0.0
    %3880 = vmatpush1.msra.mxu0 0.0
    %3881 = vmatprep.subr.mxu0 0.0
    %3882 = vmatpush1.msra.mxu0 0.0
    %3883 = vmatprep.subr.mxu0 0.0
    %3884 = vmatpush1.msra.mxu0 0.0
    %3885 = vmatprep.subr.mxu0 0.0
    %3886 = vmatpush1.msra.mxu0 0.0
    %3887 = vmatprep.subr.mxu0 0.0
    %3888 = vmatpush1.msra.mxu0 0.0
    %3889 = vmatprep.subr.mxu0 0.0
    %3890 = vmatpush1.msra.mxu0 0.0
    %3891 = vmatprep.subr.mxu0 0.0
    %3892 = vmatpush1.msra.mxu0 0.0
    %3893 = vmatprep.subr.mxu0 0.0
    %3894 = vmatpush1.msra.mxu0 0.0
    %3895 = vmatprep.subr.mxu0 0.0
    %3896 = vmatpush1.msra.mxu0 0.0
    %3897 = vmatprep.subr.mxu0 0.0
    %3898 = vmatpush1.msra.mxu0 0.0
    %3899 = vmatprep.subr.mxu0 0.0
    %3900 = vmatpush1.msra.mxu0 0.0
    %3901 = vmatprep.mubr.f32.mxu0 0.0
    %3902 = vmatmul.mubr.f32.gmra.mrb[0].mxu0 %v3456
    %v3903 = vpop.f32.mrb[0].mxu0
    %v3904 = vadd.f32 %v627, %v3903
    %v3905 = vpop.f32.mrb[0].mxu0
    %3906 = vdwg.mxu0
    %v3907 = vadd.f32 %v3692, %v3833
    %v3908 = vxor.u32 %v3907, 2147483648
    %v3909 = vmul.f32 %v3908, 1.442695
    %v3910 = vpow.pop %v3909
    %v3911 = vadd.f32 %v3910, 1.0
    %v3912 = vrcp.pop %v3911
    %v3913 = vmul.f32 1.0, %v3912
    %v3914 = vadd.f32 %v3694, %v3835
    %v3915 = vxor.u32 %v3914, 2147483648
    %v3916 = vmul.f32 %v3915, 1.442695
    %v3917 = vpow.pop %v3916
    %v3918 = vadd.f32 %v3917, 1.0
    %v3919 = vrcp.pop %v3918
    %v3920 = vmul.f32 1.0, %v3919
    %v3921 = vmul.f32 %v3913, %v3904
    %v3922 = vadd.f32 %v3763, %v3921
    %v3923 = vtanh.pop %v3922
    %v3924 = vsub.f32 1.0, %v3920
    %v3925 = vmul.f32 %v3924, %v3923
    %v3926 = vmul.f32 %v3920, %v3456
    %v3927 = vadd.f32 %v3925, %v3926
    %s3928 = smul.u32 7, 3
    %s3929 = smul.addr %s3928, 8
    %s3930 = scalar_lea.vmem [#allocation2], %s3929
    %v3931 = vld [vmem:[%s3930] sm:$0xff]
    %v3932 = vld [vmem:[%s3930 + $0x8] sm:$0xff]
    %v3933 = vld [vmem:[%s3930 + $0x10] sm:$0xff]
    %3934 = vmatprep.subr.mxu0 %v437
    %3935 = vmatpush1.msra.mxu0 %v436
    %3936 = vmatprep.subr.mxu0 %v440
    %3937 = vmatpush1.msra.mxu0 %v439
    %3938 = vmatprep.subr.mxu0 %v443
    %3939 = vmatpush1.msra.mxu0 %v442
    %3940 = vmatprep.subr.mxu0 %v446
    %3941 = vmatpush1.msra.mxu0 %v445
    %3942 = vmatprep.subr.mxu0 %v449
    %3943 = vmatpush1.msra.mxu0 %v448
    %3944 = vmatprep.subr.mxu0 %v452
    %3945 = vmatpush1.msra.mxu0 %v451
    %3946 = vmatprep.subr.mxu0 %v455
    %3947 = vmatpush1.msra.mxu0 %v454
    %3948 = vmatprep.subr.mxu0 %v458
    %3949 = vmatpush1.msra.mxu0 %v457
    %3950 = vmatprep.subr.mxu0 %v461
    %3951 = vmatpush1.msra.mxu0 %v460
    %3952 = vmatprep.subr.mxu0 %v464
    %3953 = vmatpush1.msra.mxu0 %v463
    %3954 = vmatprep.subr.mxu0 %v467
    %3955 = vmatpush1.msra.mxu0 %v466
    %3956 = vmatprep.subr.mxu0 %v470
    %3957 = vmatpush1.msra.mxu0 %v469
    %3958 = vmatprep.subr.mxu0 %v473
    %3959 = vmatpush1.msra.mxu0 %v472
    %3960 = vmatprep.subr.mxu0 %v476
    %3961 = vmatpush1.msra.mxu0 %v475
    %3962 = vmatprep.subr.mxu0 %v479
    %3963 = vmatpush1.msra.mxu0 %v478
    %3964 = vmatprep.subr.mxu0 %v482
    %3965 = vmatpush1.msra.mxu0 %v481
    %3966 = vmatprep.subr.mxu0 0.0
    %3967 = vmatpush1.msra.mxu0 0.0
    %3968 = vmatprep.subr.mxu0 0.0
    %3969 = vmatpush1.msra.mxu0 0.0
    %3970 = vmatprep.subr.mxu0 0.0
    %3971 = vmatpush1.msra.mxu0 0.0
    %3972 = vmatprep.subr.mxu0 0.0
    %3973 = vmatpush1.msra.mxu0 0.0
    %3974 = vmatprep.subr.mxu0 0.0
    %3975 = vmatpush1.msra.mxu0 0.0
    %3976 = vmatprep.subr.mxu0 0.0
    %3977 = vmatpush1.msra.mxu0 0.0
    %3978 = vmatprep.subr.mxu0 0.0
    %3979 = vmatpush1.msra.mxu0 0.0
    %3980 = vmatprep.subr.mxu0 0.0
    %3981 = vmatpush1.msra.mxu0 0.0
    %3982 = vmatprep.subr.mxu0 0.0
    %3983 = vmatpush1.msra.mxu0 0.0
    %3984 = vmatprep.subr.mxu0 0.0
    %3985 = vmatpush1.msra.mxu0 0.0
    %3986 = vmatprep.subr.mxu0 0.0
    %3987 = vmatpush1.msra.mxu0 0.0
    %3988 = vmatprep.subr.mxu0 0.0
    %3989 = vmatpush1.msra.mxu0 0.0
    %3990 = vmatprep.subr.mxu0 0.0
    %3991 = vmatpush1.msra.mxu0 0.0
    %3992 = vmatprep.subr.mxu0 0.0
    %3993 = vmatpush1.msra.mxu0 0.0
    %3994 = vmatprep.subr.mxu0 0.0
    %3995 = vmatpush1.msra.mxu0 0.0
    %3996 = vmatprep.subr.mxu0 0.0
    %3997 = vmatpush1.msra.mxu0 0.0
    %3998 = vmatprep.mubr.f32.mxu0 0.0
    %3999 = vmatmul.mubr.f32.gmra.mrb[0].mxu0 %v3624
    %v4000 = vpop.f32.mrb[0].mxu0
    %v4001 = vadd.f32 %v585, %v4000
    %v4002 = vpop.f32.mrb[0].mxu0
    %v4003 = vadd.f32 %v589, %v4002
    %4004 = vdwg.mxu0
    %4005 = vmatprep.subr.mxu0 0.0
    %4006 = vmatpush1.msra.mxu0 %v438
    %4007 = vmatprep.subr.mxu0 0.0
    %4008 = vmatpush1.msra.mxu0 %v441
    %4009 = vmatprep.subr.mxu0 0.0
    %4010 = vmatpush1.msra.mxu0 %v444
    %4011 = vmatprep.subr.mxu0 0.0
    %4012 = vmatpush1.msra.mxu0 %v447
    %4013 = vmatprep.subr.mxu0 0.0
    %4014 = vmatpush1.msra.mxu0 %v450
    %4015 = vmatprep.subr.mxu0 0.0
    %4016 = vmatpush1.msra.mxu0 %v453
    %4017 = vmatprep.subr.mxu0 0.0
    %4018 = vmatpush1.msra.mxu0 %v456
    %4019 = vmatprep.subr.mxu0 0.0
    %4020 = vmatpush1.msra.mxu0 %v459
    %4021 = vmatprep.subr.mxu0 0.0
    %4022 = vmatpush1.msra.mxu0 %v462
    %4023 = vmatprep.subr.mxu0 0.0
    %4024 = vmatpush1.msra.mxu0 %v465
    %4025 = vmatprep.subr.mxu0 0.0
    %4026 = vmatpush1.msra.mxu0 %v468
    %4027 = vmatprep.subr.mxu0 0.0
    %4028 = vmatpush1.msra.mxu0 %v471
    %4029 = vmatprep.subr.mxu0 0.0
    %4030 = vmatpush1.msra.mxu0 %v474
    %4031 = vmatprep.subr.mxu0 0.0
    %4032 = vmatpush1.msra.mxu0 %v477
    %4033 = vmatprep.subr.mxu0 0.0
    %4034 = vmatpush1.msra.mxu0 %v480
    %4035 = vmatprep.subr.mxu0 0.0
    %4036 = vmatpush1.msra.mxu0 %v483
    %4037 = vmatprep.subr.mxu0 0.0
    %4038 = vmatpush1.msra.mxu0 0.0
    %4039 = vmatprep.subr.mxu0 0.0
    %4040 = vmatpush1.msra.mxu0 0.0
    %4041 = vmatprep.subr.mxu0 0.0
    %4042 = vmatpush1.msra.mxu0 0.0
    %4043 = vmatprep.subr.mxu0 0.0
    %4044 = vmatpush1.msra.mxu0 0.0
    %4045 = vmatprep.subr.mxu0 0.0
    %4046 = vmatpush1.msra.mxu0 0.0
    %4047 = vmatprep.subr.mxu0 0.0
    %4048 = vmatpush1.msra.mxu0 0.0
    %4049 = vmatprep.subr.mxu0 0.0
    %4050 = vmatpush1.msra.mxu0 0.0
    %4051 = vmatprep.subr.mxu0 0.0
    %4052 = vmatpush1.msra.mxu0 0.0
    %4053 = vmatprep.subr.mxu0 0.0
    %4054 = vmatpush1.msra.mxu0 0.0
    %4055 = vmatprep.subr.mxu0 0.0
    %4056 = vmatpush1.msra.mxu0 0.0
    %4057 = vmatprep.subr.mxu0 0.0
    %4058 = vmatpush1.msra.mxu0 0.0
    %4059 = vmatprep.subr.mxu0 0.0
    %4060 = vmatpush1.msra.mxu0 0.0
    %4061 = vmatprep.subr.mxu0 0.0
    %4062 = vmatpush1.msra.mxu0 0.0
    %4063 = vmatprep.subr.mxu0 0.0
    %4064 = vmatpush1.msra.mxu0 0.0
    %4065 = vmatprep.subr.mxu0 0.0
    %4066 = vmatpush1.msra.mxu0 0.0
    %4067 = vmatprep.subr.mxu0 0.0
    %4068 = vmatpush1.msra.mxu0 0.0
    %4069 = vmatprep.mubr.f32.mxu0 0.0
    %4070 = vmatmul.mubr.f32.gmra.mrb[0].mxu0 %v3624
    %v4071 = vpop.f32.mrb[0].mxu0
    %v4072 = vadd.f32 %v593, %v4071
    %v4073 = vpop.f32.mrb[0].mxu0
    %4074 = vdwg.mxu0
    %v4075 = vadd.f32 %v3931, %v4001
    %v4076 = vxor.u32 %v4075, 2147483648
    %v4077 = vmul.f32 %v4076, 1.442695
    %v4078 = vpow.pop %v4077
    %v4079 = vadd.f32 %v4078, 1.0
    %v4080 = vrcp.pop %v4079
    %v4081 = vmul.f32 1.0, %v4080
    %v4082 = vadd.f32 %v3932, %v4003
    %v4083 = vxor.u32 %v4082, 2147483648
    %v4084 = vmul.f32 %v4083, 1.442695
    %v4085 = vpow.pop %v4084
    %v4086 = vadd.f32 %v4085, 1.0
    %v4087 = vrcp.pop %v4086
    %v4088 = vmul.f32 1.0, %v4087
    %v4089 = vmul.f32 %v4081, %v4072
    %v4090 = vadd.f32 %v3933, %v4089
    %v4091 = vtanh.pop %v4090
    %v4092 = vsub.f32 1.0, %v4088
    %v4093 = vmul.f32 %v4092, %v4091
    %v4094 = vmul.f32 %v4088, %v3624
    %v4095 = vadd.f32 %v4093, %v4094
    %4096 = vmatprep.subr.mxu0 %v485
    %4097 = vmatpush1.msra.mxu0 %v484
    %4098 = vmatprep.subr.mxu0 %v488
    %4099 = vmatpush1.msra.mxu0 %v487
    %4100 = vmatprep.subr.mxu0 %v491
    %4101 = vmatpush1.msra.mxu0 %v490
    %4102 = vmatprep.subr.mxu0 %v494
    %4103 = vmatpush1.msra.mxu0 %v493
    %4104 = vmatprep.subr.mxu0 %v497
    %4105 = vmatpush1.msra.mxu0 %v496
    %4106 = vmatprep.subr.mxu0 %v500
    %4107 = vmatpush1.msra.mxu0 %v499
    %4108 = vmatprep.subr.mxu0 %v503
    %4109 = vmatpush1.msra.mxu0 %v502
    %4110 = vmatprep.subr.mxu0 %v506
    %4111 = vmatpush1.msra.mxu0 %v505
    %4112 = vmatprep.subr.mxu0 %v509
    %4113 = vmatpush1.msra.mxu0 %v508
    %4114 = vmatprep.subr.mxu0 %v512
    %4115 = vmatpush1.msra.mxu0 %v511
    %4116 = vmatprep.subr.mxu0 %v515
    %4117 = vmatpush1.msra.mxu0 %v514
    %4118 = vmatprep.subr.mxu0 %v518
    %4119 = vmatpush1.msra.mxu0 %v517
    %4120 = vmatprep.subr.mxu0 %v521
    %4121 = vmatpush1.msra.mxu0 %v520
    %4122 = vmatprep.subr.mxu0 %v524
    %4123 = vmatpush1.msra.mxu0 %v523
    %4124 = vmatprep.subr.mxu0 %v527
    %4125 = vmatpush1.msra.mxu0 %v526
    %4126 = vmatprep.subr.mxu0 %v530
    %4127 = vmatpush1.msra.mxu0 %v529
    %4128 = vmatprep.subr.mxu0 0.0
    %4129 = vmatpush1.msra.mxu0 0.0
    %4130 = vmatprep.subr.mxu0 0.0
    %4131 = vmatpush1.msra.mxu0 0.0
    %4132 = vmatprep.subr.mxu0 0.0
    %4133 = vmatpush1.msra.mxu0 0.0
    %4134 = vmatprep.subr.mxu0 0.0
    %4135 = vmatpush1.msra.mxu0 0.0
    %4136 = vmatprep.subr.mxu0 0.0
    %4137 = vmatpush1.msra.mxu0 0.0
    %4138 = vmatprep.subr.mxu0 0.0
    %4139 = vmatpush1.msra.mxu0 0.0
    %4140 = vmatprep.subr.mxu0 0.0
    %4141 = vmatpush1.msra.mxu0 0.0
    %4142 = vmatprep.subr.mxu0 0.0
    %4143 = vmatpush1.msra.mxu0 0.0
    %4144 = vmatprep.subr.mxu0 0.0
    %4145 = vmatpush1.msra.mxu0 0.0
    %4146 = vmatprep.subr.mxu0 0.0
    %4147 = vmatpush1.msra.mxu0 0.0
    %4148 = vmatprep.subr.mxu0 0.0
    %4149 = vmatpush1.msra.mxu0 0.0
    %4150 = vmatprep.subr.mxu0 0.0
    %4151 = vmatpush1.msra.mxu0 0.0
    %4152 = vmatprep.subr.mxu0 0.0
    %4153 = vmatpush1.msra.mxu0 0.0
    %4154 = vmatprep.subr.mxu0 0.0
    %4155 = vmatpush1.msra.mxu0 0.0
    %4156 = vmatprep.subr.mxu0 0.0
    %4157 = vmatpush1.msra.mxu0 0.0
    %4158 = vmatprep.subr.mxu0 0.0
    %4159 = vmatpush1.msra.mxu0 0.0
    %4160 = vmatprep.mubr.f32.mxu0 0.0
    %4161 = vmatmul.mubr.f32.gmra.mrb[0].mxu0 %v4095
    %v4162 = vpop.f32.mrb[0].mxu0
    %v4163 = vadd.f32 %v602, %v4162
    %v4164 = vpop.f32.mrb[0].mxu0
    %v4165 = vadd.f32 %v606, %v4164
    %4166 = vdwg.mxu0
    %4167 = vmatprep.subr.mxu0 0.0
    %4168 = vmatpush1.msra.mxu0 %v486
    %4169 = vmatprep.subr.mxu0 0.0
    %4170 = vmatpush1.msra.mxu0 %v489
    %4171 = vmatprep.subr.mxu0 0.0
    %4172 = vmatpush1.msra.mxu0 %v492
    %4173 = vmatprep.subr.mxu0 0.0
    %4174 = vmatpush1.msra.mxu0 %v495
    %4175 = vmatprep.subr.mxu0 0.0
    %4176 = vmatpush1.msra.mxu0 %v498
    %4177 = vmatprep.subr.mxu0 0.0
    %4178 = vmatpush1.msra.mxu0 %v501
    %4179 = vmatprep.subr.mxu0 0.0
    %4180 = vmatpush1.msra.mxu0 %v504
    %4181 = vmatprep.subr.mxu0 0.0
    %4182 = vmatpush1.msra.mxu0 %v507
    %4183 = vmatprep.subr.mxu0 0.0
    %4184 = vmatpush1.msra.mxu0 %v510
    %4185 = vmatprep.subr.mxu0 0.0
    %4186 = vmatpush1.msra.mxu0 %v513
    %4187 = vmatprep.subr.mxu0 0.0
    %4188 = vmatpush1.msra.mxu0 %v516
    %4189 = vmatprep.subr.mxu0 0.0
    %4190 = vmatpush1.msra.mxu0 %v519
    %4191 = vmatprep.subr.mxu0 0.0
    %4192 = vmatpush1.msra.mxu0 %v522
    %4193 = vmatprep.subr.mxu0 0.0
    %4194 = vmatpush1.msra.mxu0 %v525
    %4195 = vmatprep.subr.mxu0 0.0
    %4196 = vmatpush1.msra.mxu0 %v528
    %4197 = vmatprep.subr.mxu0 0.0
    %4198 = vmatpush1.msra.mxu0 %v531
    %4199 = vmatprep.subr.mxu0 0.0
    %4200 = vmatpush1.msra.mxu0 0.0
    %4201 = vmatprep.subr.mxu0 0.0
    %4202 = vmatpush1.msra.mxu0 0.0
    %4203 = vmatprep.subr.mxu0 0.0
    %4204 = vmatpush1.msra.mxu0 0.0
    %4205 = vmatprep.subr.mxu0 0.0
    %4206 = vmatpush1.msra.mxu0 0.0
    %4207 = vmatprep.subr.mxu0 0.0
    %4208 = vmatpush1.msra.mxu0 0.0
    %4209 = vmatprep.subr.mxu0 0.0
    %4210 = vmatpush1.msra.mxu0 0.0
    %4211 = vmatprep.subr.mxu0 0.0
    %4212 = vmatpush1.msra.mxu0 0.0
    %4213 = vmatprep.subr.mxu0 0.0
    %4214 = vmatpush1.msra.mxu0 0.0
    %4215 = vmatprep.subr.mxu0 0.0
    %4216 = vmatpush1.msra.mxu0 0.0
    %4217 = vmatprep.subr.mxu0 0.0
    %4218 = vmatpush1.msra.mxu0 0.0
    %4219 = vmatprep.subr.mxu0 0.0
    %4220 = vmatpush1.msra.mxu0 0.0
    %4221 = vmatprep.subr.mxu0 0.0
    %4222 = vmatpush1.msra.mxu0 0.0
    %4223 = vmatprep.subr.mxu0 0.0
    %4224 = vmatpush1.msra.mxu0 0.0
    %4225 = vmatprep.subr.mxu0 0.0
    %4226 = vmatpush1.msra.mxu0 0.0
    %4227 = vmatprep.subr.mxu0 0.0
    %4228 = vmatpush1.msra.mxu0 0.0
    %4229 = vmatprep.subr.mxu0 0.0
    %4230 = vmatpush1.msra.mxu0 0.0
    %4231 = vmatprep.mubr.f32.mxu0 0.0
    %4232 = vmatmul.mubr.f32.gmra.mrb[0].mxu0 %v4095
    %v4233 = vpop.f32.mrb[0].mxu0
    %v4234 = vadd.f32 %v610, %v4233
    %v4235 = vpop.f32.mrb[0].mxu0
    %4236 = vdwg.mxu0
    %4237 = vmatprep.subr.mxu0 %v533
    %4238 = vmatpush1.msra.mxu0 %v532
    %4239 = vmatprep.subr.mxu0 %v536
    %4240 = vmatpush1.msra.mxu0 %v535
    %4241 = vmatprep.subr.mxu0 %v539
    %4242 = vmatpush1.msra.mxu0 %v538
    %4243 = vmatprep.subr.mxu0 %v542
    %4244 = vmatpush1.msra.mxu0 %v541
    %4245 = vmatprep.subr.mxu0 %v545
    %4246 = vmatpush1.msra.mxu0 %v544
    %4247 = vmatprep.subr.mxu0 %v548
    %4248 = vmatpush1.msra.mxu0 %v547
    %4249 = vmatprep.subr.mxu0 %v551
    %4250 = vmatpush1.msra.mxu0 %v550
    %4251 = vmatprep.subr.mxu0 %v554
    %4252 = vmatpush1.msra.mxu0 %v553
    %4253 = vmatprep.subr.mxu0 %v557
    %4254 = vmatpush1.msra.mxu0 %v556
    %4255 = vmatprep.subr.mxu0 %v560
    %4256 = vmatpush1.msra.mxu0 %v559
    %4257 = vmatprep.subr.mxu0 %v563
    %4258 = vmatpush1.msra.mxu0 %v562
    %4259 = vmatprep.subr.mxu0 %v566
    %4260 = vmatpush1.msra.mxu0 %v565
    %4261 = vmatprep.subr.mxu0 %v569
    %4262 = vmatpush1.msra.mxu0 %v568
    %4263 = vmatprep.subr.mxu0 %v572
    %4264 = vmatpush1.msra.mxu0 %v571
    %4265 = vmatprep.subr.mxu0 %v575
    %4266 = vmatpush1.msra.mxu0 %v574
    %4267 = vmatprep.subr.mxu0 %v578
    %4268 = vmatpush1.msra.mxu0 %v577
    %4269 = vmatprep.subr.mxu0 0.0
    %4270 = vmatpush1.msra.mxu0 0.0
    %4271 = vmatprep.subr.mxu0 0.0
    %4272 = vmatpush1.msra.mxu0 0.0
    %4273 = vmatprep.subr.mxu0 0.0
    %4274 = vmatpush1.msra.mxu0 0.0
    %4275 = vmatprep.subr.mxu0 0.0
    %4276 = vmatpush1.msra.mxu0 0.0
    %4277 = vmatprep.subr.mxu0 0.0
    %4278 = vmatpush1.msra.mxu0 0.0
    %4279 = vmatprep.subr.mxu0 0.0
    %4280 = vmatpush1.msra.mxu0 0.0
    %4281 = vmatprep.subr.mxu0 0.0
    %4282 = vmatpush1.msra.mxu0 0.0
    %4283 = vmatprep.subr.mxu0 0.0
    %4284 = vmatpush1.msra.mxu0 0.0
    %4285 = vmatprep.subr.mxu0 0.0
    %4286 = vmatpush1.msra.mxu0 0.0
    %4287 = vmatprep.subr.mxu0 0.0
    %4288 = vmatpush1.msra.mxu0 0.0
    %4289 = vmatprep.subr.mxu0 0.0
    %4290 = vmatpush1.msra.mxu0 0.0
    %4291 = vmatprep.subr.mxu0 0.0
    %4292 = vmatpush1.msra.mxu0 0.0
    %4293 = vmatprep.subr.mxu0 0.0
    %4294 = vmatpush1.msra.mxu0 0.0
    %4295 = vmatprep.subr.mxu0 0.0
    %4296 = vmatpush1.msra.mxu0 0.0
    %4297 = vmatprep.subr.mxu0 0.0
    %4298 = vmatpush1.msra.mxu0 0.0
    %4299 = vmatprep.subr.mxu0 0.0
    %4300 = vmatpush1.msra.mxu0 0.0
    %4301 = vmatprep.mubr.f32.mxu0 0.0
    %4302 = vmatmul.mubr.f32.gmra.mrb[0].mxu0 %v3927
    %v4303 = vpop.f32.mrb[0].mxu0
    %v4304 = vadd.f32 %v619, %v4303
    %v4305 = vpop.f32.mrb[0].mxu0
    %v4306 = vadd.f32 %v623, %v4305
    %4307 = vdwg.mxu0
    %4308 = vmatprep.subr.mxu0 0.0
    %4309 = vmatpush1.msra.mxu0 %v534
    %4310 = vmatprep.subr.mxu0 0.0
    %4311 = vmatpush1.msra.mxu0 %v537
    %4312 = vmatprep.subr.mxu0 0.0
    %4313 = vmatpush1.msra.mxu0 %v540
    %4314 = vmatprep.subr.mxu0 0.0
    %4315 = vmatpush1.msra.mxu0 %v543
    %4316 = vmatprep.subr.mxu0 0.0
    %4317 = vmatpush1.msra.mxu0 %v546
    %4318 = vmatprep.subr.mxu0 0.0
    %4319 = vmatpush1.msra.mxu0 %v549
    %4320 = vmatprep.subr.mxu0 0.0
    %4321 = vmatpush1.msra.mxu0 %v552
    %4322 = vmatprep.subr.mxu0 0.0
    %4323 = vmatpush1.msra.mxu0 %v555
    %4324 = vmatprep.subr.mxu0 0.0
    %4325 = vmatpush1.msra.mxu0 %v558
    %4326 = vmatprep.subr.mxu0 0.0
    %4327 = vmatpush1.msra.mxu0 %v561
    %4328 = vmatprep.subr.mxu0 0.0
    %4329 = vmatpush1.msra.mxu0 %v564
    %4330 = vmatprep.subr.mxu0 0.0
    %4331 = vmatpush1.msra.mxu0 %v567
    %4332 = vmatprep.subr.mxu0 0.0
    %4333 = vmatpush1.msra.mxu0 %v570
    %4334 = vmatprep.subr.mxu0 0.0
    %4335 = vmatpush1.msra.mxu0 %v573
    %4336 = vmatprep.subr.mxu0 0.0
    %4337 = vmatpush1.msra.mxu0 %v576
    %4338 = vmatprep.subr.mxu0 0.0
    %4339 = vmatpush1.msra.mxu0 %v579
    %4340 = vmatprep.subr.mxu0 0.0
    %4341 = vmatpush1.msra.mxu0 0.0
    %4342 = vmatprep.subr.mxu0 0.0
    %4343 = vmatpush1.msra.mxu0 0.0
    %4344 = vmatprep.subr.mxu0 0.0
    %4345 = vmatpush1.msra.mxu0 0.0
    %4346 = vmatprep.subr.mxu0 0.0
    %4347 = vmatpush1.msra.mxu0 0.0
    %4348 = vmatprep.subr.mxu0 0.0
    %4349 = vmatpush1.msra.mxu0 0.0
    %4350 = vmatprep.subr.mxu0 0.0
    %4351 = vmatpush1.msra.mxu0 0.0
    %4352 = vmatprep.subr.mxu0 0.0
    %4353 = vmatpush1.msra.mxu0 0.0
    %4354 = vmatprep.subr.mxu0 0.0
    %4355 = vmatpush1.msra.mxu0 0.0
    %4356 = vmatprep.subr.mxu0 0.0
    %4357 = vmatpush1.msra.mxu0 0.0
    %4358 = vmatprep.subr.mxu0 0.0
    %4359 = vmatpush1.msra.mxu0 0.0
    %4360 = vmatprep.subr.mxu0 0.0
    %4361 = vmatpush1.msra.mxu0 0.0
    %4362 = vmatprep.subr.mxu0 0.0
    %4363 = vmatpush1.msra.mxu0 0.0
    %4364 = vmatprep.subr.mxu0 0.0
    %4365 = vmatpush1.msra.mxu0 0.0
    %4366 = vmatprep.subr.mxu0 0.0
    %4367 = vmatpush1.msra.mxu0 0.0
    %4368 = vmatprep.subr.mxu0 0.0
    %4369 = vmatpush1.msra.mxu0 0.0
    %4370 = vmatprep.subr.mxu0 0.0
    %4371 = vmatpush1.msra.mxu0 0.0
    %4372 = vmatprep.mubr.f32.mxu0 0.0
    %4373 = vmatmul.mubr.f32.gmra.mrb[0].mxu0 %v3927
    %v4374 = vpop.f32.mrb[0].mxu0
    %v4375 = vadd.f32 %v627, %v4374
    %v4376 = vpop.f32.mrb[0].mxu0
    %4377 = vdwg.mxu0
    %v4378 = vadd.f32 %v4163, %v4304
    %v4379 = vxor.u32 %v4378, 2147483648
    %v4380 = vmul.f32 %v4379, 1.442695
    %v4381 = vpow.pop %v4380
    %v4382 = vadd.f32 %v4381, 1.0
    %v4383 = vrcp.pop %v4382
    %v4384 = vmul.f32 1.0, %v4383
    %v4385 = vadd.f32 %v4165, %v4306
    %v4386 = vxor.u32 %v4385, 2147483648
    %v4387 = vmul.f32 %v4386, 1.442695
    %v4388 = vpow.pop %v4387
    %v4389 = vadd.f32 %v4388, 1.0
    %v4390 = vrcp.pop %v4389
    %v4391 = vmul.f32 1.0, %v4390
    %v4392 = vmul.f32 %v4384, %v4375
    %v4393 = vadd.f32 %v4234, %v4392
    %v4394 = vtanh.pop %v4393
    %v4395 = vsub.f32 1.0, %v4391
    %v4396 = vmul.f32 %v4395, %v4394
    %v4397 = vmul.f32 %v4391, %v3927
    %v4398 = vadd.f32 %v4396, %v4397
    %v4399 = vmax.f32 %v4398, 0.0
    %v4400 = vld [vmem:[#allocation12] sm:$0xff]
    %v4401 = vld [vmem:[#allocation12 + $0x8] sm:$0xff]
    %v4402 = vld [vmem:[#allocation12 + $0x10] sm:$0xff]
    %v4403 = vld [vmem:[#allocation12 + $0x18] sm:$0xff]
    %v4404 = vld [vmem:[#allocation12 + $0x20] sm:$0xff]
    %v4405 = vld [vmem:[#allocation12 + $0x28] sm:$0xff]
    %v4406 = vld [vmem:[#allocation12 + $0x30] sm:$0xff]
    %v4407 = vld [vmem:[#allocation12 + $0x38] sm:$0xff]
    %v4408 = vld [vmem:[#allocation12 + $0x40] sm:$0xff]
    %v4409 = vld [vmem:[#allocation12 + $0x48] sm:$0xff]
    %v4410 = vld [vmem:[#allocation12 + $0x50] sm:$0xff]
    %v4411 = vld [vmem:[#allocation12 + $0x58] sm:$0xff]
    %v4412 = vld [vmem:[#allocation12 + $0x60] sm:$0xff]
    %v4413 = vld [vmem:[#allocation12 + $0x68] sm:$0xff]
    %v4414 = vld [vmem:[#allocation12 + $0x70] sm:$0xff]
    %v4415 = vld [vmem:[#allocation12 + $0x78] sm:$0xff]
    %v4416 = vld [vmem:[%s10] sm:$0x1]
    %v4418 = vlaneseq
    %v4419 = vshrl.u32 %v4418, 7
    %v4420 = vsub.s32 0, %v4419
    %v4421 = vrot.slane %v4416, %v4420
    %4423 = vmatprep.subr.mxu0 0.0
    %4424 = vmatpush1.msra.mxu0 %v4400
    %4425 = vmatprep.subr.mxu0 0.0
    %4426 = vmatpush1.msra.mxu0 %v4401
    %4427 = vmatprep.subr.mxu0 0.0
    %4428 = vmatpush1.msra.mxu0 %v4402
    %4429 = vmatprep.subr.mxu0 0.0
    %4430 = vmatpush1.msra.mxu0 %v4403
    %4431 = vmatprep.subr.mxu0 0.0
    %4432 = vmatpush1.msra.mxu0 %v4404
    %4433 = vmatprep.subr.mxu0 0.0
    %4434 = vmatpush1.msra.mxu0 %v4405
    %4435 = vmatprep.subr.mxu0 0.0
    %4436 = vmatpush1.msra.mxu0 %v4406
    %4437 = vmatprep.subr.mxu0 0.0
    %4438 = vmatpush1.msra.mxu0 %v4407
    %4439 = vmatprep.subr.mxu0 0.0
    %4440 = vmatpush1.msra.mxu0 %v4408
    %4441 = vmatprep.subr.mxu0 0.0
    %4442 = vmatpush1.msra.mxu0 %v4409
    %4443 = vmatprep.subr.mxu0 0.0
    %4444 = vmatpush1.msra.mxu0 %v4410
    %4445 = vmatprep.subr.mxu0 0.0
    %4446 = vmatpush1.msra.mxu0 %v4411
    %4447 = vmatprep.subr.mxu0 0.0
    %4448 = vmatpush1.msra.mxu0 %v4412
    %4449 = vmatprep.subr.mxu0 0.0
    %4450 = vmatpush1.msra.mxu0 %v4413
    %4451 = vmatprep.subr.mxu0 0.0
    %4452 = vmatpush1.msra.mxu0 %v4414
    %4453 = vmatprep.subr.mxu0 0.0
    %4454 = vmatpush1.msra.mxu0 %v4415
    %4455 = vmatprep.subr.mxu0 0.0
    %4456 = vmatpush1.msra.mxu0 0.0
    %4457 = vmatprep.subr.mxu0 0.0
    %4458 = vmatpush1.msra.mxu0 0.0
    %4459 = vmatprep.subr.mxu0 0.0
    %4460 = vmatpush1.msra.mxu0 0.0
    %4461 = vmatprep.subr.mxu0 0.0
    %4462 = vmatpush1.msra.mxu0 0.0
    %4463 = vmatprep.subr.mxu0 0.0
    %4464 = vmatpush1.msra.mxu0 0.0
    %4465 = vmatprep.subr.mxu0 0.0
    %4466 = vmatpush1.msra.mxu0 0.0
    %4467 = vmatprep.subr.mxu0 0.0
    %4468 = vmatpush1.msra.mxu0 0.0
    %4469 = vmatprep.subr.mxu0 0.0
    %4470 = vmatpush1.msra.mxu0 0.0
    %4471 = vmatprep.subr.mxu0 0.0
    %4472 = vmatpush1.msra.mxu0 0.0
    %4473 = vmatprep.subr.mxu0 0.0
    %4474 = vmatpush1.msra.mxu0 0.0
    %4475 = vmatprep.subr.mxu0 0.0
    %4476 = vmatpush1.msra.mxu0 0.0
    %4477 = vmatprep.subr.mxu0 0.0
    %4478 = vmatpush1.msra.mxu0 0.0
    %4479 = vmatprep.subr.mxu0 0.0
    %4480 = vmatpush1.msra.mxu0 0.0
    %4481 = vmatprep.subr.mxu0 0.0
    %4482 = vmatpush1.msra.mxu0 0.0
    %4483 = vmatprep.subr.mxu0 0.0
    %4484 = vmatpush1.msra.mxu0 0.0
    %4485 = vmatprep.subr.mxu0 0.0
    %4486 = vmatpush1.msra.mxu0 0.0
    %4487 = vmatprep.mubr.f32.mxu0 0.0
    %4488 = vmatmul.mubr.f32.gmra.mrb[0].mxu0 %v4399
    %v4489 = vpop.f32.mrb[0].mxu0
    %v4490 = vadd.f32 %v4421, %v4489
    %v4491 = vpop.f32.mrb[0].mxu0
    %4492 = vdwg.mxu0
    %4493 = vst [vmem:[#allocation14] sm:$0xff] %v4490
    // Predicated region
    $region70: #{tpu_custom_call.1} parent=1 // pred_check
      _
    $region71: #{tpu_custom_call.1} parent=1 // pred_check_branch
      %4495 = sbr.rel (0) target = $region73
    $region72: #{tpu_custom_call.1} parent=1 // pred_region
      %s4497 = ssub.s32 128, 128
      %4498 = vsyncadd [#allocation5], %s4497
      %s4500 = sshll.u32 [#allocation14], 4
      %s4501 = int_to_ptr.vmem [resolvable:$true] %s4500
      %4503 = dma.vmem_to_hbm [thread:$0]  %s4501, 128, %s11, [#allocation5]
    $region73: #{tpu_custom_call.1} parent=1 // pred_fallthru
      _
    // Predicated region
    $region74: #{tpu_custom_call.1} parent=1 // pred_check
      _
    $region75: #{tpu_custom_call.1} parent=1 // pred_check_branch
      %4505 = sbr.rel (0) target = $region77
    $region76: #{tpu_custom_call.1} parent=1 // pred_region
      %4506 = dma.done [#allocation5], 128
    $region77: #{tpu_custom_call.1} parent=1 // pred_fallthru
      _
    %4507 = vsyncpa [#allocation4], 1
    %4508 = vsyncpa [#allocation7], 1
    %4509 = vsyncpa [#allocation10], 1
    %4510 = vsyncpa [#allocation13], 1
    %4511 = vsyncpa [#allocation5], 1

</llo_original>
